<compile_context>
chip_gen: v6e
topology: v6e:2x2x1
jax: 0.10.0
libtpu: 0.0.40
codegen_flags: <defaults>
</compile_context>

<pallas_src>
import functools

import jax
import jax.numpy as jnp
from jax import lax
from jax.experimental import pallas as pl
from jax.experimental.pallas import tpu as pltpu

BN_EPS = 1e-5


# ----------------------------------------------------------------------------
# Fused Pallas kernel:
#   BN1+relu -> c1(3x3) -> BN2+relu -> [c2(3x3) + 1x1 shortcut] (one dot)
# All operands channel-major (C, M), M = N*Ho*Wo flattened (n, h, w) row-major
# on the lane axis.
# ----------------------------------------------------------------------------
def _block_kernel(xu_ref, g1_ref, be1_ref, w1_ref, b1_ref,
                  g2_ref, be2_ref, w2sc_ref, b2sc_ref,
                  o_ref, *, n_img, ho, wo):
    m_tot = n_img * ho * wo
    inv_m = 1.0 / m_tot

    # ---- spatial coords + boundary masks: computed ONCE, shared by both convs.
    lane = lax.broadcasted_iota(jnp.int32, (1, m_tot), 1)
    if (wo & (wo - 1)) == 0 and (ho & (ho - 1)) == 0:
        # Power-of-two strength reduction: no integer div/mod on the VPU.
        w_pos = lane & (wo - 1)
        h_pos = (lane >> (wo.bit_length() - 1)) & (ho - 1)
    else:
        w_pos = lane % wo
        h_pos = (lane // wo) % ho
    mh = {-1: h_pos >= 1, 0: None, 1: h_pos < ho - 1}
    mw = {-1: w_pos >= 1, 0: None, 1: w_pos < wo - 1}

    tap_shift, tap_mask = [], []
    for kh in range(3):
        for kw in range(3):
            sh, sw = kh - 1, kw - 1
            off = (sh * wo + sw) % m_tot
            if mh[sh] is not None and mw[sw] is not None:
                m = mh[sh] & mw[sw]
            elif mh[sh] is not None:
                m = mh[sh]
            else:
                m = mw[sw]  # None only for the center tap
            tap_shift.append(off)
            tap_mask.append(m)

    def bn_relu(x, g_ref, b_ref):
        # Two-pass biased batch stats (PyTorch training-mode BatchNorm2d).
        mean = jnp.sum(x, axis=1, keepdims=True) * inv_m
        xc = x - mean
        var = jnp.sum(xc * xc, axis=1, keepdims=True) * inv_m
        scale = lax.rsqrt(var + BN_EPS) * g_ref[...]
        return jnp.maximum(xc * scale + b_ref[...], 0.0)

    def im2col(x):
        # 'same'-padded 3x3 patch stack (9*C, M): XLU lane-rolls + hoisted
        # boundary masks; consumed by a single fused MXU dot.
        parts = []
        for t in range(9):
            j = tap_shift[t]
            # shifted[:, m] = x[:, (m + j) mod M]  (wrapped entries are masked)
            v = x if j == 0 else pltpu.roll(x, shift=m_tot - j, axis=1)
            if tap_mask[t] is not None:
                v = jnp.where(tap_mask[t], v, 0.0)
            parts.append(v)
        return jnp.concatenate(parts, axis=0)

    xu = xu_ref[...]                                       # (Cin, M) upsampled input
    a1 = bn_relu(xu, g1_ref, be1_ref)                      # BN1 + relu
    h1 = jnp.dot(w1_ref[...], im2col(a1),                  # c1 = ONE fused dot
                 preferred_element_type=jnp.float32) + b1_ref[...]
    a2 = bn_relu(h1, g2_ref, be2_ref)                      # BN2 + relu
    stack = jnp.concatenate([im2col(a2), xu], axis=0)      # (9*Chid + Cin, M)
    # c2 + 1x1 shortcut folded into a single MXU dot; result is the output.
    o_ref[...] = jnp.dot(w2sc_ref[...], stack,
                         preferred_element_type=jnp.float32) + b2sc_ref[...]


def _full_spec(shape):
    zeros = (0,) * len(shape)
    return pl.BlockSpec(shape, lambda i, _z=zeros: _z)


# ----------------------------------------------------------------------------
# Block forward (Pallas path)
# ----------------------------------------------------------------------------
def block_forward(x_nchw, p):
    N, Cin, H, W = x_nchw.shape
    Chid = p["w1"].shape[3]
    Cout = p["w2"].shape[3]
    Ho, Wo = 2 * H, 2 * W
    M = N * Ho * Wo
    f32 = jnp.float32

    # Layout plumbing (XLA): NCHW -> channel-major flat + nearest-2x upsample.
    # Upsample commutes with BN1+relu and is shared by residual & shortcut, so
    # the kernel consumes the upsampled input exactly once.
    x_t = jnp.transpose(x_nchw, (1, 0, 2, 3)).astype(f32)        # (Cin, N, H, W)
    x_up = jnp.repeat(jnp.repeat(x_t, 2, axis=2), 2, axis=3)     # (Cin, N, Ho, Wo)
    x_up = x_up.reshape(Cin, M)

    # Fused conv weights, matching the im2col row order (tap-major, channel-minor):
    #   w_flat[o, t*Cin + c] = W[kh, kw, c, o],  t = kh*3 + kw
    w1_flat = jnp.transpose(p["w1"], (3, 0, 1, 2)).reshape(Chid, 9 * Cin).astype(f32)
    w2_flat = jnp.transpose(p["w2"], (3, 0, 1, 2)).reshape(Cout, 9 * Chid).astype(f32)
    wsc_flat = jnp.transpose(p["wsc"].reshape(Cin, Cout)).astype(f32)   # (Cout, Cin)
    w2sc = jnp.concatenate([w2_flat, wsc_flat], axis=1)                 # (Cout, 9*Chid+Cin)

    g1 = p["g1"].reshape(Cin, 1).astype(f32)
    be1 = p["be1"].reshape(Cin, 1).astype(f32)
    g2 = p["g2"].reshape(Chid, 1).astype(f32)
    be2 = p["be2"].reshape(Chid, 1).astype(f32)
    b1 = p["b1"].reshape(Chid, 1).astype(f32)
    b2sc = (p["b2"] + p["bsc"]).reshape(Cout, 1).astype(f32)            # b2 + bsc folded

    args = (x_up, g1, be1, w1_flat, b1, g2, be2, w2sc, b2sc)
    kernel = functools.partial(_block_kernel, n_img=N, ho=Ho, wo=Wo)

    out_t = pl.pallas_call(
        kernel,
        out_shape=jax.ShapeDtypeStruct((Cout, M), f32),
        grid=(1,),
        in_specs=[_full_spec(a.shape) for a in args],
        out_specs=_full_spec((Cout, M)),
        compiler_params=pltpu.CompilerParams(
            dimension_semantics=("arbitrary",),
            vmem_limit_bytes=32 * 1024 * 1024),
    )(*args)

    out = out_t.reshape(Cout, N, Ho, Wo)
    return jnp.transpose(out, (1, 0, 2, 3))                             # -> NCHW


# ----------------------------------------------------------------------------
# Pure-JAX reference (for verification)
# ----------------------------------------------------------------------------
def ref_block_forward(x, p):
    def bn_relu(h, g, b):
        mean = jnp.mean(h, axis=(0, 2, 3), keepdims=True)
        var = jnp.mean((h - mean) ** 2, axis=(0, 2, 3), keepdims=True)
        hn = (h - mean) * lax.rsqrt(var + BN_EPS) * g.reshape(1, -1, 1, 1) + b.reshape(1, -1, 1, 1)
        return jnp.maximum(hn, 0.0)

    def up(h):
        return jnp.repeat(jnp.repeat(h, 2, axis=2), 2, axis=3)

    def conv(h, w_hwio, b, pad):
        y = lax.conv_general_dilated(h, w_hwio, (1, 1), [(pad, pad), (pad, pad)],
                                     dimension_numbers=("NCHW", "HWIO", "NCHW"))
        return y + b.reshape(1, -1, 1, 1)

    h = bn_relu(x, p["g1"], p["be1"])
    h = conv(up(h), p["w1"], p["b1"], 1)
    h = bn_relu(h, p["g2"], p["be2"])
    h = conv(h, p["w2"], p["b2"], 1)
    sc = conv(up(x), p["wsc"], p["bsc"], 0)
    return h + sc


# ----------------------------------------------------------------------------
if __name__ == "__main__":
    Cin, Chid, Cout = 4, 4, 8
    N, H, W = 2, 16, 16

    key = jax.random.PRNGKey(0)
    ks = jax.random.split(key, 8)
    params = {
        # conv weights in HWIO layout (kh, kw, Cin, Cout); biases per out-channel.
        "w1": 0.1 * jax.random.normal(ks[0], (3, 3, Cin, Chid), jnp.float32),
        "b1": 0.1 * jax.random.normal(ks[1], (Chid,), jnp.float32),
        "w2": 0.1 * jax.random.normal(ks[2], (3, 3, Chid, Cout), jnp.float32),
        "b2": 0.1 * jax.random.normal(ks[3], (Cout,), jnp.float32),
        "wsc": 0.1 * jax.random.normal(ks[4], (1, 1, Cin, Cout), jnp.float32),
        "bsc": 0.1 * jax.random.normal(ks[5], (Cout,), jnp.float32),
        # BatchNorm affine params (PyTorch default init: weight=1, bias=0).
        "g1": jnp.ones((Cin,), jnp.float32),
        "be1": jnp.zeros((Cin,), jnp.float32),
        "g2": jnp.ones((Chid,), jnp.float32),
        "be2": jnp.zeros((Chid,), jnp.float32),
    }

    x = jax.random.normal(ks[6], (N, Cin, H, W), jnp.float32)    # NCHW, like PyTorch

    out = jax.block_until_ready(block_forward(x, params))        # (2, 8, 32, 32)
    ref = jax.block_until_ready(ref_block_forward(x, params))

    assert out.shape == (N, Cout, 2 * H, 2 * W), out.shape
    if not jnp.allclose(out, ref, rtol=1e-3, atol=1e-3):
        max_err = float(jnp.max(jnp.abs(out - ref)))
        raise AssertionError(f"Pallas output mismatch vs reference, max_err={max_err}")
    print("KERNEL_OK")
</pallas_src>

<mosaic_0001>
module attributes {stable_mosaic.version = 11 : i64} {
  func.func @_block_kernel(%arg0: i32, %arg1: memref<4x2048xf32, #tpu.memory_space<vmem>>, %arg2: memref<4x1xf32, #tpu.memory_space<vmem>>, %arg3: memref<4x1xf32, #tpu.memory_space<vmem>>, %arg4: memref<4x36xf32, #tpu.memory_space<vmem>>, %arg5: memref<4x1xf32, #tpu.memory_space<vmem>>, %arg6: memref<4x1xf32, #tpu.memory_space<vmem>>, %arg7: memref<4x1xf32, #tpu.memory_space<vmem>>, %arg8: memref<8x40xf32, #tpu.memory_space<vmem>>, %arg9: memref<8x1xf32, #tpu.memory_space<vmem>>, %arg10: memref<8x2048xf32, #tpu.memory_space<vmem>>) attributes {dimension_semantics = [#tpu.dimension_semantics<arbitrary>], iteration_bounds = array<i64: 1>, scalar_prefetch = 0 : i64, scratch_operands = 0 : i64, tpu.core_type = #tpu.core_type<tc>, window_params = [{pipeline_mode = #tpu.pipeline_mode<synchronous>, transform_indices = @transform_0, window_bounds = array<i64: 4, 2048>}, {pipeline_mode = #tpu.pipeline_mode<synchronous>, transform_indices = @transform_1, window_bounds = array<i64: 4, 1>}, {pipeline_mode = #tpu.pipeline_mode<synchronous>, transform_indices = @transform_2, window_bounds = array<i64: 4, 1>}, {pipeline_mode = #tpu.pipeline_mode<synchronous>, transform_indices = @transform_3, window_bounds = array<i64: 4, 36>}, {pipeline_mode = #tpu.pipeline_mode<synchronous>, transform_indices = @transform_4, window_bounds = array<i64: 4, 1>}, {pipeline_mode = #tpu.pipeline_mode<synchronous>, transform_indices = @transform_5, window_bounds = array<i64: 4, 1>}, {pipeline_mode = #tpu.pipeline_mode<synchronous>, transform_indices = @transform_6, window_bounds = array<i64: 4, 1>}, {pipeline_mode = #tpu.pipeline_mode<synchronous>, transform_indices = @transform_7, window_bounds = array<i64: 8, 40>}, {pipeline_mode = #tpu.pipeline_mode<synchronous>, transform_indices = @transform_8, window_bounds = array<i64: 8, 1>}, {pipeline_mode = #tpu.pipeline_mode<synchronous>, transform_indices = @transform_9, window_bounds = array<i64: 8, 2048>}]} {
    %0 = tpu.iota {dimensions = array<i32: 1>} : vector<1x2048xi32>
    %c31_i32 = arith.constant 31 : i32
    %1 = vector.broadcast %c31_i32 : i32 to vector<1x2048xi32>
    %2 = arith.andi %0, %1 : vector<1x2048xi32>
    %c5_i32 = arith.constant 5 : i32
    %3 = vector.broadcast %c5_i32 : i32 to vector<1x2048xi32>
    %4 = arith.shrsi %0, %3 : vector<1x2048xi32>
    %c31_i32_0 = arith.constant 31 : i32
    %5 = vector.broadcast %c31_i32_0 : i32 to vector<1x2048xi32>
    %6 = arith.andi %4, %5 : vector<1x2048xi32>
    %c1_i32 = arith.constant 1 : i32
    %7 = vector.broadcast %c1_i32 : i32 to vector<1x2048xi32>
    %8 = arith.cmpi sge, %6, %7 : vector<1x2048xi32>
    %c31_i32_1 = arith.constant 31 : i32
    %9 = vector.broadcast %c31_i32_1 : i32 to vector<1x2048xi32>
    %10 = arith.cmpi slt, %6, %9 : vector<1x2048xi32>
    %c1_i32_2 = arith.constant 1 : i32
    %11 = vector.broadcast %c1_i32_2 : i32 to vector<1x2048xi32>
    %12 = arith.cmpi sge, %2, %11 : vector<1x2048xi32>
    %c31_i32_3 = arith.constant 31 : i32
    %13 = vector.broadcast %c31_i32_3 : i32 to vector<1x2048xi32>
    %14 = arith.cmpi slt, %2, %13 : vector<1x2048xi32>
    %15 = arith.andi %8, %12 : vector<1x2048xi1>
    %16 = arith.andi %8, %14 : vector<1x2048xi1>
    %17 = arith.andi %10, %12 : vector<1x2048xi1>
    %18 = arith.andi %10, %14 : vector<1x2048xi1>
    %c0 = arith.constant 0 : index
    %c0_4 = arith.constant 0 : index
    %19 = vector.load %arg1[%c0, %c0_4] : memref<4x2048xf32, #tpu.memory_space<vmem>>, vector<4x2048xf32>
    %cst = arith.constant dense<0.000000e+00> : vector<4xf32>
    %20 = vector.multi_reduction <add>, %19, %cst [1] : vector<4x2048xf32> to vector<4xf32>
    %21 = vector.shape_cast %20 : vector<4xf32> to vector<4x1xf32>
    %cst_5 = arith.constant 4.8828125E-4 : f32
    %22 = vector.broadcast %cst_5 : f32 to vector<4x1xf32>
    %23 = arith.mulf %21, %22 : vector<4x1xf32>
    %24 = vector.broadcast %23 : vector<4x1xf32> to vector<4x2048xf32>
    %25 = arith.subf %19, %24 : vector<4x2048xf32>
    %26 = arith.mulf %25, %25 : vector<4x2048xf32>
    %cst_6 = arith.constant dense<0.000000e+00> : vector<4xf32>
    %27 = vector.multi_reduction <add>, %26, %cst_6 [1] : vector<4x2048xf32> to vector<4xf32>
    %28 = vector.shape_cast %27 : vector<4xf32> to vector<4x1xf32>
    %cst_7 = arith.constant 4.8828125E-4 : f32
    %29 = vector.broadcast %cst_7 : f32 to vector<4x1xf32>
    %30 = arith.mulf %28, %29 : vector<4x1xf32>
    %cst_8 = arith.constant 9.99999974E-6 : f32
    %31 = vector.broadcast %cst_8 : f32 to vector<4x1xf32>
    %32 = arith.addf %30, %31 : vector<4x1xf32>
    %33 = math.rsqrt %32 : vector<4x1xf32>
    %c0_9 = arith.constant 0 : index
    %c0_10 = arith.constant 0 : index
    %34 = vector.load %arg2[%c0_9, %c0_10] : memref<4x1xf32, #tpu.memory_space<vmem>>, vector<4x1xf32>
    %35 = arith.mulf %33, %34 : vector<4x1xf32>
    %36 = vector.broadcast %35 : vector<4x1xf32> to vector<4x2048xf32>
    %37 = arith.mulf %25, %36 : vector<4x2048xf32>
    %c0_11 = arith.constant 0 : index
    %c0_12 = arith.constant 0 : index
    %38 = vector.load %arg3[%c0_11, %c0_12] : memref<4x1xf32, #tpu.memory_space<vmem>>, vector<4x1xf32>
    %39 = vector.broadcast %38 : vector<4x1xf32> to vector<4x2048xf32>
    %40 = arith.addf %37, %39 : vector<4x2048xf32>
    %cst_13 = arith.constant 0.000000e+00 : f32
    %41 = vector.broadcast %cst_13 : f32 to vector<4x2048xf32>
    %42 = arith.maximumf %40, %41 : vector<4x2048xf32>
    %c0_14 = arith.constant 0 : index
    %c0_15 = arith.constant 0 : index
    %43 = vector.load %arg4[%c0_14, %c0_15] : memref<4x36xf32, #tpu.memory_space<vmem>>, vector<4x36xf32>
    %c33_i32 = arith.constant 33 : i32
    %44 = tpu.dynamic_rotate %42 by %c33_i32 dim 1 : vector<4x2048xf32>, i32 -> vector<4x2048xf32>
    %cst_16 = arith.constant 0.000000e+00 : f32
    %45 = vector.shape_cast %15 : vector<1x2048xi1> to vector<1x2048xi1>
    %46 = vector.broadcast %45 : vector<1x2048xi1> to vector<4x2048xi1>
    %47 = vector.broadcast %cst_16 : f32 to vector<4x2048xf32>
    %48 = arith.select %46, %44, %47 : vector<4x2048xi1>, vector<4x2048xf32>
    %c32_i32 = arith.constant 32 : i32
    %49 = tpu.dynamic_rotate %42 by %c32_i32 dim 1 : vector<4x2048xf32>, i32 -> vector<4x2048xf32>
    %cst_17 = arith.constant 0.000000e+00 : f32
    %50 = vector.shape_cast %8 : vector<1x2048xi1> to vector<1x2048xi1>
    %51 = vector.broadcast %50 : vector<1x2048xi1> to vector<4x2048xi1>
    %52 = vector.broadcast %cst_17 : f32 to vector<4x2048xf32>
    %53 = arith.select %51, %49, %52 : vector<4x2048xi1>, vector<4x2048xf32>
    %c31_i32_18 = arith.constant 31 : i32
    %54 = tpu.dynamic_rotate %42 by %c31_i32_18 dim 1 : vector<4x2048xf32>, i32 -> vector<4x2048xf32>
    %cst_19 = arith.constant 0.000000e+00 : f32
    %55 = vector.shape_cast %16 : vector<1x2048xi1> to vector<1x2048xi1>
    %56 = vector.broadcast %55 : vector<1x2048xi1> to vector<4x2048xi1>
    %57 = vector.broadcast %cst_19 : f32 to vector<4x2048xf32>
    %58 = arith.select %56, %54, %57 : vector<4x2048xi1>, vector<4x2048xf32>
    %c1_i32_20 = arith.constant 1 : i32
    %59 = tpu.dynamic_rotate %42 by %c1_i32_20 dim 1 : vector<4x2048xf32>, i32 -> vector<4x2048xf32>
    %cst_21 = arith.constant 0.000000e+00 : f32
    %60 = vector.shape_cast %12 : vector<1x2048xi1> to vector<1x2048xi1>
    %61 = vector.broadcast %60 : vector<1x2048xi1> to vector<4x2048xi1>
    %62 = vector.broadcast %cst_21 : f32 to vector<4x2048xf32>
    %63 = arith.select %61, %59, %62 : vector<4x2048xi1>, vector<4x2048xf32>
    %c2047_i32 = arith.constant 2047 : i32
    %64 = tpu.dynamic_rotate %42 by %c2047_i32 dim 1 : vector<4x2048xf32>, i32 -> vector<4x2048xf32>
    %cst_22 = arith.constant 0.000000e+00 : f32
    %65 = vector.shape_cast %14 : vector<1x2048xi1> to vector<1x2048xi1>
    %66 = vector.broadcast %65 : vector<1x2048xi1> to vector<4x2048xi1>
    %67 = vector.broadcast %cst_22 : f32 to vector<4x2048xf32>
    %68 = arith.select %66, %64, %67 : vector<4x2048xi1>, vector<4x2048xf32>
    %c2017_i32 = arith.constant 2017 : i32
    %69 = tpu.dynamic_rotate %42 by %c2017_i32 dim 1 : vector<4x2048xf32>, i32 -> vector<4x2048xf32>
    %cst_23 = arith.constant 0.000000e+00 : f32
    %70 = vector.shape_cast %17 : vector<1x2048xi1> to vector<1x2048xi1>
    %71 = vector.broadcast %70 : vector<1x2048xi1> to vector<4x2048xi1>
    %72 = vector.broadcast %cst_23 : f32 to vector<4x2048xf32>
    %73 = arith.select %71, %69, %72 : vector<4x2048xi1>, vector<4x2048xf32>
    %c2016_i32 = arith.constant 2016 : i32
    %74 = tpu.dynamic_rotate %42 by %c2016_i32 dim 1 : vector<4x2048xf32>, i32 -> vector<4x2048xf32>
    %cst_24 = arith.constant 0.000000e+00 : f32
    %75 = vector.shape_cast %10 : vector<1x2048xi1> to vector<1x2048xi1>
    %76 = vector.broadcast %75 : vector<1x2048xi1> to vector<4x2048xi1>
    %77 = vector.broadcast %cst_24 : f32 to vector<4x2048xf32>
    %78 = arith.select %76, %74, %77 : vector<4x2048xi1>, vector<4x2048xf32>
    %c2015_i32 = arith.constant 2015 : i32
    %79 = tpu.dynamic_rotate %42 by %c2015_i32 dim 1 : vector<4x2048xf32>, i32 -> vector<4x2048xf32>
    %cst_25 = arith.constant 0.000000e+00 : f32
    %80 = vector.shape_cast %18 : vector<1x2048xi1> to vector<1x2048xi1>
    %81 = vector.broadcast %80 : vector<1x2048xi1> to vector<4x2048xi1>
    %82 = vector.broadcast %cst_25 : f32 to vector<4x2048xf32>
    %83 = arith.select %81, %79, %82 : vector<4x2048xi1>, vector<4x2048xf32>
    %84 = tpu.concatenate %48, %53, %58, %63, %42, %68, %73, %78, %83 in 0 : vector<4x2048xf32>, vector<4x2048xf32>, vector<4x2048xf32>, vector<4x2048xf32>, vector<4x2048xf32>, vector<4x2048xf32>, vector<4x2048xf32>, vector<4x2048xf32>, vector<4x2048xf32> -> vector<36x2048xf32>
    %cst_26 = arith.constant dense<0.000000e+00> : vector<4x2048xf32>
    %85 = tpu.matmul %43, %84, %cst_26 {dimension_numbers = #tpu.dot_dimension_numbers<[1], [0], [0], [1], [0, 0, 1, 1], [], []>} : vector<4x36xf32>, vector<36x2048xf32>, vector<4x2048xf32> -> vector<4x2048xf32>
    %c0_27 = arith.constant 0 : index
    %c0_28 = arith.constant 0 : index
    %86 = vector.load %arg5[%c0_27, %c0_28] : memref<4x1xf32, #tpu.memory_space<vmem>>, vector<4x1xf32>
    %87 = vector.broadcast %86 : vector<4x1xf32> to vector<4x2048xf32>
    %88 = arith.addf %85, %87 : vector<4x2048xf32>
    %cst_29 = arith.constant dense<0.000000e+00> : vector<4xf32>
    %89 = vector.multi_reduction <add>, %88, %cst_29 [1] : vector<4x2048xf32> to vector<4xf32>
    %90 = vector.shape_cast %89 : vector<4xf32> to vector<4x1xf32>
    %cst_30 = arith.constant 4.8828125E-4 : f32
    %91 = vector.broadcast %cst_30 : f32 to vector<4x1xf32>
    %92 = arith.mulf %90, %91 : vector<4x1xf32>
    %93 = vector.broadcast %92 : vector<4x1xf32> to vector<4x2048xf32>
    %94 = arith.subf %88, %93 : vector<4x2048xf32>
    %95 = arith.mulf %94, %94 : vector<4x2048xf32>
    %cst_31 = arith.constant dense<0.000000e+00> : vector<4xf32>
    %96 = vector.multi_reduction <add>, %95, %cst_31 [1] : vector<4x2048xf32> to vector<4xf32>
    %97 = vector.shape_cast %96 : vector<4xf32> to vector<4x1xf32>
    %cst_32 = arith.constant 4.8828125E-4 : f32
    %98 = vector.broadcast %cst_32 : f32 to vector<4x1xf32>
    %99 = arith.mulf %97, %98 : vector<4x1xf32>
    %cst_33 = arith.constant 9.99999974E-6 : f32
    %100 = vector.broadcast %cst_33 : f32 to vector<4x1xf32>
    %101 = arith.addf %99, %100 : vector<4x1xf32>
    %102 = math.rsqrt %101 : vector<4x1xf32>
    %c0_34 = arith.constant 0 : index
    %c0_35 = arith.constant 0 : index
    %103 = vector.load %arg6[%c0_34, %c0_35] : memref<4x1xf32, #tpu.memory_space<vmem>>, vector<4x1xf32>
    %104 = arith.mulf %102, %103 : vector<4x1xf32>
    %105 = vector.broadcast %104 : vector<4x1xf32> to vector<4x2048xf32>
    %106 = arith.mulf %94, %105 : vector<4x2048xf32>
    %c0_36 = arith.constant 0 : index
    %c0_37 = arith.constant 0 : index
    %107 = vector.load %arg7[%c0_36, %c0_37] : memref<4x1xf32, #tpu.memory_space<vmem>>, vector<4x1xf32>
    %108 = vector.broadcast %107 : vector<4x1xf32> to vector<4x2048xf32>
    %109 = arith.addf %106, %108 : vector<4x2048xf32>
    %cst_38 = arith.constant 0.000000e+00 : f32
    %110 = vector.broadcast %cst_38 : f32 to vector<4x2048xf32>
    %111 = arith.maximumf %109, %110 : vector<4x2048xf32>
    %c33_i32_39 = arith.constant 33 : i32
    %112 = tpu.dynamic_rotate %111 by %c33_i32_39 dim 1 : vector<4x2048xf32>, i32 -> vector<4x2048xf32>
    %cst_40 = arith.constant 0.000000e+00 : f32
    %113 = vector.shape_cast %15 : vector<1x2048xi1> to vector<1x2048xi1>
    %114 = vector.broadcast %113 : vector<1x2048xi1> to vector<4x2048xi1>
    %115 = vector.broadcast %cst_40 : f32 to vector<4x2048xf32>
    %116 = arith.select %114, %112, %115 : vector<4x2048xi1>, vector<4x2048xf32>
    %c32_i32_41 = arith.constant 32 : i32
    %117 = tpu.dynamic_rotate %111 by %c32_i32_41 dim 1 : vector<4x2048xf32>, i32 -> vector<4x2048xf32>
    %cst_42 = arith.constant 0.000000e+00 : f32
    %118 = vector.shape_cast %8 : vector<1x2048xi1> to vector<1x2048xi1>
    %119 = vector.broadcast %118 : vector<1x2048xi1> to vector<4x2048xi1>
    %120 = vector.broadcast %cst_42 : f32 to vector<4x2048xf32>
    %121 = arith.select %119, %117, %120 : vector<4x2048xi1>, vector<4x2048xf32>
    %c31_i32_43 = arith.constant 31 : i32
    %122 = tpu.dynamic_rotate %111 by %c31_i32_43 dim 1 : vector<4x2048xf32>, i32 -> vector<4x2048xf32>
    %cst_44 = arith.constant 0.000000e+00 : f32
    %123 = vector.shape_cast %16 : vector<1x2048xi1> to vector<1x2048xi1>
    %124 = vector.broadcast %123 : vector<1x2048xi1> to vector<4x2048xi1>
    %125 = vector.broadcast %cst_44 : f32 to vector<4x2048xf32>
    %126 = arith.select %124, %122, %125 : vector<4x2048xi1>, vector<4x2048xf32>
    %c1_i32_45 = arith.constant 1 : i32
    %127 = tpu.dynamic_rotate %111 by %c1_i32_45 dim 1 : vector<4x2048xf32>, i32 -> vector<4x2048xf32>
    %cst_46 = arith.constant 0.000000e+00 : f32
    %128 = vector.shape_cast %12 : vector<1x2048xi1> to vector<1x2048xi1>
    %129 = vector.broadcast %128 : vector<1x2048xi1> to vector<4x2048xi1>
    %130 = vector.broadcast %cst_46 : f32 to vector<4x2048xf32>
    %131 = arith.select %129, %127, %130 : vector<4x2048xi1>, vector<4x2048xf32>
    %c2047_i32_47 = arith.constant 2047 : i32
    %132 = tpu.dynamic_rotate %111 by %c2047_i32_47 dim 1 : vector<4x2048xf32>, i32 -> vector<4x2048xf32>
    %cst_48 = arith.constant 0.000000e+00 : f32
    %133 = vector.shape_cast %14 : vector<1x2048xi1> to vector<1x2048xi1>
    %134 = vector.broadcast %133 : vector<1x2048xi1> to vector<4x2048xi1>
    %135 = vector.broadcast %cst_48 : f32 to vector<4x2048xf32>
    %136 = arith.select %134, %132, %135 : vector<4x2048xi1>, vector<4x2048xf32>
    %c2017_i32_49 = arith.constant 2017 : i32
    %137 = tpu.dynamic_rotate %111 by %c2017_i32_49 dim 1 : vector<4x2048xf32>, i32 -> vector<4x2048xf32>
    %cst_50 = arith.constant 0.000000e+00 : f32
    %138 = vector.shape_cast %17 : vector<1x2048xi1> to vector<1x2048xi1>
    %139 = vector.broadcast %138 : vector<1x2048xi1> to vector<4x2048xi1>
    %140 = vector.broadcast %cst_50 : f32 to vector<4x2048xf32>
    %141 = arith.select %139, %137, %140 : vector<4x2048xi1>, vector<4x2048xf32>
    %c2016_i32_51 = arith.constant 2016 : i32
    %142 = tpu.dynamic_rotate %111 by %c2016_i32_51 dim 1 : vector<4x2048xf32>, i32 -> vector<4x2048xf32>
    %cst_52 = arith.constant 0.000000e+00 : f32
    %143 = vector.shape_cast %10 : vector<1x2048xi1> to vector<1x2048xi1>
    %144 = vector.broadcast %143 : vector<1x2048xi1> to vector<4x2048xi1>
    %145 = vector.broadcast %cst_52 : f32 to vector<4x2048xf32>
    %146 = arith.select %144, %142, %145 : vector<4x2048xi1>, vector<4x2048xf32>
    %c2015_i32_53 = arith.constant 2015 : i32
    %147 = tpu.dynamic_rotate %111 by %c2015_i32_53 dim 1 : vector<4x2048xf32>, i32 -> vector<4x2048xf32>
    %cst_54 = arith.constant 0.000000e+00 : f32
    %148 = vector.shape_cast %18 : vector<1x2048xi1> to vector<1x2048xi1>
    %149 = vector.broadcast %148 : vector<1x2048xi1> to vector<4x2048xi1>
    %150 = vector.broadcast %cst_54 : f32 to vector<4x2048xf32>
    %151 = arith.select %149, %147, %150 : vector<4x2048xi1>, vector<4x2048xf32>
    %152 = tpu.concatenate %116, %121, %126, %131, %111, %136, %141, %146, %151 in 0 : vector<4x2048xf32>, vector<4x2048xf32>, vector<4x2048xf32>, vector<4x2048xf32>, vector<4x2048xf32>, vector<4x2048xf32>, vector<4x2048xf32>, vector<4x2048xf32>, vector<4x2048xf32> -> vector<36x2048xf32>
    %153 = tpu.concatenate %152, %19 in 0 : vector<36x2048xf32>, vector<4x2048xf32> -> vector<40x2048xf32>
    %c0_55 = arith.constant 0 : index
    %c0_56 = arith.constant 0 : index
    %154 = vector.load %arg8[%c0_55, %c0_56] : memref<8x40xf32, #tpu.memory_space<vmem>>, vector<8x40xf32>
    %cst_57 = arith.constant dense<0.000000e+00> : vector<8x2048xf32>
    %155 = tpu.matmul %154, %153, %cst_57 {dimension_numbers = #tpu.dot_dimension_numbers<[1], [0], [0], [1], [0, 0, 1, 1], [], []>} : vector<8x40xf32>, vector<40x2048xf32>, vector<8x2048xf32> -> vector<8x2048xf32>
    %c0_58 = arith.constant 0 : index
    %c0_59 = arith.constant 0 : index
    %156 = vector.load %arg9[%c0_58, %c0_59] : memref<8x1xf32, #tpu.memory_space<vmem>>, vector<8x1xf32>
    %157 = vector.broadcast %156 : vector<8x1xf32> to vector<8x2048xf32>
    %158 = arith.addf %155, %157 : vector<8x2048xf32>
    %c0_60 = arith.constant 0 : index
    %c0_61 = arith.constant 0 : index
    %159 = vector.load %arg10[%c0_60, %c0_61] : memref<8x2048xf32, #tpu.memory_space<vmem>>, vector<8x2048xf32>
    tpu.vector_store %arg10[%c0_60, %c0_61], %158 {strides = array<i32>} : memref<8x2048xf32, #tpu.memory_space<vmem>>, vector<8x2048xf32>,
    return
  }
  func.func @transform_0(%arg0: i32) -> (i32, i32) {
    %c0_i32 = arith.constant 0 : i32
    %c0_i32_0 = arith.constant 0 : i32
    %c0_i32_1 = arith.constant 0 : i32
    return %c0_i32, %c0_i32_0 : i32, i32
  }
  func.func @transform_1(%arg0: i32) -> (i32, i32) {
    %c0_i32 = arith.constant 0 : i32
    %c0_i32_0 = arith.constant 0 : i32
    %c0_i32_1 = arith.constant 0 : i32
    return %c0_i32, %c0_i32_0 : i32, i32
  }
  func.func @transform_2(%arg0: i32) -> (i32, i32) {
    %c0_i32 = arith.constant 0 : i32
    %c0_i32_0 = arith.constant 0 : i32
    %c0_i32_1 = arith.constant 0 : i32
    return %c0_i32, %c0_i32_0 : i32, i32
  }
  func.func @transform_3(%arg0: i32) -> (i32, i32) {
    %c0_i32 = arith.constant 0 : i32
    %c0_i32_0 = arith.constant 0 : i32
    %c0_i32_1 = arith.constant 0 : i32
    return %c0_i32, %c0_i32_0 : i32, i32
  }
  func.func @transform_4(%arg0: i32) -> (i32, i32) {
    %c0_i32 = arith.constant 0 : i32
    %c0_i32_0 = arith.constant 0 : i32
    %c0_i32_1 = arith.constant 0 : i32
    return %c0_i32, %c0_i32_0 : i32, i32
  }
  func.func @transform_5(%arg0: i32) -> (i32, i32) {
    %c0_i32 = arith.constant 0 : i32
    %c0_i32_0 = arith.constant 0 : i32
    %c0_i32_1 = arith.constant 0 : i32
    return %c0_i32, %c0_i32_0 : i32, i32
  }
  func.func @transform_6(%arg0: i32) -> (i32, i32) {
    %c0_i32 = arith.constant 0 : i32
    %c0_i32_0 = arith.constant 0 : i32
    %c0_i32_1 = arith.constant 0 : i32
    return %c0_i32, %c0_i32_0 : i32, i32
  }
  func.func @transform_7(%arg0: i32) -> (i32, i32) {
    %c0_i32 = arith.constant 0 : i32
    %c0_i32_0 = arith.constant 0 : i32
    %c0_i32_1 = arith.constant 0 : i32
    return %c0_i32, %c0_i32_0 : i32, i32
  }
  func.func @transform_8(%arg0: i32) -> (i32, i32) {
    %c0_i32 = arith.constant 0 : i32
    %c0_i32_0 = arith.constant 0 : i32
    %c0_i32_1 = arith.constant 0 : i32
    return %c0_i32, %c0_i32_0 : i32, i32
  }
  func.func @transform_9(%arg0: i32) -> (i32, i32) {
    %c0_i32 = arith.constant 0 : i32
    %c0_i32_0 = arith.constant 0 : i32
    %c0_i32_1 = arith.constant 0 : i32
    return %c0_i32, %c0_i32_0 : i32, i32
  }
}

</mosaic_0001>

<llo_original>
// kernel: tpu_custom_call.1
$region0: #{tpu_custom_call.1}
  #allocation0 [shape = 'u32[]', space=smem, size = 0x4, offset = 0x4, fixed_abs, tag = 'smem constant byte address 0x4 - core index']
  #allocation1 [shape = 'u32[144,128]{1,0:T(1,128)}', space=vmem, size = 0x12000, scoped, tag = 'internal scratch']
  %s0 = inlined_call_operand.hbm [shape: f32[4,2048], index: 0, kind: input, shape index: {}]
  %s1 = inlined_call_operand.vmem [shape: f32[4,1], index: 1, kind: input, shape index: {}]
  %s2 = inlined_call_operand.vmem [shape: f32[4,1], index: 2, kind: input, shape index: {}]
  %s3 = inlined_call_operand.vmem [shape: f32[4,36], index: 3, kind: input, shape index: {}]
  %s4 = inlined_call_operand.vmem [shape: f32[4,1], index: 4, kind: input, shape index: {}]
  %s5 = inlined_call_operand.vmem [shape: f32[4,1], index: 5, kind: input, shape index: {}]
  %s6 = inlined_call_operand.vmem [shape: f32[4,1], index: 6, kind: input, shape index: {}]
  %s7 = inlined_call_operand.vmem [shape: f32[8,40], index: 7, kind: input, shape index: {}]
  %s8 = inlined_call_operand.vmem [shape: f32[8,1], index: 8, kind: input, shape index: {}]
  %s9 = inlined_call_operand.hbm [shape: f32[8,2048], index: 9, kind: output, shape index: {}]
  %s10 = sld [smem:[#allocation0]]
  $region50: #{tpu_custom_call.1} parent=0
    _
  %s12 = ssub.s32 1, %s10
  %s13 = scalar_select 0, %s12, %s10
  $region1: #{tpu_custom_call.1} parent=0
    #allocation2 [shape = 'u8[32768]{0}', space=vmem, size = 0x8000, scoped, tag = 'input window, operand 0, single buffered']
    #allocation3 [shape = 's32[1]{0}', space=sflag, size = 0x4, scoped, tag = 'scoped memory for tpu_custom_call.1']
    #allocation4 [shape = 's32[1]{0}', space=sflag, size = 0x4, scoped, tag = 'scoped memory for tpu_custom_call.1']
    #allocation5 [shape = 'u8[65536]{0}', space=vmem, size = 0x10000, scoped, tag = 'output window, operand 0, single buffered']
    %14 = vsyncpa [#allocation3], 0
    %15 = vsyncpa [#allocation4], 0
    // Predicated region
    $region2: #{tpu_custom_call.1} parent=1 // pred_check
      _
    $region3: #{tpu_custom_call.1} parent=1 // pred_check_branch
      %17 = sbr.rel (0) target = $region5
    $region4: #{tpu_custom_call.1} parent=1 // pred_region
      %s19 = ssub.s32 1024, 1024
      %20 = vsyncadd [#allocation3], %s19
      %s22 = sshll.u32 [#allocation2], 4
      %s23 = int_to_ptr.vmem [resolvable:$true] %s22
      %25 = dma.hbm_to_vmem [thread:$0]  %s0, 1024, %s23, [#allocation3]
    $region5: #{tpu_custom_call.1} parent=1 // pred_fallthru
      _
    // Predicated region
    $region6: #{tpu_custom_call.1} parent=1 // pred_check
      _
    $region7: #{tpu_custom_call.1} parent=1 // pred_check_branch
      %27 = sbr.rel (0) target = $region9
    $region8: #{tpu_custom_call.1} parent=1 // pred_region
      _
    $region9: #{tpu_custom_call.1} parent=1 // pred_fallthru
      _
    // Predicated region
    $region10: #{tpu_custom_call.1} parent=1 // pred_check
      _
    $region11: #{tpu_custom_call.1} parent=1 // pred_check_branch
      %29 = sbr.rel (0) target = $region13
    $region12: #{tpu_custom_call.1} parent=1 // pred_region
      _
    $region13: #{tpu_custom_call.1} parent=1 // pred_fallthru
      _
    // Predicated region
    $region14: #{tpu_custom_call.1} parent=1 // pred_check
      _
    $region15: #{tpu_custom_call.1} parent=1 // pred_check_branch
      %31 = sbr.rel (0) target = $region17
    $region16: #{tpu_custom_call.1} parent=1 // pred_region
      _
    $region17: #{tpu_custom_call.1} parent=1 // pred_fallthru
      _
    // Predicated region
    $region18: #{tpu_custom_call.1} parent=1 // pred_check
      _
    $region19: #{tpu_custom_call.1} parent=1 // pred_check_branch
      %33 = sbr.rel (0) target = $region21
    $region20: #{tpu_custom_call.1} parent=1 // pred_region
      _
    $region21: #{tpu_custom_call.1} parent=1 // pred_fallthru
      _
    // Predicated region
    $region22: #{tpu_custom_call.1} parent=1 // pred_check
      _
    $region23: #{tpu_custom_call.1} parent=1 // pred_check_branch
      %35 = sbr.rel (0) target = $region25
    $region24: #{tpu_custom_call.1} parent=1 // pred_region
      _
    $region25: #{tpu_custom_call.1} parent=1 // pred_fallthru
      _
    // Predicated region
    $region26: #{tpu_custom_call.1} parent=1 // pred_check
      _
    $region27: #{tpu_custom_call.1} parent=1 // pred_check_branch
      %37 = sbr.rel (0) target = $region29
    $region28: #{tpu_custom_call.1} parent=1 // pred_region
      _
    $region29: #{tpu_custom_call.1} parent=1 // pred_fallthru
      _
    // Predicated region
    $region30: #{tpu_custom_call.1} parent=1 // pred_check
      _
    $region31: #{tpu_custom_call.1} parent=1 // pred_check_branch
      %39 = sbr.rel (0) target = $region33
    $region32: #{tpu_custom_call.1} parent=1 // pred_region
      _
    $region33: #{tpu_custom_call.1} parent=1 // pred_fallthru
      _
    // Predicated region
    $region34: #{tpu_custom_call.1} parent=1 // pred_check
      _
    $region35: #{tpu_custom_call.1} parent=1 // pred_check_branch
      %41 = sbr.rel (0) target = $region37
    $region36: #{tpu_custom_call.1} parent=1 // pred_region
      _
    $region37: #{tpu_custom_call.1} parent=1 // pred_fallthru
      _
    // Predicated region
    $region38: #{tpu_custom_call.1} parent=1 // pred_check
      _
    $region39: #{tpu_custom_call.1} parent=1 // pred_check_branch
      %43 = sbr.rel (0) target = $region41
    $region40: #{tpu_custom_call.1} parent=1 // pred_region
      %44 = dma.done [#allocation3], 1024
    $region41: #{tpu_custom_call.1} parent=1 // pred_fallthru
      _
    %v45 = vlaneseq
    %v46 = vand.u32 %v45, 127
    %v47 = vadd.s32 %v46, 128
    %v48 = vadd.s32 %v46, 256
    %v49 = vadd.s32 %v46, 384
    %v50 = vadd.s32 %v46, 512
    %v51 = vadd.s32 %v46, 640
    %v52 = vadd.s32 %v46, 768
    %v53 = vadd.s32 %v46, 896
    %v54 = vadd.s32 %v46, 1024
    %v55 = vadd.s32 %v46, 1152
    %v56 = vadd.s32 %v46, 1280
    %v57 = vadd.s32 %v46, 1408
    %v58 = vadd.s32 %v46, 1536
    %v59 = vadd.s32 %v46, 1664
    %v60 = vadd.s32 %v46, 1792
    %v61 = vadd.s32 %v46, 1920
    %v62 = vand.u32 %v46, 31
    %v63 = vand.u32 %v47, 31
    %v64 = vand.u32 %v48, 31
    %v65 = vand.u32 %v49, 31
    %v66 = vand.u32 %v50, 31
    %v67 = vand.u32 %v51, 31
    %v68 = vand.u32 %v52, 31
    %v69 = vand.u32 %v53, 31
    %v70 = vand.u32 %v54, 31
    %v71 = vand.u32 %v55, 31
    %v72 = vand.u32 %v56, 31
    %v73 = vand.u32 %v57, 31
    %v74 = vand.u32 %v58, 31
    %v75 = vand.u32 %v59, 31
    %v76 = vand.u32 %v60, 31
    %v77 = vand.u32 %v61, 31
    %v78 = vshra.s32 %v46, 5
    %v79 = vshra.s32 %v47, 5
    %v80 = vshra.s32 %v48, 5
    %v81 = vshra.s32 %v49, 5
    %v82 = vshra.s32 %v50, 5
    %v83 = vshra.s32 %v51, 5
    %v84 = vshra.s32 %v52, 5
    %v85 = vshra.s32 %v53, 5
    %v86 = vshra.s32 %v54, 5
    %v87 = vshra.s32 %v55, 5
    %v88 = vshra.s32 %v56, 5
    %v89 = vshra.s32 %v57, 5
    %v90 = vshra.s32 %v58, 5
    %v91 = vshra.s32 %v59, 5
    %v92 = vshra.s32 %v60, 5
    %v93 = vshra.s32 %v61, 5
    %v94 = vand.u32 %v78, 31
    %v95 = vand.u32 %v79, 31
    %v96 = vand.u32 %v80, 31
    %v97 = vand.u32 %v81, 31
    %v98 = vand.u32 %v82, 31
    %v99 = vand.u32 %v83, 31
    %v100 = vand.u32 %v84, 31
    %v101 = vand.u32 %v85, 31
    %v102 = vand.u32 %v86, 31
    %v103 = vand.u32 %v87, 31
    %v104 = vand.u32 %v88, 31
    %v105 = vand.u32 %v89, 31
    %v106 = vand.u32 %v90, 31
    %v107 = vand.u32 %v91, 31
    %v108 = vand.u32 %v92, 31
    %v109 = vand.u32 %v93, 31
    %vm110 = vcmp.ge.s32.totalorder %v94, 1
    %vm111 = vcmp.ge.s32.totalorder %v95, 1
    %vm112 = vcmp.ge.s32.totalorder %v96, 1
    %vm113 = vcmp.ge.s32.totalorder %v97, 1
    %vm114 = vcmp.ge.s32.totalorder %v98, 1
    %vm115 = vcmp.ge.s32.totalorder %v99, 1
    %vm116 = vcmp.ge.s32.totalorder %v100, 1
    %vm117 = vcmp.ge.s32.totalorder %v101, 1
    %vm118 = vcmp.ge.s32.totalorder %v102, 1
    %vm119 = vcmp.ge.s32.totalorder %v103, 1
    %vm120 = vcmp.ge.s32.totalorder %v104, 1
    %vm121 = vcmp.ge.s32.totalorder %v105, 1
    %vm122 = vcmp.ge.s32.totalorder %v106, 1
    %vm123 = vcmp.ge.s32.totalorder %v107, 1
    %vm124 = vcmp.ge.s32.totalorder %v108, 1
    %vm125 = vcmp.ge.s32.totalorder %v109, 1
    %vm126 = vcmp.lt.s32.totalorder %v94, 31
    %vm127 = vcmp.lt.s32.totalorder %v95, 31
    %vm128 = vcmp.lt.s32.totalorder %v96, 31
    %vm129 = vcmp.lt.s32.totalorder %v97, 31
    %vm130 = vcmp.lt.s32.totalorder %v98, 31
    %vm131 = vcmp.lt.s32.totalorder %v99, 31
    %vm132 = vcmp.lt.s32.totalorder %v100, 31
    %vm133 = vcmp.lt.s32.totalorder %v101, 31
    %vm134 = vcmp.lt.s32.totalorder %v102, 31
    %vm135 = vcmp.lt.s32.totalorder %v103, 31
    %vm136 = vcmp.lt.s32.totalorder %v104, 31
    %vm137 = vcmp.lt.s32.totalorder %v105, 31
    %vm138 = vcmp.lt.s32.totalorder %v106, 31
    %vm139 = vcmp.lt.s32.totalorder %v107, 31
    %vm140 = vcmp.lt.s32.totalorder %v108, 31
    %vm141 = vcmp.lt.s32.totalorder %v109, 31
    %vm142 = vcmp.ge.s32.totalorder %v62, 1
    %vm143 = vcmp.ge.s32.totalorder %v63, 1
    %vm144 = vcmp.ge.s32.totalorder %v64, 1
    %vm145 = vcmp.ge.s32.totalorder %v65, 1
    %vm146 = vcmp.ge.s32.totalorder %v66, 1
    %vm147 = vcmp.ge.s32.totalorder %v67, 1
    %vm148 = vcmp.ge.s32.totalorder %v68, 1
    %vm149 = vcmp.ge.s32.totalorder %v69, 1
    %vm150 = vcmp.ge.s32.totalorder %v70, 1
    %vm151 = vcmp.ge.s32.totalorder %v71, 1
    %vm152 = vcmp.ge.s32.totalorder %v72, 1
    %vm153 = vcmp.ge.s32.totalorder %v73, 1
    %vm154 = vcmp.ge.s32.totalorder %v74, 1
    %vm155 = vcmp.ge.s32.totalorder %v75, 1
    %vm156 = vcmp.ge.s32.totalorder %v76, 1
    %vm157 = vcmp.ge.s32.totalorder %v77, 1
    %vm158 = vcmp.lt.s32.totalorder %v62, 31
    %vm159 = vcmp.lt.s32.totalorder %v63, 31
    %vm160 = vcmp.lt.s32.totalorder %v64, 31
    %vm161 = vcmp.lt.s32.totalorder %v65, 31
    %vm162 = vcmp.lt.s32.totalorder %v66, 31
    %vm163 = vcmp.lt.s32.totalorder %v67, 31
    %vm164 = vcmp.lt.s32.totalorder %v68, 31
    %vm165 = vcmp.lt.s32.totalorder %v69, 31
    %vm166 = vcmp.lt.s32.totalorder %v70, 31
    %vm167 = vcmp.lt.s32.totalorder %v71, 31
    %vm168 = vcmp.lt.s32.totalorder %v72, 31
    %vm169 = vcmp.lt.s32.totalorder %v73, 31
    %vm170 = vcmp.lt.s32.totalorder %v74, 31
    %vm171 = vcmp.lt.s32.totalorder %v75, 31
    %vm172 = vcmp.lt.s32.totalorder %v76, 31
    %vm173 = vcmp.lt.s32.totalorder %v77, 31
    %vm174 = vmand %vm110, %vm142
    %vm175 = vmand %vm111, %vm143
    %vm176 = vmand %vm112, %vm144
    %vm177 = vmand %vm113, %vm145
    %vm178 = vmand %vm114, %vm146
    %vm179 = vmand %vm115, %vm147
    %vm180 = vmand %vm116, %vm148
    %vm181 = vmand %vm117, %vm149
    %vm182 = vmand %vm118, %vm150
    %vm183 = vmand %vm119, %vm151
    %vm184 = vmand %vm120, %vm152
    %vm185 = vmand %vm121, %vm153
    %vm186 = vmand %vm122, %vm154
    %vm187 = vmand %vm123, %vm155
    %vm188 = vmand %vm124, %vm156
    %vm189 = vmand %vm125, %vm157
    %vm190 = vmand %vm110, %vm158
    %vm191 = vmand %vm111, %vm159
    %vm192 = vmand %vm112, %vm160
    %vm193 = vmand %vm113, %vm161
    %vm194 = vmand %vm114, %vm162
    %vm195 = vmand %vm115, %vm163
    %vm196 = vmand %vm116, %vm164
    %vm197 = vmand %vm117, %vm165
    %vm198 = vmand %vm118, %vm166
    %vm199 = vmand %vm119, %vm167
    %vm200 = vmand %vm120, %vm168
    %vm201 = vmand %vm121, %vm169
    %vm202 = vmand %vm122, %vm170
    %vm203 = vmand %vm123, %vm171
    %vm204 = vmand %vm124, %vm172
    %vm205 = vmand %vm125, %vm173
    %vm206 = vmand %vm126, %vm142
    %vm207 = vmand %vm127, %vm143
    %vm208 = vmand %vm128, %vm144
    %vm209 = vmand %vm129, %vm145
    %vm210 = vmand %vm130, %vm146
    %vm211 = vmand %vm131, %vm147
    %vm212 = vmand %vm132, %vm148
    %vm213 = vmand %vm133, %vm149
    %vm214 = vmand %vm134, %vm150
    %vm215 = vmand %vm135, %vm151
    %vm216 = vmand %vm136, %vm152
    %vm217 = vmand %vm137, %vm153
    %vm218 = vmand %vm138, %vm154
    %vm219 = vmand %vm139, %vm155
    %vm220 = vmand %vm140, %vm156
    %vm221 = vmand %vm141, %vm157
    %vm222 = vmand %vm126, %vm158
    %vm223 = vmand %vm127, %vm159
    %vm224 = vmand %vm128, %vm160
    %vm225 = vmand %vm129, %vm161
    %vm226 = vmand %vm130, %vm162
    %vm227 = vmand %vm131, %vm163
    %vm228 = vmand %vm132, %vm164
    %vm229 = vmand %vm133, %vm165
    %vm230 = vmand %vm134, %vm166
    %vm231 = vmand %vm135, %vm167
    %vm232 = vmand %vm136, %vm168
    %vm233 = vmand %vm137, %vm169
    %vm234 = vmand %vm138, %vm170
    %vm235 = vmand %vm139, %vm171
    %vm236 = vmand %vm140, %vm172
    %vm237 = vmand %vm141, %vm173
    %v238 = vld [vmem:[#allocation2] sm:$0xff]
    %v239 = vld [vmem:[#allocation2 + $0x8] sm:$0xff]
    %v240 = vld [vmem:[#allocation2 + $0x10] sm:$0xff]
    %v241 = vld [vmem:[#allocation2 + $0x18] sm:$0xff]
    %v242 = vld [vmem:[#allocation2 + $0x20] sm:$0xff]
    %v243 = vld [vmem:[#allocation2 + $0x28] sm:$0xff]
    %v244 = vld [vmem:[#allocation2 + $0x30] sm:$0xff]
    %v245 = vld [vmem:[#allocation2 + $0x38] sm:$0xff]
    %v254 = vcombine.high %v238, %v238
    %v255 = vcombine.high %v239, %v239
    %v256 = vcombine.high %v240, %v240
    %v257 = vcombine.high %v241, %v241
    %v258 = vcombine.high %v242, %v242
    %v259 = vcombine.high %v243, %v243
    %v260 = vcombine.high %v244, %v244
    %v261 = vcombine.high %v245, %v245
    %vm270 = vcmask 1043456
    %v271 = vsel %vm270, %v238, 0.0
    %v272 = vsel %vm270, %v254, 0.0
    %v273 = vadd.f32 %v271, %v272
    %v274 = vsel %vm270, %v239, 0.0
    %v275 = vadd.f32 %v273, %v274
    %v276 = vsel %vm270, %v255, 0.0
    %v277 = vadd.f32 %v275, %v276
    %v278 = vsel %vm270, %v240, 0.0
    %v279 = vadd.f32 %v277, %v278
    %v280 = vsel %vm270, %v256, 0.0
    %v281 = vadd.f32 %v279, %v280
    %v282 = vsel %vm270, %v241, 0.0
    %v283 = vadd.f32 %v281, %v282
    %v284 = vsel %vm270, %v257, 0.0
    %v285 = vadd.f32 %v283, %v284
    %v286 = vsel %vm270, %v242, 0.0
    %v287 = vadd.f32 %v285, %v286
    %v288 = vsel %vm270, %v258, 0.0
    %v289 = vadd.f32 %v287, %v288
    %v290 = vsel %vm270, %v243, 0.0
    %v291 = vadd.f32 %v289, %v290
    %v292 = vsel %vm270, %v259, 0.0
    %v293 = vadd.f32 %v291, %v292
    %v294 = vsel %vm270, %v244, 0.0
    %v295 = vadd.f32 %v293, %v294
    %v296 = vsel %vm270, %v260, 0.0
    %v297 = vadd.f32 %v295, %v296
    %v298 = vsel %vm270, %v245, 0.0
    %v299 = vadd.f32 %v297, %v298
    %v300 = vsel %vm270, %v261, 0.0
    %v301 = vadd.f32 %v299, %v300
    %302 = vadd.xlane.f32.xlu0 %v301
    %v303 = vpop.xlane.xlu0 %302
    %v304 = vmul.f32 %v303, 0.00048828125
    %v307 = vunpack.c.l.s4 839922192
    %v308 = vunpack.c.0.s8 %v307
    %v309 = vlaneseq
    %v310 = vshrl.u32 %v309, 7
    %v311 = vsub.s32 %v308, %v310
    %v312 = vrot.slane %v304, %v311
    %v314 = vsub.f32 %v238, %v312
    %v315 = vsub.f32 %v239, %v312
    %v316 = vsub.f32 %v240, %v312
    %v317 = vsub.f32 %v241, %v312
    %v318 = vsub.f32 %v242, %v312
    %v319 = vsub.f32 %v243, %v312
    %v320 = vsub.f32 %v244, %v312
    %v321 = vsub.f32 %v245, %v312
    %v322 = vmul.f32 %v314, %v314
    %v323 = vmul.f32 %v315, %v315
    %v324 = vmul.f32 %v316, %v316
    %v325 = vmul.f32 %v317, %v317
    %v326 = vmul.f32 %v318, %v318
    %v327 = vmul.f32 %v319, %v319
    %v328 = vmul.f32 %v320, %v320
    %v329 = vmul.f32 %v321, %v321
    %v338 = vcombine.high %v322, %v322
    %v339 = vcombine.high %v323, %v323
    %v340 = vcombine.high %v324, %v324
    %v341 = vcombine.high %v325, %v325
    %v342 = vcombine.high %v326, %v326
    %v343 = vcombine.high %v327, %v327
    %v344 = vcombine.high %v328, %v328
    %v345 = vcombine.high %v329, %v329
    %v354 = vsel %vm270, %v322, 0.0
    %v355 = vsel %vm270, %v338, 0.0
    %v356 = vadd.f32 %v354, %v355
    %v357 = vsel %vm270, %v323, 0.0
    %v358 = vadd.f32 %v356, %v357
    %v359 = vsel %vm270, %v339, 0.0
    %v360 = vadd.f32 %v358, %v359
    %v361 = vsel %vm270, %v324, 0.0
    %v362 = vadd.f32 %v360, %v361
    %v363 = vsel %vm270, %v340, 0.0
    %v364 = vadd.f32 %v362, %v363
    %v365 = vsel %vm270, %v325, 0.0
    %v366 = vadd.f32 %v364, %v365
    %v367 = vsel %vm270, %v341, 0.0
    %v368 = vadd.f32 %v366, %v367
    %v369 = vsel %vm270, %v326, 0.0
    %v370 = vadd.f32 %v368, %v369
    %v371 = vsel %vm270, %v342, 0.0
    %v372 = vadd.f32 %v370, %v371
    %v373 = vsel %vm270, %v327, 0.0
    %v374 = vadd.f32 %v372, %v373
    %v375 = vsel %vm270, %v343, 0.0
    %v376 = vadd.f32 %v374, %v375
    %v377 = vsel %vm270, %v328, 0.0
    %v378 = vadd.f32 %v376, %v377
    %v379 = vsel %vm270, %v344, 0.0
    %v380 = vadd.f32 %v378, %v379
    %v381 = vsel %vm270, %v329, 0.0
    %v382 = vadd.f32 %v380, %v381
    %v383 = vsel %vm270, %v345, 0.0
    %v384 = vadd.f32 %v382, %v383
    %385 = vadd.xlane.f32.xlu0 %v384
    %v386 = vpop.xlane.xlu0 %385
    %v387 = vmul.f32 %v386, 0.00048828125
    %v388 = vadd.f32 %v387, 1e-05
    %v389 = vrsqrt.pop %v388
    %v390 = vld [vmem:[%s1] sm:$0xf]
    %v391 = vmul.f32 %v389, %v390
    %393 = vset.pattern.permute.xlu0 0
    %394 = vperm.xlu0 %393, %v391
    %v395 = vpop.permute.xlu0 %394
    %v397 = vunpack.c.l.s4 839922192
    %v398 = vunpack.c.0.s8 %v397
    %v399 = vlaneseq
    %v400 = vshrl.u32 %v399, 7
    %v401 = vsub.s32 %v398, %v400
    %v402 = vrot.slane %v395, %v401
    %v404 = vmul.f32 %v314, %v402
    %v405 = vmul.f32 %v315, %v402
    %v406 = vmul.f32 %v316, %v402
    %v407 = vmul.f32 %v317, %v402
    %v408 = vmul.f32 %v318, %v402
    %v409 = vmul.f32 %v319, %v402
    %v410 = vmul.f32 %v320, %v402
    %v411 = vmul.f32 %v321, %v402
    %v412 = vld [vmem:[%s2] sm:$0xf]
    %414 = vset.pattern.permute.xlu0 0
    %415 = vperm.xlu0 %414, %v412
    %v416 = vpop.permute.xlu0 %415
    %v418 = vunpack.c.l.s4 839922192
    %v419 = vunpack.c.0.s8 %v418
    %v420 = vlaneseq
    %v421 = vshrl.u32 %v420, 7
    %v422 = vsub.s32 %v419, %v421
    %v423 = vrot.slane %v416, %v422
    %v425 = vadd.f32 %v404, %v423
    %v426 = vadd.f32 %v405, %v423
    %v427 = vadd.f32 %v406, %v423
    %v428 = vadd.f32 %v407, %v423
    %v429 = vadd.f32 %v408, %v423
    %v430 = vadd.f32 %v409, %v423
    %v431 = vadd.f32 %v410, %v423
    %v432 = vadd.f32 %v411, %v423
    %v433 = vmax.f32 %v425, 0.0
    %v434 = vmax.f32 %v426, 0.0
    %v435 = vmax.f32 %v427, 0.0
    %v436 = vmax.f32 %v428, 0.0
    %v437 = vmax.f32 %v429, 0.0
    %v438 = vmax.f32 %v430, 0.0
    %v439 = vmax.f32 %v431, 0.0
    %v440 = vmax.f32 %v432, 0.0
    %v441 = vld [vmem:[%s3] sm:$0xf]
    %v450 = vcombine.high %v433, %v433
    %v451 = vcombine.high %v434, %v434
    %v452 = vcombine.high %v435, %v435
    %v453 = vcombine.high %v436, %v436
    %v454 = vcombine.high %v437, %v437
    %v455 = vcombine.high %v438, %v438
    %v456 = vcombine.high %v439, %v439
    %v457 = vcombine.high %v440, %v440
    %466 = vrot.lane.b32.xlu0 %v433, 33
    %v467 = vpop.permute.xlu0 %466
    %468 = vrot.lane.b32.xlu0 %v450, 33
    %v469 = vpop.permute.xlu0 %468
    %470 = vrot.lane.b32.xlu0 %v434, 33
    %v471 = vpop.permute.xlu0 %470
    %472 = vrot.lane.b32.xlu0 %v451, 33
    %v473 = vpop.permute.xlu0 %472
    %474 = vrot.lane.b32.xlu0 %v435, 33
    %v475 = vpop.permute.xlu0 %474
    %476 = vrot.lane.b32.xlu0 %v452, 33
    %v477 = vpop.permute.xlu0 %476
    %478 = vrot.lane.b32.xlu0 %v436, 33
    %v479 = vpop.permute.xlu0 %478
    %480 = vrot.lane.b32.xlu0 %v453, 33
    %v481 = vpop.permute.xlu0 %480
    %482 = vrot.lane.b32.xlu0 %v437, 33
    %v483 = vpop.permute.xlu0 %482
    %484 = vrot.lane.b32.xlu0 %v454, 33
    %v485 = vpop.permute.xlu0 %484
    %486 = vrot.lane.b32.xlu0 %v438, 33
    %v487 = vpop.permute.xlu0 %486
    %488 = vrot.lane.b32.xlu0 %v455, 33
    %v489 = vpop.permute.xlu0 %488
    %490 = vrot.lane.b32.xlu0 %v439, 33
    %v491 = vpop.permute.xlu0 %490
    %492 = vrot.lane.b32.xlu0 %v456, 33
    %v493 = vpop.permute.xlu0 %492
    %494 = vrot.lane.b32.xlu0 %v440, 33
    %v495 = vpop.permute.xlu0 %494
    %496 = vrot.lane.b32.xlu0 %v457, 33
    %v497 = vpop.permute.xlu0 %496
    %vm498 = vcmp.lt.s32.totalorder %v46, 33
    %v499 = vsel %vm498, %v495, %v497
    %v500 = vsel %vm498, %v493, %v495
    %v501 = vsel %vm498, %v491, %v493
    %v502 = vsel %vm498, %v489, %v491
    %v503 = vsel %vm498, %v487, %v489
    %v504 = vsel %vm498, %v485, %v487
    %v505 = vsel %vm498, %v483, %v485
    %v506 = vsel %vm498, %v481, %v483
    %v507 = vsel %vm498, %v479, %v481
    %v508 = vsel %vm498, %v477, %v479
    %v509 = vsel %vm498, %v475, %v477
    %v510 = vsel %vm498, %v473, %v475
    %v511 = vsel %vm498, %v471, %v473
    %v512 = vsel %vm498, %v469, %v471
    %v513 = vsel %vm498, %v467, %v469
    %v514 = vsel %vm498, %v497, %v467
    %v515 = vsel %vm174, 1, 0
    %v516 = vsel %vm175, 1, 0
    %v517 = vsel %vm176, 1, 0
    %v518 = vsel %vm177, 1, 0
    %v519 = vsel %vm178, 1, 0
    %v520 = vsel %vm179, 1, 0
    %v521 = vsel %vm180, 1, 0
    %v522 = vsel %vm181, 1, 0
    %v523 = vsel %vm182, 1, 0
    %v524 = vsel %vm183, 1, 0
    %v525 = vsel %vm184, 1, 0
    %v526 = vsel %vm185, 1, 0
    %v527 = vsel %vm186, 1, 0
    %v528 = vsel %vm187, 1, 0
    %v529 = vsel %vm188, 1, 0
    %v530 = vsel %vm189, 1, 0
    %vm531 = vcmp.eq.s32.totalorder %v515, 1
    %vm532 = vcmp.eq.s32.totalorder %v516, 1
    %vm533 = vcmp.eq.s32.totalorder %v517, 1
    %vm534 = vcmp.eq.s32.totalorder %v518, 1
    %vm535 = vcmp.eq.s32.totalorder %v519, 1
    %vm536 = vcmp.eq.s32.totalorder %v520, 1
    %vm537 = vcmp.eq.s32.totalorder %v521, 1
    %vm538 = vcmp.eq.s32.totalorder %v522, 1
    %vm539 = vcmp.eq.s32.totalorder %v523, 1
    %vm540 = vcmp.eq.s32.totalorder %v524, 1
    %vm541 = vcmp.eq.s32.totalorder %v525, 1
    %vm542 = vcmp.eq.s32.totalorder %v526, 1
    %vm543 = vcmp.eq.s32.totalorder %v527, 1
    %vm544 = vcmp.eq.s32.totalorder %v528, 1
    %vm545 = vcmp.eq.s32.totalorder %v529, 1
    %vm546 = vcmp.eq.s32.totalorder %v530, 1
    %v547 = vsel %vm531, %v514, 0.0
    %v548 = vsel %vm532, %v513, 0.0
    %v549 = vsel %vm533, %v512, 0.0
    %v550 = vsel %vm534, %v511, 0.0
    %v551 = vsel %vm535, %v510, 0.0
    %v552 = vsel %vm536, %v509, 0.0
    %v553 = vsel %vm537, %v508, 0.0
    %v554 = vsel %vm538, %v507, 0.0
    %v555 = vsel %vm539, %v506, 0.0
    %v556 = vsel %vm540, %v505, 0.0
    %v557 = vsel %vm541, %v504, 0.0
    %v558 = vsel %vm542, %v503, 0.0
    %v559 = vsel %vm543, %v502, 0.0
    %v560 = vsel %vm544, %v501, 0.0
    %v561 = vsel %vm545, %v500, 0.0
    %v562 = vsel %vm546, %v499, 0.0
    %563 = vrot.lane.b32.xlu0 %v433, 32
    %v564 = vpop.permute.xlu0 %563
    %565 = vrot.lane.b32.xlu0 %v450, 32
    %v566 = vpop.permute.xlu0 %565
    %567 = vrot.lane.b32.xlu0 %v434, 32
    %v568 = vpop.permute.xlu0 %567
    %569 = vrot.lane.b32.xlu0 %v451, 32
    %v570 = vpop.permute.xlu0 %569
    %571 = vrot.lane.b32.xlu0 %v435, 32
    %v572 = vpop.permute.xlu0 %571
    %573 = vrot.lane.b32.xlu0 %v452, 32
    %v574 = vpop.permute.xlu0 %573
    %575 = vrot.lane.b32.xlu0 %v436, 32
    %v576 = vpop.permute.xlu0 %575
    %577 = vrot.lane.b32.xlu0 %v453, 32
    %v578 = vpop.permute.xlu0 %577
    %579 = vrot.lane.b32.xlu0 %v437, 32
    %v580 = vpop.permute.xlu0 %579
    %581 = vrot.lane.b32.xlu0 %v454, 32
    %v582 = vpop.permute.xlu0 %581
    %583 = vrot.lane.b32.xlu0 %v438, 32
    %v584 = vpop.permute.xlu0 %583
    %585 = vrot.lane.b32.xlu0 %v455, 32
    %v586 = vpop.permute.xlu0 %585
    %587 = vrot.lane.b32.xlu0 %v439, 32
    %v588 = vpop.permute.xlu0 %587
    %589 = vrot.lane.b32.xlu0 %v456, 32
    %v590 = vpop.permute.xlu0 %589
    %591 = vrot.lane.b32.xlu0 %v440, 32
    %v592 = vpop.permute.xlu0 %591
    %593 = vrot.lane.b32.xlu0 %v457, 32
    %v594 = vpop.permute.xlu0 %593
    %vm595 = vcmp.lt.s32.totalorder %v46, 32
    %v596 = vsel %vm595, %v592, %v594
    %v597 = vsel %vm595, %v590, %v592
    %v598 = vsel %vm595, %v588, %v590
    %v599 = vsel %vm595, %v586, %v588
    %v600 = vsel %vm595, %v584, %v586
    %v601 = vsel %vm595, %v582, %v584
    %v602 = vsel %vm595, %v580, %v582
    %v603 = vsel %vm595, %v578, %v580
    %v604 = vsel %vm595, %v576, %v578
    %v605 = vsel %vm595, %v574, %v576
    %v606 = vsel %vm595, %v572, %v574
    %v607 = vsel %vm595, %v570, %v572
    %v608 = vsel %vm595, %v568, %v570
    %v609 = vsel %vm595, %v566, %v568
    %v610 = vsel %vm595, %v564, %v566
    %v611 = vsel %vm595, %v594, %v564
    %v612 = vsel %vm110, 1, 0
    %v613 = vsel %vm111, 1, 0
    %v614 = vsel %vm112, 1, 0
    %v615 = vsel %vm113, 1, 0
    %v616 = vsel %vm114, 1, 0
    %v617 = vsel %vm115, 1, 0
    %v618 = vsel %vm116, 1, 0
    %v619 = vsel %vm117, 1, 0
    %v620 = vsel %vm118, 1, 0
    %v621 = vsel %vm119, 1, 0
    %v622 = vsel %vm120, 1, 0
    %v623 = vsel %vm121, 1, 0
    %v624 = vsel %vm122, 1, 0
    %v625 = vsel %vm123, 1, 0
    %v626 = vsel %vm124, 1, 0
    %v627 = vsel %vm125, 1, 0
    %vm628 = vcmp.eq.s32.totalorder %v612, 1
    %vm629 = vcmp.eq.s32.totalorder %v613, 1
    %vm630 = vcmp.eq.s32.totalorder %v614, 1
    %vm631 = vcmp.eq.s32.totalorder %v615, 1
    %vm632 = vcmp.eq.s32.totalorder %v616, 1
    %vm633 = vcmp.eq.s32.totalorder %v617, 1
    %vm634 = vcmp.eq.s32.totalorder %v618, 1
    %vm635 = vcmp.eq.s32.totalorder %v619, 1
    %vm636 = vcmp.eq.s32.totalorder %v620, 1
    %vm637 = vcmp.eq.s32.totalorder %v621, 1
    %vm638 = vcmp.eq.s32.totalorder %v622, 1
    %vm639 = vcmp.eq.s32.totalorder %v623, 1
    %vm640 = vcmp.eq.s32.totalorder %v624, 1
    %vm641 = vcmp.eq.s32.totalorder %v625, 1
    %vm642 = vcmp.eq.s32.totalorder %v626, 1
    %vm643 = vcmp.eq.s32.totalorder %v627, 1
    %v644 = vsel %vm628, %v611, 0.0
    %v645 = vsel %vm629, %v610, 0.0
    %v646 = vsel %vm630, %v609, 0.0
    %v647 = vsel %vm631, %v608, 0.0
    %v648 = vsel %vm632, %v607, 0.0
    %v649 = vsel %vm633, %v606, 0.0
    %v650 = vsel %vm634, %v605, 0.0
    %v651 = vsel %vm635, %v604, 0.0
    %v652 = vsel %vm636, %v603, 0.0
    %v653 = vsel %vm637, %v602, 0.0
    %v654 = vsel %vm638, %v601, 0.0
    %v655 = vsel %vm639, %v600, 0.0
    %v656 = vsel %vm640, %v599, 0.0
    %v657 = vsel %vm641, %v598, 0.0
    %v658 = vsel %vm642, %v597, 0.0
    %v659 = vsel %vm643, %v596, 0.0
    %660 = vrot.lane.b32.xlu0 %v433, 31
    %v661 = vpop.permute.xlu0 %660
    %662 = vrot.lane.b32.xlu0 %v450, 31
    %v663 = vpop.permute.xlu0 %662
    %664 = vrot.lane.b32.xlu0 %v434, 31
    %v665 = vpop.permute.xlu0 %664
    %666 = vrot.lane.b32.xlu0 %v451, 31
    %v667 = vpop.permute.xlu0 %666
    %668 = vrot.lane.b32.xlu0 %v435, 31
    %v669 = vpop.permute.xlu0 %668
    %670 = vrot.lane.b32.xlu0 %v452, 31
    %v671 = vpop.permute.xlu0 %670
    %672 = vrot.lane.b32.xlu0 %v436, 31
    %v673 = vpop.permute.xlu0 %672
    %674 = vrot.lane.b32.xlu0 %v453, 31
    %v675 = vpop.permute.xlu0 %674
    %676 = vrot.lane.b32.xlu0 %v437, 31
    %v677 = vpop.permute.xlu0 %676
    %678 = vrot.lane.b32.xlu0 %v454, 31
    %v679 = vpop.permute.xlu0 %678
    %680 = vrot.lane.b32.xlu0 %v438, 31
    %v681 = vpop.permute.xlu0 %680
    %682 = vrot.lane.b32.xlu0 %v455, 31
    %v683 = vpop.permute.xlu0 %682
    %684 = vrot.lane.b32.xlu0 %v439, 31
    %v685 = vpop.permute.xlu0 %684
    %686 = vrot.lane.b32.xlu0 %v456, 31
    %v687 = vpop.permute.xlu0 %686
    %688 = vrot.lane.b32.xlu0 %v440, 31
    %v689 = vpop.permute.xlu0 %688
    %690 = vrot.lane.b32.xlu0 %v457, 31
    %v691 = vpop.permute.xlu0 %690
    %vm692 = vcmp.lt.s32.totalorder %v46, 31
    %v693 = vsel %vm692, %v689, %v691
    %v694 = vsel %vm692, %v687, %v689
    %v695 = vsel %vm692, %v685, %v687
    %v696 = vsel %vm692, %v683, %v685
    %v697 = vsel %vm692, %v681, %v683
    %v698 = vsel %vm692, %v679, %v681
    %v699 = vsel %vm692, %v677, %v679
    %v700 = vsel %vm692, %v675, %v677
    %v701 = vsel %vm692, %v673, %v675
    %v702 = vsel %vm692, %v671, %v673
    %v703 = vsel %vm692, %v669, %v671
    %v704 = vsel %vm692, %v667, %v669
    %v705 = vsel %vm692, %v665, %v667
    %v706 = vsel %vm692, %v663, %v665
    %v707 = vsel %vm692, %v661, %v663
    %v708 = vsel %vm692, %v691, %v661
    %v709 = vsel %vm190, 1, 0
    %v710 = vsel %vm191, 1, 0
    %v711 = vsel %vm192, 1, 0
    %v712 = vsel %vm193, 1, 0
    %v713 = vsel %vm194, 1, 0
    %v714 = vsel %vm195, 1, 0
    %v715 = vsel %vm196, 1, 0
    %v716 = vsel %vm197, 1, 0
    %v717 = vsel %vm198, 1, 0
    %v718 = vsel %vm199, 1, 0
    %v719 = vsel %vm200, 1, 0
    %v720 = vsel %vm201, 1, 0
    %v721 = vsel %vm202, 1, 0
    %v722 = vsel %vm203, 1, 0
    %v723 = vsel %vm204, 1, 0
    %v724 = vsel %vm205, 1, 0
    %vm725 = vcmp.eq.s32.totalorder %v709, 1
    %vm726 = vcmp.eq.s32.totalorder %v710, 1
    %vm727 = vcmp.eq.s32.totalorder %v711, 1
    %vm728 = vcmp.eq.s32.totalorder %v712, 1
    %vm729 = vcmp.eq.s32.totalorder %v713, 1
    %vm730 = vcmp.eq.s32.totalorder %v714, 1
    %vm731 = vcmp.eq.s32.totalorder %v715, 1
    %vm732 = vcmp.eq.s32.totalorder %v716, 1
    %vm733 = vcmp.eq.s32.totalorder %v717, 1
    %vm734 = vcmp.eq.s32.totalorder %v718, 1
    %vm735 = vcmp.eq.s32.totalorder %v719, 1
    %vm736 = vcmp.eq.s32.totalorder %v720, 1
    %vm737 = vcmp.eq.s32.totalorder %v721, 1
    %vm738 = vcmp.eq.s32.totalorder %v722, 1
    %vm739 = vcmp.eq.s32.totalorder %v723, 1
    %vm740 = vcmp.eq.s32.totalorder %v724, 1
    %v741 = vsel %vm725, %v708, 0.0
    %v742 = vsel %vm726, %v707, 0.0
    %v743 = vsel %vm727, %v706, 0.0
    %v744 = vsel %vm728, %v705, 0.0
    %v745 = vsel %vm729, %v704, 0.0
    %v746 = vsel %vm730, %v703, 0.0
    %v747 = vsel %vm731, %v702, 0.0
    %v748 = vsel %vm732, %v701, 0.0
    %v749 = vsel %vm733, %v700, 0.0
    %v750 = vsel %vm734, %v699, 0.0
    %v751 = vsel %vm735, %v698, 0.0
    %v752 = vsel %vm736, %v697, 0.0
    %v753 = vsel %vm737, %v696, 0.0
    %v754 = vsel %vm738, %v695, 0.0
    %v755 = vsel %vm739, %v694, 0.0
    %v756 = vsel %vm740, %v693, 0.0
    %757 = vrot.lane.b32.xlu0 %v433, 1
    %v758 = vpop.permute.xlu0 %757
    %759 = vrot.lane.b32.xlu0 %v450, 1
    %v760 = vpop.permute.xlu0 %759
    %761 = vrot.lane.b32.xlu0 %v434, 1
    %v762 = vpop.permute.xlu0 %761
    %763 = vrot.lane.b32.xlu0 %v451, 1
    %v764 = vpop.permute.xlu0 %763
    %765 = vrot.lane.b32.xlu0 %v435, 1
    %v766 = vpop.permute.xlu0 %765
    %767 = vrot.lane.b32.xlu0 %v452, 1
    %v768 = vpop.permute.xlu0 %767
    %769 = vrot.lane.b32.xlu0 %v436, 1
    %v770 = vpop.permute.xlu0 %769
    %771 = vrot.lane.b32.xlu0 %v453, 1
    %v772 = vpop.permute.xlu0 %771
    %773 = vrot.lane.b32.xlu0 %v437, 1
    %v774 = vpop.permute.xlu0 %773
    %775 = vrot.lane.b32.xlu0 %v454, 1
    %v776 = vpop.permute.xlu0 %775
    %777 = vrot.lane.b32.xlu0 %v438, 1
    %v778 = vpop.permute.xlu0 %777
    %779 = vrot.lane.b32.xlu0 %v455, 1
    %v780 = vpop.permute.xlu0 %779
    %781 = vrot.lane.b32.xlu0 %v439, 1
    %v782 = vpop.permute.xlu0 %781
    %783 = vrot.lane.b32.xlu0 %v456, 1
    %v784 = vpop.permute.xlu0 %783
    %785 = vrot.lane.b32.xlu0 %v440, 1
    %v786 = vpop.permute.xlu0 %785
    %787 = vrot.lane.b32.xlu0 %v457, 1
    %v788 = vpop.permute.xlu0 %787
    %vm789 = vcmp.lt.s32.totalorder %v46, 1
    %v790 = vsel %vm789, %v786, %v788
    %v791 = vsel %vm789, %v784, %v786
    %v792 = vsel %vm789, %v782, %v784
    %v793 = vsel %vm789, %v780, %v782
    %v794 = vsel %vm789, %v778, %v780
    %v795 = vsel %vm789, %v776, %v778
    %v796 = vsel %vm789, %v774, %v776
    %v797 = vsel %vm789, %v772, %v774
    %v798 = vsel %vm789, %v770, %v772
    %v799 = vsel %vm789, %v768, %v770
    %v800 = vsel %vm789, %v766, %v768
    %v801 = vsel %vm789, %v764, %v766
    %v802 = vsel %vm789, %v762, %v764
    %v803 = vsel %vm789, %v760, %v762
    %v804 = vsel %vm789, %v758, %v760
    %v805 = vsel %vm789, %v788, %v758
    %v806 = vsel %vm142, 1, 0
    %v807 = vsel %vm143, 1, 0
    %v808 = vsel %vm144, 1, 0
    %v809 = vsel %vm145, 1, 0
    %v810 = vsel %vm146, 1, 0
    %v811 = vsel %vm147, 1, 0
    %v812 = vsel %vm148, 1, 0
    %v813 = vsel %vm149, 1, 0
    %v814 = vsel %vm150, 1, 0
    %v815 = vsel %vm151, 1, 0
    %v816 = vsel %vm152, 1, 0
    %v817 = vsel %vm153, 1, 0
    %v818 = vsel %vm154, 1, 0
    %v819 = vsel %vm155, 1, 0
    %v820 = vsel %vm156, 1, 0
    %v821 = vsel %vm157, 1, 0
    %vm822 = vcmp.eq.s32.totalorder %v806, 1
    %vm823 = vcmp.eq.s32.totalorder %v807, 1
    %vm824 = vcmp.eq.s32.totalorder %v808, 1
    %vm825 = vcmp.eq.s32.totalorder %v809, 1
    %vm826 = vcmp.eq.s32.totalorder %v810, 1
    %vm827 = vcmp.eq.s32.totalorder %v811, 1
    %vm828 = vcmp.eq.s32.totalorder %v812, 1
    %vm829 = vcmp.eq.s32.totalorder %v813, 1
    %vm830 = vcmp.eq.s32.totalorder %v814, 1
    %vm831 = vcmp.eq.s32.totalorder %v815, 1
    %vm832 = vcmp.eq.s32.totalorder %v816, 1
    %vm833 = vcmp.eq.s32.totalorder %v817, 1
    %vm834 = vcmp.eq.s32.totalorder %v818, 1
    %vm835 = vcmp.eq.s32.totalorder %v819, 1
    %vm836 = vcmp.eq.s32.totalorder %v820, 1
    %vm837 = vcmp.eq.s32.totalorder %v821, 1
    %v838 = vsel %vm822, %v805, 0.0
    %v839 = vsel %vm823, %v804, 0.0
    %v840 = vsel %vm824, %v803, 0.0
    %v841 = vsel %vm825, %v802, 0.0
    %v842 = vsel %vm826, %v801, 0.0
    %v843 = vsel %vm827, %v800, 0.0
    %v844 = vsel %vm828, %v799, 0.0
    %v845 = vsel %vm829, %v798, 0.0
    %v846 = vsel %vm830, %v797, 0.0
    %v847 = vsel %vm831, %v796, 0.0
    %v848 = vsel %vm832, %v795, 0.0
    %v849 = vsel %vm833, %v794, 0.0
    %v850 = vsel %vm834, %v793, 0.0
    %v851 = vsel %vm835, %v792, 0.0
    %v852 = vsel %vm836, %v791, 0.0
    %v853 = vsel %vm837, %v790, 0.0
    %854 = vrot.lane.b32.xlu0 %v433, 127
    %v855 = vpop.permute.xlu0 %854
    %856 = vrot.lane.b32.xlu0 %v450, 127
    %v857 = vpop.permute.xlu0 %856
    %858 = vrot.lane.b32.xlu0 %v434, 127
    %v859 = vpop.permute.xlu0 %858
    %860 = vrot.lane.b32.xlu0 %v451, 127
    %v861 = vpop.permute.xlu0 %860
    %862 = vrot.lane.b32.xlu0 %v435, 127
    %v863 = vpop.permute.xlu0 %862
    %864 = vrot.lane.b32.xlu0 %v452, 127
    %v865 = vpop.permute.xlu0 %864
    %866 = vrot.lane.b32.xlu0 %v436, 127
    %v867 = vpop.permute.xlu0 %866
    %868 = vrot.lane.b32.xlu0 %v453, 127
    %v869 = vpop.permute.xlu0 %868
    %870 = vrot.lane.b32.xlu0 %v437, 127
    %v871 = vpop.permute.xlu0 %870
    %872 = vrot.lane.b32.xlu0 %v454, 127
    %v873 = vpop.permute.xlu0 %872
    %874 = vrot.lane.b32.xlu0 %v438, 127
    %v875 = vpop.permute.xlu0 %874
    %876 = vrot.lane.b32.xlu0 %v455, 127
    %v877 = vpop.permute.xlu0 %876
    %878 = vrot.lane.b32.xlu0 %v439, 127
    %v879 = vpop.permute.xlu0 %878
    %880 = vrot.lane.b32.xlu0 %v456, 127
    %v881 = vpop.permute.xlu0 %880
    %882 = vrot.lane.b32.xlu0 %v440, 127
    %v883 = vpop.permute.xlu0 %882
    %884 = vrot.lane.b32.xlu0 %v457, 127
    %v885 = vpop.permute.xlu0 %884
    %vm886 = vcmp.lt.s32.totalorder %v46, 127
    %v887 = vsel %vm886, %v883, %v885
    %v888 = vsel %vm886, %v881, %v883
    %v889 = vsel %vm886, %v879, %v881
    %v890 = vsel %vm886, %v877, %v879
    %v891 = vsel %vm886, %v875, %v877
    %v892 = vsel %vm886, %v873, %v875
    %v893 = vsel %vm886, %v871, %v873
    %v894 = vsel %vm886, %v869, %v871
    %v895 = vsel %vm886, %v867, %v869
    %v896 = vsel %vm886, %v865, %v867
    %v897 = vsel %vm886, %v863, %v865
    %v898 = vsel %vm886, %v861, %v863
    %v899 = vsel %vm886, %v859, %v861
    %v900 = vsel %vm886, %v857, %v859
    %v901 = vsel %vm886, %v855, %v857
    %v902 = vsel %vm886, %v885, %v855
    %v903 = vsel %vm158, 1, 0
    %v904 = vsel %vm159, 1, 0
    %v905 = vsel %vm160, 1, 0
    %v906 = vsel %vm161, 1, 0
    %v907 = vsel %vm162, 1, 0
    %v908 = vsel %vm163, 1, 0
    %v909 = vsel %vm164, 1, 0
    %v910 = vsel %vm165, 1, 0
    %v911 = vsel %vm166, 1, 0
    %v912 = vsel %vm167, 1, 0
    %v913 = vsel %vm168, 1, 0
    %v914 = vsel %vm169, 1, 0
    %v915 = vsel %vm170, 1, 0
    %v916 = vsel %vm171, 1, 0
    %v917 = vsel %vm172, 1, 0
    %v918 = vsel %vm173, 1, 0
    %vm919 = vcmp.eq.s32.totalorder %v903, 1
    %vm920 = vcmp.eq.s32.totalorder %v904, 1
    %vm921 = vcmp.eq.s32.totalorder %v905, 1
    %vm922 = vcmp.eq.s32.totalorder %v906, 1
    %vm923 = vcmp.eq.s32.totalorder %v907, 1
    %vm924 = vcmp.eq.s32.totalorder %v908, 1
    %vm925 = vcmp.eq.s32.totalorder %v909, 1
    %vm926 = vcmp.eq.s32.totalorder %v910, 1
    %vm927 = vcmp.eq.s32.totalorder %v911, 1
    %vm928 = vcmp.eq.s32.totalorder %v912, 1
    %vm929 = vcmp.eq.s32.totalorder %v913, 1
    %vm930 = vcmp.eq.s32.totalorder %v914, 1
    %vm931 = vcmp.eq.s32.totalorder %v915, 1
    %vm932 = vcmp.eq.s32.totalorder %v916, 1
    %vm933 = vcmp.eq.s32.totalorder %v917, 1
    %vm934 = vcmp.eq.s32.totalorder %v918, 1
    %v935 = vsel %vm919, %v901, 0.0
    %v936 = vsel %vm920, %v900, 0.0
    %v937 = vsel %vm921, %v899, 0.0
    %v938 = vsel %vm922, %v898, 0.0
    %v939 = vsel %vm923, %v897, 0.0
    %v940 = vsel %vm924, %v896, 0.0
    %v941 = vsel %vm925, %v895, 0.0
    %v942 = vsel %vm926, %v894, 0.0
    %v943 = vsel %vm927, %v893, 0.0
    %v944 = vsel %vm928, %v892, 0.0
    %v945 = vsel %vm929, %v891, 0.0
    %v946 = vsel %vm930, %v890, 0.0
    %v947 = vsel %vm931, %v889, 0.0
    %v948 = vsel %vm932, %v888, 0.0
    %v949 = vsel %vm933, %v887, 0.0
    %v950 = vsel %vm934, %v902, 0.0
    %951 = vrot.lane.b32.xlu0 %v433, 97
    %v952 = vpop.permute.xlu0 %951
    %953 = vrot.lane.b32.xlu0 %v450, 97
    %v954 = vpop.permute.xlu0 %953
    %955 = vrot.lane.b32.xlu0 %v434, 97
    %v956 = vpop.permute.xlu0 %955
    %957 = vrot.lane.b32.xlu0 %v451, 97
    %v958 = vpop.permute.xlu0 %957
    %959 = vrot.lane.b32.xlu0 %v435, 97
    %v960 = vpop.permute.xlu0 %959
    %961 = vrot.lane.b32.xlu0 %v452, 97
    %v962 = vpop.permute.xlu0 %961
    %963 = vrot.lane.b32.xlu0 %v436, 97
    %v964 = vpop.permute.xlu0 %963
    %965 = vrot.lane.b32.xlu0 %v453, 97
    %v966 = vpop.permute.xlu0 %965
    %967 = vrot.lane.b32.xlu0 %v437, 97
    %v968 = vpop.permute.xlu0 %967
    %969 = vrot.lane.b32.xlu0 %v454, 97
    %v970 = vpop.permute.xlu0 %969
    %971 = vrot.lane.b32.xlu0 %v438, 97
    %v972 = vpop.permute.xlu0 %971
    %973 = vrot.lane.b32.xlu0 %v455, 97
    %v974 = vpop.permute.xlu0 %973
    %975 = vrot.lane.b32.xlu0 %v439, 97
    %v976 = vpop.permute.xlu0 %975
    %977 = vrot.lane.b32.xlu0 %v456, 97
    %v978 = vpop.permute.xlu0 %977
    %979 = vrot.lane.b32.xlu0 %v440, 97
    %v980 = vpop.permute.xlu0 %979
    %981 = vrot.lane.b32.xlu0 %v457, 97
    %v982 = vpop.permute.xlu0 %981
    %vm983 = vcmp.lt.s32.totalorder %v46, 97
    %v984 = vsel %vm983, %v980, %v982
    %v985 = vsel %vm983, %v978, %v980
    %v986 = vsel %vm983, %v976, %v978
    %v987 = vsel %vm983, %v974, %v976
    %v988 = vsel %vm983, %v972, %v974
    %v989 = vsel %vm983, %v970, %v972
    %v990 = vsel %vm983, %v968, %v970
    %v991 = vsel %vm983, %v966, %v968
    %v992 = vsel %vm983, %v964, %v966
    %v993 = vsel %vm983, %v962, %v964
    %v994 = vsel %vm983, %v960, %v962
    %v995 = vsel %vm983, %v958, %v960
    %v996 = vsel %vm983, %v956, %v958
    %v997 = vsel %vm983, %v954, %v956
    %v998 = vsel %vm983, %v952, %v954
    %v999 = vsel %vm983, %v982, %v952
    %v1000 = vsel %vm206, 1, 0
    %v1001 = vsel %vm207, 1, 0
    %v1002 = vsel %vm208, 1, 0
    %v1003 = vsel %vm209, 1, 0
    %v1004 = vsel %vm210, 1, 0
    %v1005 = vsel %vm211, 1, 0
    %v1006 = vsel %vm212, 1, 0
    %v1007 = vsel %vm213, 1, 0
    %v1008 = vsel %vm214, 1, 0
    %v1009 = vsel %vm215, 1, 0
    %v1010 = vsel %vm216, 1, 0
    %v1011 = vsel %vm217, 1, 0
    %v1012 = vsel %vm218, 1, 0
    %v1013 = vsel %vm219, 1, 0
    %v1014 = vsel %vm220, 1, 0
    %v1015 = vsel %vm221, 1, 0
    %vm1016 = vcmp.eq.s32.totalorder %v1000, 1
    %vm1017 = vcmp.eq.s32.totalorder %v1001, 1
    %vm1018 = vcmp.eq.s32.totalorder %v1002, 1
    %vm1019 = vcmp.eq.s32.totalorder %v1003, 1
    %vm1020 = vcmp.eq.s32.totalorder %v1004, 1
    %vm1021 = vcmp.eq.s32.totalorder %v1005, 1
    %vm1022 = vcmp.eq.s32.totalorder %v1006, 1
    %vm1023 = vcmp.eq.s32.totalorder %v1007, 1
    %vm1024 = vcmp.eq.s32.totalorder %v1008, 1
    %vm1025 = vcmp.eq.s32.totalorder %v1009, 1
    %vm1026 = vcmp.eq.s32.totalorder %v1010, 1
    %vm1027 = vcmp.eq.s32.totalorder %v1011, 1
    %vm1028 = vcmp.eq.s32.totalorder %v1012, 1
    %vm1029 = vcmp.eq.s32.totalorder %v1013, 1
    %vm1030 = vcmp.eq.s32.totalorder %v1014, 1
    %vm1031 = vcmp.eq.s32.totalorder %v1015, 1
    %v1032 = vsel %vm1016, %v998, 0.0
    %v1033 = vsel %vm1017, %v997, 0.0
    %v1034 = vsel %vm1018, %v996, 0.0
    %v1035 = vsel %vm1019, %v995, 0.0
    %v1036 = vsel %vm1020, %v994, 0.0
    %v1037 = vsel %vm1021, %v993, 0.0
    %v1038 = vsel %vm1022, %v992, 0.0
    %v1039 = vsel %vm1023, %v991, 0.0
    %v1040 = vsel %vm1024, %v990, 0.0
    %v1041 = vsel %vm1025, %v989, 0.0
    %v1042 = vsel %vm1026, %v988, 0.0
    %v1043 = vsel %vm1027, %v987, 0.0
    %v1044 = vsel %vm1028, %v986, 0.0
    %v1045 = vsel %vm1029, %v985, 0.0
    %v1046 = vsel %vm1030, %v984, 0.0
    %v1047 = vsel %vm1031, %v999, 0.0
    %1048 = vrot.lane.b32.xlu0 %v433, 96
    %v1049 = vpop.permute.xlu0 %1048
    %1050 = vrot.lane.b32.xlu0 %v450, 96
    %v1051 = vpop.permute.xlu0 %1050
    %1052 = vrot.lane.b32.xlu0 %v434, 96
    %v1053 = vpop.permute.xlu0 %1052
    %1054 = vrot.lane.b32.xlu0 %v451, 96
    %v1055 = vpop.permute.xlu0 %1054
    %1056 = vrot.lane.b32.xlu0 %v435, 96
    %v1057 = vpop.permute.xlu0 %1056
    %1058 = vrot.lane.b32.xlu0 %v452, 96
    %v1059 = vpop.permute.xlu0 %1058
    %1060 = vrot.lane.b32.xlu0 %v436, 96
    %v1061 = vpop.permute.xlu0 %1060
    %1062 = vrot.lane.b32.xlu0 %v453, 96
    %v1063 = vpop.permute.xlu0 %1062
    %1064 = vrot.lane.b32.xlu0 %v437, 96
    %v1065 = vpop.permute.xlu0 %1064
    %1066 = vrot.lane.b32.xlu0 %v454, 96
    %v1067 = vpop.permute.xlu0 %1066
    %1068 = vrot.lane.b32.xlu0 %v438, 96
    %v1069 = vpop.permute.xlu0 %1068
    %1070 = vrot.lane.b32.xlu0 %v455, 96
    %v1071 = vpop.permute.xlu0 %1070
    %1072 = vrot.lane.b32.xlu0 %v439, 96
    %v1073 = vpop.permute.xlu0 %1072
    %1074 = vrot.lane.b32.xlu0 %v456, 96
    %v1075 = vpop.permute.xlu0 %1074
    %1076 = vrot.lane.b32.xlu0 %v440, 96
    %v1077 = vpop.permute.xlu0 %1076
    %1078 = vrot.lane.b32.xlu0 %v457, 96
    %v1079 = vpop.permute.xlu0 %1078
    %vm1080 = vcmp.lt.s32.totalorder %v46, 96
    %v1081 = vsel %vm1080, %v1077, %v1079
    %v1082 = vsel %vm1080, %v1075, %v1077
    %v1083 = vsel %vm1080, %v1073, %v1075
    %v1084 = vsel %vm1080, %v1071, %v1073
    %v1085 = vsel %vm1080, %v1069, %v1071
    %v1086 = vsel %vm1080, %v1067, %v1069
    %v1087 = vsel %vm1080, %v1065, %v1067
    %v1088 = vsel %vm1080, %v1063, %v1065
    %v1089 = vsel %vm1080, %v1061, %v1063
    %v1090 = vsel %vm1080, %v1059, %v1061
    %v1091 = vsel %vm1080, %v1057, %v1059
    %v1092 = vsel %vm1080, %v1055, %v1057
    %v1093 = vsel %vm1080, %v1053, %v1055
    %v1094 = vsel %vm1080, %v1051, %v1053
    %v1095 = vsel %vm1080, %v1049, %v1051
    %v1096 = vsel %vm1080, %v1079, %v1049
    %v1097 = vsel %vm126, 1, 0
    %v1098 = vsel %vm127, 1, 0
    %v1099 = vsel %vm128, 1, 0
    %v1100 = vsel %vm129, 1, 0
    %v1101 = vsel %vm130, 1, 0
    %v1102 = vsel %vm131, 1, 0
    %v1103 = vsel %vm132, 1, 0
    %v1104 = vsel %vm133, 1, 0
    %v1105 = vsel %vm134, 1, 0
    %v1106 = vsel %vm135, 1, 0
    %v1107 = vsel %vm136, 1, 0
    %v1108 = vsel %vm137, 1, 0
    %v1109 = vsel %vm138, 1, 0
    %v1110 = vsel %vm139, 1, 0
    %v1111 = vsel %vm140, 1, 0
    %v1112 = vsel %vm141, 1, 0
    %vm1113 = vcmp.eq.s32.totalorder %v1097, 1
    %vm1114 = vcmp.eq.s32.totalorder %v1098, 1
    %vm1115 = vcmp.eq.s32.totalorder %v1099, 1
    %vm1116 = vcmp.eq.s32.totalorder %v1100, 1
    %vm1117 = vcmp.eq.s32.totalorder %v1101, 1
    %vm1118 = vcmp.eq.s32.totalorder %v1102, 1
    %vm1119 = vcmp.eq.s32.totalorder %v1103, 1
    %vm1120 = vcmp.eq.s32.totalorder %v1104, 1
    %vm1121 = vcmp.eq.s32.totalorder %v1105, 1
    %vm1122 = vcmp.eq.s32.totalorder %v1106, 1
    %vm1123 = vcmp.eq.s32.totalorder %v1107, 1
    %vm1124 = vcmp.eq.s32.totalorder %v1108, 1
    %vm1125 = vcmp.eq.s32.totalorder %v1109, 1
    %vm1126 = vcmp.eq.s32.totalorder %v1110, 1
    %vm1127 = vcmp.eq.s32.totalorder %v1111, 1
    %vm1128 = vcmp.eq.s32.totalorder %v1112, 1
    %v1129 = vsel %vm1113, %v1095, 0.0
    %v1130 = vsel %vm1114, %v1094, 0.0
    %v1131 = vsel %vm1115, %v1093, 0.0
    %v1132 = vsel %vm1116, %v1092, 0.0
    %v1133 = vsel %vm1117, %v1091, 0.0
    %v1134 = vsel %vm1118, %v1090, 0.0
    %v1135 = vsel %vm1119, %v1089, 0.0
    %v1136 = vsel %vm1120, %v1088, 0.0
    %v1137 = vsel %vm1121, %v1087, 0.0
    %v1138 = vsel %vm1122, %v1086, 0.0
    %v1139 = vsel %vm1123, %v1085, 0.0
    %v1140 = vsel %vm1124, %v1084, 0.0
    %v1141 = vsel %vm1125, %v1083, 0.0
    %v1142 = vsel %vm1126, %v1082, 0.0
    %v1143 = vsel %vm1127, %v1081, 0.0
    %v1144 = vsel %vm1128, %v1096, 0.0
    %1145 = vrot.lane.b32.xlu0 %v433, 95
    %v1146 = vpop.permute.xlu0 %1145
    %1147 = vrot.lane.b32.xlu0 %v450, 95
    %v1148 = vpop.permute.xlu0 %1147
    %1149 = vrot.lane.b32.xlu0 %v434, 95
    %v1150 = vpop.permute.xlu0 %1149
    %1151 = vrot.lane.b32.xlu0 %v451, 95
    %v1152 = vpop.permute.xlu0 %1151
    %1153 = vrot.lane.b32.xlu0 %v435, 95
    %v1154 = vpop.permute.xlu0 %1153
    %1155 = vrot.lane.b32.xlu0 %v452, 95
    %v1156 = vpop.permute.xlu0 %1155
    %1157 = vrot.lane.b32.xlu0 %v436, 95
    %v1158 = vpop.permute.xlu0 %1157
    %1159 = vrot.lane.b32.xlu0 %v453, 95
    %v1160 = vpop.permute.xlu0 %1159
    %1161 = vrot.lane.b32.xlu0 %v437, 95
    %v1162 = vpop.permute.xlu0 %1161
    %1163 = vrot.lane.b32.xlu0 %v454, 95
    %v1164 = vpop.permute.xlu0 %1163
    %1165 = vrot.lane.b32.xlu0 %v438, 95
    %v1166 = vpop.permute.xlu0 %1165
    %1167 = vrot.lane.b32.xlu0 %v455, 95
    %v1168 = vpop.permute.xlu0 %1167
    %1169 = vrot.lane.b32.xlu0 %v439, 95
    %v1170 = vpop.permute.xlu0 %1169
    %1171 = vrot.lane.b32.xlu0 %v456, 95
    %v1172 = vpop.permute.xlu0 %1171
    %1173 = vrot.lane.b32.xlu0 %v440, 95
    %v1174 = vpop.permute.xlu0 %1173
    %1175 = vrot.lane.b32.xlu0 %v457, 95
    %v1176 = vpop.permute.xlu0 %1175
    %vm1177 = vcmp.lt.s32.totalorder %v46, 95
    %v1178 = vsel %vm1177, %v1174, %v1176
    %v1179 = vsel %vm1177, %v1172, %v1174
    %v1180 = vsel %vm1177, %v1170, %v1172
    %v1181 = vsel %vm1177, %v1168, %v1170
    %v1182 = vsel %vm1177, %v1166, %v1168
    %v1183 = vsel %vm1177, %v1164, %v1166
    %v1184 = vsel %vm1177, %v1162, %v1164
    %v1185 = vsel %vm1177, %v1160, %v1162
    %v1186 = vsel %vm1177, %v1158, %v1160
    %v1187 = vsel %vm1177, %v1156, %v1158
    %v1188 = vsel %vm1177, %v1154, %v1156
    %v1189 = vsel %vm1177, %v1152, %v1154
    %v1190 = vsel %vm1177, %v1150, %v1152
    %v1191 = vsel %vm1177, %v1148, %v1150
    %v1192 = vsel %vm1177, %v1146, %v1148
    %v1193 = vsel %vm1177, %v1176, %v1146
    %v1194 = vsel %vm222, 1, 0
    %v1195 = vsel %vm223, 1, 0
    %v1196 = vsel %vm224, 1, 0
    %v1197 = vsel %vm225, 1, 0
    %v1198 = vsel %vm226, 1, 0
    %v1199 = vsel %vm227, 1, 0
    %v1200 = vsel %vm228, 1, 0
    %v1201 = vsel %vm229, 1, 0
    %v1202 = vsel %vm230, 1, 0
    %v1203 = vsel %vm231, 1, 0
    %v1204 = vsel %vm232, 1, 0
    %v1205 = vsel %vm233, 1, 0
    %v1206 = vsel %vm234, 1, 0
    %v1207 = vsel %vm235, 1, 0
    %v1208 = vsel %vm236, 1, 0
    %v1209 = vsel %vm237, 1, 0
    %vm1210 = vcmp.eq.s32.totalorder %v1194, 1
    %vm1211 = vcmp.eq.s32.totalorder %v1195, 1
    %vm1212 = vcmp.eq.s32.totalorder %v1196, 1
    %vm1213 = vcmp.eq.s32.totalorder %v1197, 1
    %vm1214 = vcmp.eq.s32.totalorder %v1198, 1
    %vm1215 = vcmp.eq.s32.totalorder %v1199, 1
    %vm1216 = vcmp.eq.s32.totalorder %v1200, 1
    %vm1217 = vcmp.eq.s32.totalorder %v1201, 1
    %vm1218 = vcmp.eq.s32.totalorder %v1202, 1
    %vm1219 = vcmp.eq.s32.totalorder %v1203, 1
    %vm1220 = vcmp.eq.s32.totalorder %v1204, 1
    %vm1221 = vcmp.eq.s32.totalorder %v1205, 1
    %vm1222 = vcmp.eq.s32.totalorder %v1206, 1
    %vm1223 = vcmp.eq.s32.totalorder %v1207, 1
    %vm1224 = vcmp.eq.s32.totalorder %v1208, 1
    %vm1225 = vcmp.eq.s32.totalorder %v1209, 1
    %v1226 = vsel %vm1210, %v1192, 0.0
    %v1227 = vsel %vm1211, %v1191, 0.0
    %v1228 = vsel %vm1212, %v1190, 0.0
    %v1229 = vsel %vm1213, %v1189, 0.0
    %v1230 = vsel %vm1214, %v1188, 0.0
    %v1231 = vsel %vm1215, %v1187, 0.0
    %v1232 = vsel %vm1216, %v1186, 0.0
    %v1233 = vsel %vm1217, %v1185, 0.0
    %v1234 = vsel %vm1218, %v1184, 0.0
    %v1235 = vsel %vm1219, %v1183, 0.0
    %v1236 = vsel %vm1220, %v1182, 0.0
    %v1237 = vsel %vm1221, %v1181, 0.0
    %v1238 = vsel %vm1222, %v1180, 0.0
    %v1239 = vsel %vm1223, %v1179, 0.0
    %v1240 = vsel %vm1224, %v1178, 0.0
    %v1241 = vsel %vm1225, %v1193, 0.0
    %v1258 = vrot.slane %v644, 4
    %v1259 = vrot.slane %v645, 4
    %v1260 = vrot.slane %v646, 4
    %v1261 = vrot.slane %v647, 4
    %v1262 = vrot.slane %v648, 4
    %v1263 = vrot.slane %v649, 4
    %v1264 = vrot.slane %v650, 4
    %v1265 = vrot.slane %v651, 4
    %v1266 = vrot.slane %v652, 4
    %v1267 = vrot.slane %v653, 4
    %v1268 = vrot.slane %v654, 4
    %v1269 = vrot.slane %v655, 4
    %v1270 = vrot.slane %v656, 4
    %v1271 = vrot.slane %v657, 4
    %v1272 = vrot.slane %v658, 4
    %v1273 = vrot.slane %v659, 4
    %v1306 = vrot.slane %v838, 4
    %v1307 = vrot.slane %v839, 4
    %v1308 = vrot.slane %v840, 4
    %v1309 = vrot.slane %v841, 4
    %v1310 = vrot.slane %v842, 4
    %v1311 = vrot.slane %v843, 4
    %v1312 = vrot.slane %v844, 4
    %v1313 = vrot.slane %v845, 4
    %v1314 = vrot.slane %v846, 4
    %v1315 = vrot.slane %v847, 4
    %v1316 = vrot.slane %v848, 4
    %v1317 = vrot.slane %v849, 4
    %v1318 = vrot.slane %v850, 4
    %v1319 = vrot.slane %v851, 4
    %v1320 = vrot.slane %v852, 4
    %v1321 = vrot.slane %v853, 4
    %v1354 = vrot.slane %v935, 4
    %v1355 = vrot.slane %v936, 4
    %v1356 = vrot.slane %v937, 4
    %v1357 = vrot.slane %v938, 4
    %v1358 = vrot.slane %v939, 4
    %v1359 = vrot.slane %v940, 4
    %v1360 = vrot.slane %v941, 4
    %v1361 = vrot.slane %v942, 4
    %v1362 = vrot.slane %v943, 4
    %v1363 = vrot.slane %v944, 4
    %v1364 = vrot.slane %v945, 4
    %v1365 = vrot.slane %v946, 4
    %v1366 = vrot.slane %v947, 4
    %v1367 = vrot.slane %v948, 4
    %v1368 = vrot.slane %v949, 4
    %v1369 = vrot.slane %v950, 4
    %v1402 = vrot.slane %v1129, 4
    %v1403 = vrot.slane %v1130, 4
    %v1404 = vrot.slane %v1131, 4
    %v1405 = vrot.slane %v1132, 4
    %v1406 = vrot.slane %v1133, 4
    %v1407 = vrot.slane %v1134, 4
    %v1408 = vrot.slane %v1135, 4
    %v1409 = vrot.slane %v1136, 4
    %v1410 = vrot.slane %v1137, 4
    %v1411 = vrot.slane %v1138, 4
    %v1412 = vrot.slane %v1139, 4
    %v1413 = vrot.slane %v1140, 4
    %v1414 = vrot.slane %v1141, 4
    %v1415 = vrot.slane %v1142, 4
    %v1416 = vrot.slane %v1143, 4
    %v1417 = vrot.slane %v1144, 4
    %v1434 = vsel %vm270, %v547, %v1258
    %v1435 = vsel %vm270, %v548, %v1259
    %v1436 = vsel %vm270, %v549, %v1260
    %v1437 = vsel %vm270, %v550, %v1261
    %v1438 = vsel %vm270, %v551, %v1262
    %v1439 = vsel %vm270, %v552, %v1263
    %v1440 = vsel %vm270, %v553, %v1264
    %v1441 = vsel %vm270, %v554, %v1265
    %v1442 = vsel %vm270, %v555, %v1266
    %v1443 = vsel %vm270, %v556, %v1267
    %v1444 = vsel %vm270, %v557, %v1268
    %v1445 = vsel %vm270, %v558, %v1269
    %v1446 = vsel %vm270, %v559, %v1270
    %v1447 = vsel %vm270, %v560, %v1271
    %v1448 = vsel %vm270, %v561, %v1272
    %v1449 = vsel %vm270, %v562, %v1273
    %v1450 = vsel %vm270, %v741, %v1306
    %v1451 = vsel %vm270, %v742, %v1307
    %v1452 = vsel %vm270, %v743, %v1308
    %v1453 = vsel %vm270, %v744, %v1309
    %v1454 = vsel %vm270, %v745, %v1310
    %v1455 = vsel %vm270, %v746, %v1311
    %v1456 = vsel %vm270, %v747, %v1312
    %v1457 = vsel %vm270, %v748, %v1313
    %v1458 = vsel %vm270, %v749, %v1314
    %v1459 = vsel %vm270, %v750, %v1315
    %v1460 = vsel %vm270, %v751, %v1316
    %v1461 = vsel %vm270, %v752, %v1317
    %v1462 = vsel %vm270, %v753, %v1318
    %v1463 = vsel %vm270, %v754, %v1319
    %v1464 = vsel %vm270, %v755, %v1320
    %v1465 = vsel %vm270, %v756, %v1321
    %v1466 = vsel %vm270, %v433, %v1354
    %v1467 = vsel %vm270, %v450, %v1355
    %v1468 = vsel %vm270, %v434, %v1356
    %v1469 = vsel %vm270, %v451, %v1357
    %v1470 = vsel %vm270, %v435, %v1358
    %v1471 = vsel %vm270, %v452, %v1359
    %v1472 = vsel %vm270, %v436, %v1360
    %v1473 = vsel %vm270, %v453, %v1361
    %v1474 = vsel %vm270, %v437, %v1362
    %v1475 = vsel %vm270, %v454, %v1363
    %v1476 = vsel %vm270, %v438, %v1364
    %v1477 = vsel %vm270, %v455, %v1365
    %v1478 = vsel %vm270, %v439, %v1366
    %v1479 = vsel %vm270, %v456, %v1367
    %v1480 = vsel %vm270, %v440, %v1368
    %v1481 = vsel %vm270, %v457, %v1369
    %v1482 = vsel %vm270, %v1032, %v1402
    %v1483 = vsel %vm270, %v1033, %v1403
    %v1484 = vsel %vm270, %v1034, %v1404
    %v1485 = vsel %vm270, %v1035, %v1405
    %v1486 = vsel %vm270, %v1036, %v1406
    %v1487 = vsel %vm270, %v1037, %v1407
    %v1488 = vsel %vm270, %v1038, %v1408
    %v1489 = vsel %vm270, %v1039, %v1409
    %v1490 = vsel %vm270, %v1040, %v1410
    %v1491 = vsel %vm270, %v1041, %v1411
    %v1492 = vsel %vm270, %v1042, %v1412
    %v1493 = vsel %vm270, %v1043, %v1413
    %v1494 = vsel %vm270, %v1044, %v1414
    %v1495 = vsel %vm270, %v1045, %v1415
    %v1496 = vsel %vm270, %v1046, %v1416
    %v1497 = vsel %vm270, %v1047, %v1417
    %v1498 = vld [vmem:[%s4] sm:$0xf]
    %1500 = vset.pattern.permute.xlu0 0
    %1501 = vperm.xlu0 %1500, %v1498
    %v1502 = vpop.permute.xlu0 %1501
    %vm1504 = vcmask 293888
    %v1506 = vsel %vm1504, %v441, 0
    %v1509 = vsel %vm270, %v1226, 0
    %v1512 = vsel %vm270, %v1227, 0
    %v1515 = vsel %vm270, %v1228, 0
    %v1518 = vsel %vm270, %v1229, 0
    %v1521 = vsel %vm270, %v1230, 0
    %v1524 = vsel %vm270, %v1231, 0
    %v1527 = vsel %vm270, %v1232, 0
    %v1530 = vsel %vm270, %v1233, 0
    %v1533 = vsel %vm270, %v1234, 0
    %v1536 = vsel %vm270, %v1235, 0
    %v1539 = vsel %vm270, %v1236, 0
    %v1542 = vsel %vm270, %v1237, 0
    %v1545 = vsel %vm270, %v1238, 0
    %v1548 = vsel %vm270, %v1239, 0
    %v1551 = vsel %vm270, %v1240, 0
    %v1554 = vsel %vm270, %v1241, 0
    %1556 = vmatprep.subr.mxu0 0.0
    %1557 = vmatpush1.msra.mxu0 0.0
    %1558 = vmatprep.subr.mxu0 0.0
    %1559 = vmatpush1.msra.mxu0 0.0
    %1560 = vmatprep.subr.mxu0 0.0
    %1561 = vmatpush1.msra.mxu0 0.0
    %1562 = vmatprep.subr.mxu0 0.0
    %1563 = vmatpush1.msra.mxu0 0.0
    %1564 = vmatprep.subr.mxu0 0.0
    %1565 = vmatpush1.msra.mxu0 0.0
    %1566 = vmatprep.subr.mxu0 0.0
    %1567 = vmatpush1.msra.mxu0 0.0
    %1568 = vmatprep.subr.mxu0 0.0
    %1569 = vmatpush1.msra.mxu0 0.0
    %1570 = vmatprep.subr.mxu0 0.0
    %1571 = vmatpush1.msra.mxu0 0.0
    %1572 = vmatprep.subr.mxu0 0.0
    %1573 = vmatpush1.msra.mxu0 0.0
    %1574 = vmatprep.subr.mxu0 0.0
    %1575 = vmatpush1.msra.mxu0 0.0
    %1576 = vmatprep.subr.mxu0 0.0
    %1577 = vmatpush1.msra.mxu0 0.0
    %1578 = vmatprep.subr.mxu0 %v1512
    %1579 = vmatpush1.msra.mxu0 %v1509
    %1580 = vmatprep.subr.mxu0 %v1483
    %1581 = vmatpush1.msra.mxu0 %v1482
    %1582 = vmatprep.subr.mxu0 %v1467
    %1583 = vmatpush1.msra.mxu0 %v1466
    %1584 = vmatprep.subr.mxu0 %v1451
    %1585 = vmatpush1.msra.mxu0 %v1450
    %1586 = vmatprep.subr.mxu0 %v1435
    %1587 = vmatpush1.msra.mxu0 %v1434
    %1588 = vmatprep.subr.mxu0 0.0
    %1589 = vmatpush2.msra.mxu0 0.0
    %1590 = vmatprep.subr.mxu0 0.0
    %1591 = vmatpush2.msra.mxu0 0.0
    %1592 = vmatprep.subr.mxu0 0.0
    %1593 = vmatpush2.msra.mxu0 0.0
    %1594 = vmatprep.subr.mxu0 0.0
    %1595 = vmatpush2.msra.mxu0 0.0
    %1596 = vmatprep.subr.mxu0 0.0
    %1597 = vmatpush2.msra.mxu0 0.0
    %1598 = vmatprep.subr.mxu0 0.0
    %1599 = vmatpush2.msra.mxu0 0.0
    %1600 = vmatprep.subr.mxu0 0.0
    %1601 = vmatpush2.msra.mxu0 0.0
    %1602 = vmatprep.subr.mxu0 0.0
    %1603 = vmatpush2.msra.mxu0 0.0
    %1604 = vmatprep.subr.mxu0 0.0
    %1605 = vmatpush2.msra.mxu0 0.0
    %1606 = vmatprep.subr.mxu0 0.0
    %1607 = vmatpush2.msra.mxu0 0.0
    %1608 = vmatprep.subr.mxu0 0.0
    %1609 = vmatpush2.msra.mxu0 0.0
    %1610 = vmatprep.subr.mxu0 0.0
    %1611 = vmatpush2.msra.mxu0 0.0
    %1612 = vmatprep.subr.mxu0 0.0
    %1613 = vmatpush2.msra.mxu0 0.0
    %1614 = vmatprep.subr.mxu0 0.0
    %1615 = vmatpush2.msra.mxu0 0.0
    %1616 = vmatprep.subr.mxu0 0.0
    %1617 = vmatpush2.msra.mxu0 0.0
    %1618 = vmatprep.subr.mxu0 0.0
    %1619 = vmatpush2.msra.mxu0 0.0
    %1620 = vmatprep.mubr.f32.mxu0 0.0
    %1621 = vmatmul.mubr.f32.gmra.mxu0 %v1506
    %v1622 = vpop.f32.mrf.mxu0
    %v1623 = vadd.f32 %v1502, %v1622
    %v1624 = vpop.f32.mrf.mxu0
    %v1625 = vadd.f32 %v1502, %v1624
    %1626 = vdwg.mxu0
    %1627 = vmatprep.subr.mxu0 0.0
    %1628 = vmatpush1.msra.mxu0 0.0
    %1629 = vmatprep.subr.mxu0 0.0
    %1630 = vmatpush1.msra.mxu0 0.0
    %1631 = vmatprep.subr.mxu0 0.0
    %1632 = vmatpush1.msra.mxu0 0.0
    %1633 = vmatprep.subr.mxu0 0.0
    %1634 = vmatpush1.msra.mxu0 0.0
    %1635 = vmatprep.subr.mxu0 0.0
    %1636 = vmatpush1.msra.mxu0 0.0
    %1637 = vmatprep.subr.mxu0 0.0
    %1638 = vmatpush1.msra.mxu0 0.0
    %1639 = vmatprep.subr.mxu0 0.0
    %1640 = vmatpush1.msra.mxu0 0.0
    %1641 = vmatprep.subr.mxu0 0.0
    %1642 = vmatpush1.msra.mxu0 0.0
    %1643 = vmatprep.subr.mxu0 0.0
    %1644 = vmatpush1.msra.mxu0 0.0
    %1645 = vmatprep.subr.mxu0 0.0
    %1646 = vmatpush1.msra.mxu0 0.0
    %1647 = vmatprep.subr.mxu0 0.0
    %1648 = vmatpush1.msra.mxu0 0.0
    %1649 = vmatprep.subr.mxu0 %v1518
    %1650 = vmatpush1.msra.mxu0 %v1515
    %1651 = vmatprep.subr.mxu0 %v1485
    %1652 = vmatpush1.msra.mxu0 %v1484
    %1653 = vmatprep.subr.mxu0 %v1469
    %1654 = vmatpush1.msra.mxu0 %v1468
    %1655 = vmatprep.subr.mxu0 %v1453
    %1656 = vmatpush1.msra.mxu0 %v1452
    %1657 = vmatprep.subr.mxu0 %v1437
    %1658 = vmatpush1.msra.mxu0 %v1436
    %1659 = vmatprep.subr.mxu0 0.0
    %1660 = vmatpush2.msra.mxu0 0.0
    %1661 = vmatprep.subr.mxu0 0.0
    %1662 = vmatpush2.msra.mxu0 0.0
    %1663 = vmatprep.subr.mxu0 0.0
    %1664 = vmatpush2.msra.mxu0 0.0
    %1665 = vmatprep.subr.mxu0 0.0
    %1666 = vmatpush2.msra.mxu0 0.0
    %1667 = vmatprep.subr.mxu0 0.0
    %1668 = vmatpush2.msra.mxu0 0.0
    %1669 = vmatprep.subr.mxu0 0.0
    %1670 = vmatpush2.msra.mxu0 0.0
    %1671 = vmatprep.subr.mxu0 0.0
    %1672 = vmatpush2.msra.mxu0 0.0
    %1673 = vmatprep.subr.mxu0 0.0
    %1674 = vmatpush2.msra.mxu0 0.0
    %1675 = vmatprep.subr.mxu0 0.0
    %1676 = vmatpush2.msra.mxu0 0.0
    %1677 = vmatprep.subr.mxu0 0.0
    %1678 = vmatpush2.msra.mxu0 0.0
    %1679 = vmatprep.subr.mxu0 0.0
    %1680 = vmatpush2.msra.mxu0 0.0
    %1681 = vmatprep.subr.mxu0 0.0
    %1682 = vmatpush2.msra.mxu0 0.0
    %1683 = vmatprep.subr.mxu0 0.0
    %1684 = vmatpush2.msra.mxu0 0.0
    %1685 = vmatprep.subr.mxu0 0.0
    %1686 = vmatpush2.msra.mxu0 0.0
    %1687 = vmatprep.subr.mxu0 0.0
    %1688 = vmatpush2.msra.mxu0 0.0
    %1689 = vmatprep.subr.mxu0 0.0
    %1690 = vmatpush2.msra.mxu0 0.0
    %1691 = vmatprep.mubr.f32.mxu0 0.0
    %1692 = vmatmul.mubr.f32.gmra.mxu0 %v1506
    %v1693 = vpop.f32.mrf.mxu0
    %v1694 = vadd.f32 %v1502, %v1693
    %v1695 = vpop.f32.mrf.mxu0
    %v1696 = vadd.f32 %v1502, %v1695
    %1697 = vdwg.mxu0
    %1698 = vmatprep.subr.mxu0 0.0
    %1699 = vmatpush1.msra.mxu0 0.0
    %1700 = vmatprep.subr.mxu0 0.0
    %1701 = vmatpush1.msra.mxu0 0.0
    %1702 = vmatprep.subr.mxu0 0.0
    %1703 = vmatpush1.msra.mxu0 0.0
    %1704 = vmatprep.subr.mxu0 0.0
    %1705 = vmatpush1.msra.mxu0 0.0
    %1706 = vmatprep.subr.mxu0 0.0
    %1707 = vmatpush1.msra.mxu0 0.0
    %1708 = vmatprep.subr.mxu0 0.0
    %1709 = vmatpush1.msra.mxu0 0.0
    %1710 = vmatprep.subr.mxu0 0.0
    %1711 = vmatpush1.msra.mxu0 0.0
    %1712 = vmatprep.subr.mxu0 0.0
    %1713 = vmatpush1.msra.mxu0 0.0
    %1714 = vmatprep.subr.mxu0 0.0
    %1715 = vmatpush1.msra.mxu0 0.0
    %1716 = vmatprep.subr.mxu0 0.0
    %1717 = vmatpush1.msra.mxu0 0.0
    %1718 = vmatprep.subr.mxu0 0.0
    %1719 = vmatpush1.msra.mxu0 0.0
    %1720 = vmatprep.subr.mxu0 %v1524
    %1721 = vmatpush1.msra.mxu0 %v1521
    %1722 = vmatprep.subr.mxu0 %v1487
    %1723 = vmatpush1.msra.mxu0 %v1486
    %1724 = vmatprep.subr.mxu0 %v1471
    %1725 = vmatpush1.msra.mxu0 %v1470
    %1726 = vmatprep.subr.mxu0 %v1455
    %1727 = vmatpush1.msra.mxu0 %v1454
    %1728 = vmatprep.subr.mxu0 %v1439
    %1729 = vmatpush1.msra.mxu0 %v1438
    %1730 = vmatprep.subr.mxu0 0.0
    %1731 = vmatpush2.msra.mxu0 0.0
    %1732 = vmatprep.subr.mxu0 0.0
    %1733 = vmatpush2.msra.mxu0 0.0
    %1734 = vmatprep.subr.mxu0 0.0
    %1735 = vmatpush2.msra.mxu0 0.0
    %1736 = vmatprep.subr.mxu0 0.0
    %1737 = vmatpush2.msra.mxu0 0.0
    %1738 = vmatprep.subr.mxu0 0.0
    %1739 = vmatpush2.msra.mxu0 0.0
    %1740 = vmatprep.subr.mxu0 0.0
    %1741 = vmatpush2.msra.mxu0 0.0
    %1742 = vmatprep.subr.mxu0 0.0
    %1743 = vmatpush2.msra.mxu0 0.0
    %1744 = vmatprep.subr.mxu0 0.0
    %1745 = vmatpush2.msra.mxu0 0.0
    %1746 = vmatprep.subr.mxu0 0.0
    %1747 = vmatpush2.msra.mxu0 0.0
    %1748 = vmatprep.subr.mxu0 0.0
    %1749 = vmatpush2.msra.mxu0 0.0
    %1750 = vmatprep.subr.mxu0 0.0
    %1751 = vmatpush2.msra.mxu0 0.0
    %1752 = vmatprep.subr.mxu0 0.0
    %1753 = vmatpush2.msra.mxu0 0.0
    %1754 = vmatprep.subr.mxu0 0.0
    %1755 = vmatpush2.msra.mxu0 0.0
    %1756 = vmatprep.subr.mxu0 0.0
    %1757 = vmatpush2.msra.mxu0 0.0
    %1758 = vmatprep.subr.mxu0 0.0
    %1759 = vmatpush2.msra.mxu0 0.0
    %1760 = vmatprep.subr.mxu0 0.0
    %1761 = vmatpush2.msra.mxu0 0.0
    %1762 = vmatprep.mubr.f32.mxu0 0.0
    %1763 = vmatmul.mubr.f32.gmra.mxu0 %v1506
    %v1764 = vpop.f32.mrf.mxu0
    %v1765 = vadd.f32 %v1502, %v1764
    %v1766 = vpop.f32.mrf.mxu0
    %v1767 = vadd.f32 %v1502, %v1766
    %1768 = vdwg.mxu0
    %1769 = vmatprep.subr.mxu0 0.0
    %1770 = vmatpush1.msra.mxu0 0.0
    %1771 = vmatprep.subr.mxu0 0.0
    %1772 = vmatpush1.msra.mxu0 0.0
    %1773 = vmatprep.subr.mxu0 0.0
    %1774 = vmatpush1.msra.mxu0 0.0
    %1775 = vmatprep.subr.mxu0 0.0
    %1776 = vmatpush1.msra.mxu0 0.0
    %1777 = vmatprep.subr.mxu0 0.0
    %1778 = vmatpush1.msra.mxu0 0.0
    %1779 = vmatprep.subr.mxu0 0.0
    %1780 = vmatpush1.msra.mxu0 0.0
    %1781 = vmatprep.subr.mxu0 0.0
    %1782 = vmatpush1.msra.mxu0 0.0
    %1783 = vmatprep.subr.mxu0 0.0
    %1784 = vmatpush1.msra.mxu0 0.0
    %1785 = vmatprep.subr.mxu0 0.0
    %1786 = vmatpush1.msra.mxu0 0.0
    %1787 = vmatprep.subr.mxu0 0.0
    %1788 = vmatpush1.msra.mxu0 0.0
    %1789 = vmatprep.subr.mxu0 0.0
    %1790 = vmatpush1.msra.mxu0 0.0
    %1791 = vmatprep.subr.mxu0 %v1530
    %1792 = vmatpush1.msra.mxu0 %v1527
    %1793 = vmatprep.subr.mxu0 %v1489
    %1794 = vmatpush1.msra.mxu0 %v1488
    %1795 = vmatprep.subr.mxu0 %v1473
    %1796 = vmatpush1.msra.mxu0 %v1472
    %1797 = vmatprep.subr.mxu0 %v1457
    %1798 = vmatpush1.msra.mxu0 %v1456
    %1799 = vmatprep.subr.mxu0 %v1441
    %1800 = vmatpush1.msra.mxu0 %v1440
    %1801 = vmatprep.subr.mxu0 0.0
    %1802 = vmatpush2.msra.mxu0 0.0
    %1803 = vmatprep.subr.mxu0 0.0
    %1804 = vmatpush2.msra.mxu0 0.0
    %1805 = vmatprep.subr.mxu0 0.0
    %1806 = vmatpush2.msra.mxu0 0.0
    %1807 = vmatprep.subr.mxu0 0.0
    %1808 = vmatpush2.msra.mxu0 0.0
    %1809 = vmatprep.subr.mxu0 0.0
    %1810 = vmatpush2.msra.mxu0 0.0
    %1811 = vmatprep.subr.mxu0 0.0
    %1812 = vmatpush2.msra.mxu0 0.0
    %1813 = vmatprep.subr.mxu0 0.0
    %1814 = vmatpush2.msra.mxu0 0.0
    %1815 = vmatprep.subr.mxu0 0.0
    %1816 = vmatpush2.msra.mxu0 0.0
    %1817 = vmatprep.subr.mxu0 0.0
    %1818 = vmatpush2.msra.mxu0 0.0
    %1819 = vmatprep.subr.mxu0 0.0
    %1820 = vmatpush2.msra.mxu0 0.0
    %1821 = vmatprep.subr.mxu0 0.0
    %1822 = vmatpush2.msra.mxu0 0.0
    %1823 = vmatprep.subr.mxu0 0.0
    %1824 = vmatpush2.msra.mxu0 0.0
    %1825 = vmatprep.subr.mxu0 0.0
    %1826 = vmatpush2.msra.mxu0 0.0
    %1827 = vmatprep.subr.mxu0 0.0
    %1828 = vmatpush2.msra.mxu0 0.0
    %1829 = vmatprep.subr.mxu0 0.0
    %1830 = vmatpush2.msra.mxu0 0.0
    %1831 = vmatprep.subr.mxu0 0.0
    %1832 = vmatpush2.msra.mxu0 0.0
    %1833 = vmatprep.mubr.f32.mxu0 0.0
    %1834 = vmatmul.mubr.f32.gmra.mxu0 %v1506
    %v1835 = vpop.f32.mrf.mxu0
    %v1836 = vadd.f32 %v1502, %v1835
    %v1837 = vpop.f32.mrf.mxu0
    %v1838 = vadd.f32 %v1502, %v1837
    %1839 = vdwg.mxu0
    %1840 = vmatprep.subr.mxu0 0.0
    %1841 = vmatpush1.msra.mxu0 0.0
    %1842 = vmatprep.subr.mxu0 0.0
    %1843 = vmatpush1.msra.mxu0 0.0
    %1844 = vmatprep.subr.mxu0 0.0
    %1845 = vmatpush1.msra.mxu0 0.0
    %1846 = vmatprep.subr.mxu0 0.0
    %1847 = vmatpush1.msra.mxu0 0.0
    %1848 = vmatprep.subr.mxu0 0.0
    %1849 = vmatpush1.msra.mxu0 0.0
    %1850 = vmatprep.subr.mxu0 0.0
    %1851 = vmatpush1.msra.mxu0 0.0
    %1852 = vmatprep.subr.mxu0 0.0
    %1853 = vmatpush1.msra.mxu0 0.0
    %1854 = vmatprep.subr.mxu0 0.0
    %1855 = vmatpush1.msra.mxu0 0.0
    %1856 = vmatprep.subr.mxu0 0.0
    %1857 = vmatpush1.msra.mxu0 0.0
    %1858 = vmatprep.subr.mxu0 0.0
    %1859 = vmatpush1.msra.mxu0 0.0
    %1860 = vmatprep.subr.mxu0 0.0
    %1861 = vmatpush1.msra.mxu0 0.0
    %1862 = vmatprep.subr.mxu0 %v1536
    %1863 = vmatpush1.msra.mxu0 %v1533
    %1864 = vmatprep.subr.mxu0 %v1491
    %1865 = vmatpush1.msra.mxu0 %v1490
    %1866 = vmatprep.subr.mxu0 %v1475
    %1867 = vmatpush1.msra.mxu0 %v1474
    %1868 = vmatprep.subr.mxu0 %v1459
    %1869 = vmatpush1.msra.mxu0 %v1458
    %1870 = vmatprep.subr.mxu0 %v1443
    %1871 = vmatpush1.msra.mxu0 %v1442
    %1872 = vmatprep.subr.mxu0 0.0
    %1873 = vmatpush2.msra.mxu0 0.0
    %1874 = vmatprep.subr.mxu0 0.0
    %1875 = vmatpush2.msra.mxu0 0.0
    %1876 = vmatprep.subr.mxu0 0.0
    %1877 = vmatpush2.msra.mxu0 0.0
    %1878 = vmatprep.subr.mxu0 0.0
    %1879 = vmatpush2.msra.mxu0 0.0
    %1880 = vmatprep.subr.mxu0 0.0
    %1881 = vmatpush2.msra.mxu0 0.0
    %1882 = vmatprep.subr.mxu0 0.0
    %1883 = vmatpush2.msra.mxu0 0.0
    %1884 = vmatprep.subr.mxu0 0.0
    %1885 = vmatpush2.msra.mxu0 0.0
    %1886 = vmatprep.subr.mxu0 0.0
    %1887 = vmatpush2.msra.mxu0 0.0
    %1888 = vmatprep.subr.mxu0 0.0
    %1889 = vmatpush2.msra.mxu0 0.0
    %1890 = vmatprep.subr.mxu0 0.0
    %1891 = vmatpush2.msra.mxu0 0.0
    %1892 = vmatprep.subr.mxu0 0.0
    %1893 = vmatpush2.msra.mxu0 0.0
    %1894 = vmatprep.subr.mxu0 0.0
    %1895 = vmatpush2.msra.mxu0 0.0
    %1896 = vmatprep.subr.mxu0 0.0
    %1897 = vmatpush2.msra.mxu0 0.0
    %1898 = vmatprep.subr.mxu0 0.0
    %1899 = vmatpush2.msra.mxu0 0.0
    %1900 = vmatprep.subr.mxu0 0.0
    %1901 = vmatpush2.msra.mxu0 0.0
    %1902 = vmatprep.subr.mxu0 0.0
    %1903 = vmatpush2.msra.mxu0 0.0
    %1904 = vmatprep.mubr.f32.mxu0 0.0
    %1905 = vmatmul.mubr.f32.gmra.mxu0 %v1506
    %v1906 = vpop.f32.mrf.mxu0
    %v1907 = vadd.f32 %v1502, %v1906
    %v1908 = vpop.f32.mrf.mxu0
    %v1909 = vadd.f32 %v1502, %v1908
    %1910 = vdwg.mxu0
    %1911 = vmatprep.subr.mxu0 0.0
    %1912 = vmatpush1.msra.mxu0 0.0
    %1913 = vmatprep.subr.mxu0 0.0
    %1914 = vmatpush1.msra.mxu0 0.0
    %1915 = vmatprep.subr.mxu0 0.0
    %1916 = vmatpush1.msra.mxu0 0.0
    %1917 = vmatprep.subr.mxu0 0.0
    %1918 = vmatpush1.msra.mxu0 0.0
    %1919 = vmatprep.subr.mxu0 0.0
    %1920 = vmatpush1.msra.mxu0 0.0
    %1921 = vmatprep.subr.mxu0 0.0
    %1922 = vmatpush1.msra.mxu0 0.0
    %1923 = vmatprep.subr.mxu0 0.0
    %1924 = vmatpush1.msra.mxu0 0.0
    %1925 = vmatprep.subr.mxu0 0.0
    %1926 = vmatpush1.msra.mxu0 0.0
    %1927 = vmatprep.subr.mxu0 0.0
    %1928 = vmatpush1.msra.mxu0 0.0
    %1929 = vmatprep.subr.mxu0 0.0
    %1930 = vmatpush1.msra.mxu0 0.0
    %1931 = vmatprep.subr.mxu0 0.0
    %1932 = vmatpush1.msra.mxu0 0.0
    %1933 = vmatprep.subr.mxu0 %v1542
    %1934 = vmatpush1.msra.mxu0 %v1539
    %1935 = vmatprep.subr.mxu0 %v1493
    %1936 = vmatpush1.msra.mxu0 %v1492
    %1937 = vmatprep.subr.mxu0 %v1477
    %1938 = vmatpush1.msra.mxu0 %v1476
    %1939 = vmatprep.subr.mxu0 %v1461
    %1940 = vmatpush1.msra.mxu0 %v1460
    %1941 = vmatprep.subr.mxu0 %v1445
    %1942 = vmatpush1.msra.mxu0 %v1444
    %1943 = vmatprep.subr.mxu0 0.0
    %1944 = vmatpush2.msra.mxu0 0.0
    %1945 = vmatprep.subr.mxu0 0.0
    %1946 = vmatpush2.msra.mxu0 0.0
    %1947 = vmatprep.subr.mxu0 0.0
    %1948 = vmatpush2.msra.mxu0 0.0
    %1949 = vmatprep.subr.mxu0 0.0
    %1950 = vmatpush2.msra.mxu0 0.0
    %1951 = vmatprep.subr.mxu0 0.0
    %1952 = vmatpush2.msra.mxu0 0.0
    %1953 = vmatprep.subr.mxu0 0.0
    %1954 = vmatpush2.msra.mxu0 0.0
    %1955 = vmatprep.subr.mxu0 0.0
    %1956 = vmatpush2.msra.mxu0 0.0
    %1957 = vmatprep.subr.mxu0 0.0
    %1958 = vmatpush2.msra.mxu0 0.0
    %1959 = vmatprep.subr.mxu0 0.0
    %1960 = vmatpush2.msra.mxu0 0.0
    %1961 = vmatprep.subr.mxu0 0.0
    %1962 = vmatpush2.msra.mxu0 0.0
    %1963 = vmatprep.subr.mxu0 0.0
    %1964 = vmatpush2.msra.mxu0 0.0
    %1965 = vmatprep.subr.mxu0 0.0
    %1966 = vmatpush2.msra.mxu0 0.0
    %1967 = vmatprep.subr.mxu0 0.0
    %1968 = vmatpush2.msra.mxu0 0.0
    %1969 = vmatprep.subr.mxu0 0.0
    %1970 = vmatpush2.msra.mxu0 0.0
    %1971 = vmatprep.subr.mxu0 0.0
    %1972 = vmatpush2.msra.mxu0 0.0
    %1973 = vmatprep.subr.mxu0 0.0
    %1974 = vmatpush2.msra.mxu0 0.0
    %1975 = vmatprep.mubr.f32.mxu0 0.0
    %1976 = vmatmul.mubr.f32.gmra.mxu0 %v1506
    %v1977 = vpop.f32.mrf.mxu0
    %v1978 = vadd.f32 %v1502, %v1977
    %v1979 = vpop.f32.mrf.mxu0
    %v1980 = vadd.f32 %v1502, %v1979
    %1981 = vdwg.mxu0
    %1982 = vmatprep.subr.mxu0 0.0
    %1983 = vmatpush1.msra.mxu0 0.0
    %1984 = vmatprep.subr.mxu0 0.0
    %1985 = vmatpush1.msra.mxu0 0.0
    %1986 = vmatprep.subr.mxu0 0.0
    %1987 = vmatpush1.msra.mxu0 0.0
    %1988 = vmatprep.subr.mxu0 0.0
    %1989 = vmatpush1.msra.mxu0 0.0
    %1990 = vmatprep.subr.mxu0 0.0
    %1991 = vmatpush1.msra.mxu0 0.0
    %1992 = vmatprep.subr.mxu0 0.0
    %1993 = vmatpush1.msra.mxu0 0.0
    %1994 = vmatprep.subr.mxu0 0.0
    %1995 = vmatpush1.msra.mxu0 0.0
    %1996 = vmatprep.subr.mxu0 0.0
    %1997 = vmatpush1.msra.mxu0 0.0
    %1998 = vmatprep.subr.mxu0 0.0
    %1999 = vmatpush1.msra.mxu0 0.0
    %2000 = vmatprep.subr.mxu0 0.0
    %2001 = vmatpush1.msra.mxu0 0.0
    %2002 = vmatprep.subr.mxu0 0.0
    %2003 = vmatpush1.msra.mxu0 0.0
    %2004 = vmatprep.subr.mxu0 %v1548
    %2005 = vmatpush1.msra.mxu0 %v1545
    %2006 = vmatprep.subr.mxu0 %v1495
    %2007 = vmatpush1.msra.mxu0 %v1494
    %2008 = vmatprep.subr.mxu0 %v1479
    %2009 = vmatpush1.msra.mxu0 %v1478
    %2010 = vmatprep.subr.mxu0 %v1463
    %2011 = vmatpush1.msra.mxu0 %v1462
    %2012 = vmatprep.subr.mxu0 %v1447
    %2013 = vmatpush1.msra.mxu0 %v1446
    %2014 = vmatprep.subr.mxu0 0.0
    %2015 = vmatpush2.msra.mxu0 0.0
    %2016 = vmatprep.subr.mxu0 0.0
    %2017 = vmatpush2.msra.mxu0 0.0
    %2018 = vmatprep.subr.mxu0 0.0
    %2019 = vmatpush2.msra.mxu0 0.0
    %2020 = vmatprep.subr.mxu0 0.0
    %2021 = vmatpush2.msra.mxu0 0.0
    %2022 = vmatprep.subr.mxu0 0.0
    %2023 = vmatpush2.msra.mxu0 0.0
    %2024 = vmatprep.subr.mxu0 0.0
    %2025 = vmatpush2.msra.mxu0 0.0
    %2026 = vmatprep.subr.mxu0 0.0
    %2027 = vmatpush2.msra.mxu0 0.0
    %2028 = vmatprep.subr.mxu0 0.0
    %2029 = vmatpush2.msra.mxu0 0.0
    %2030 = vmatprep.subr.mxu0 0.0
    %2031 = vmatpush2.msra.mxu0 0.0
    %2032 = vmatprep.subr.mxu0 0.0
    %2033 = vmatpush2.msra.mxu0 0.0
    %2034 = vmatprep.subr.mxu0 0.0
    %2035 = vmatpush2.msra.mxu0 0.0
    %2036 = vmatprep.subr.mxu0 0.0
    %2037 = vmatpush2.msra.mxu0 0.0
    %2038 = vmatprep.subr.mxu0 0.0
    %2039 = vmatpush2.msra.mxu0 0.0
    %2040 = vmatprep.subr.mxu0 0.0
    %2041 = vmatpush2.msra.mxu0 0.0
    %2042 = vmatprep.subr.mxu0 0.0
    %2043 = vmatpush2.msra.mxu0 0.0
    %2044 = vmatprep.subr.mxu0 0.0
    %2045 = vmatpush2.msra.mxu0 0.0
    %2046 = vmatprep.mubr.f32.mxu0 0.0
    %2047 = vmatmul.mubr.f32.gmra.mxu0 %v1506
    %v2048 = vpop.f32.mrf.mxu0
    %v2049 = vadd.f32 %v1502, %v2048
    %v2050 = vpop.f32.mrf.mxu0
    %v2051 = vadd.f32 %v1502, %v2050
    %2052 = vdwg.mxu0
    %2053 = vmatprep.subr.mxu0 0.0
    %2054 = vmatpush1.msra.mxu0 0.0
    %2055 = vmatprep.subr.mxu0 0.0
    %2056 = vmatpush1.msra.mxu0 0.0
    %2057 = vmatprep.subr.mxu0 0.0
    %2058 = vmatpush1.msra.mxu0 0.0
    %2059 = vmatprep.subr.mxu0 0.0
    %2060 = vmatpush1.msra.mxu0 0.0
    %2061 = vmatprep.subr.mxu0 0.0
    %2062 = vmatpush1.msra.mxu0 0.0
    %2063 = vmatprep.subr.mxu0 0.0
    %2064 = vmatpush1.msra.mxu0 0.0
    %2065 = vmatprep.subr.mxu0 0.0
    %2066 = vmatpush1.msra.mxu0 0.0
    %2067 = vmatprep.subr.mxu0 0.0
    %2068 = vmatpush1.msra.mxu0 0.0
    %2069 = vmatprep.subr.mxu0 0.0
    %2070 = vmatpush1.msra.mxu0 0.0
    %2071 = vmatprep.subr.mxu0 0.0
    %2072 = vmatpush1.msra.mxu0 0.0
    %2073 = vmatprep.subr.mxu0 0.0
    %2074 = vmatpush1.msra.mxu0 0.0
    %2075 = vmatprep.subr.mxu0 %v1554
    %2076 = vmatpush1.msra.mxu0 %v1551
    %2077 = vmatprep.subr.mxu0 %v1497
    %2078 = vmatpush1.msra.mxu0 %v1496
    %2079 = vmatprep.subr.mxu0 %v1481
    %2080 = vmatpush1.msra.mxu0 %v1480
    %2081 = vmatprep.subr.mxu0 %v1465
    %2082 = vmatpush1.msra.mxu0 %v1464
    %2083 = vmatprep.subr.mxu0 %v1449
    %2084 = vmatpush1.msra.mxu0 %v1448
    %2085 = vmatprep.subr.mxu0 0.0
    %2086 = vmatpush2.msra.mxu0 0.0
    %2087 = vmatprep.subr.mxu0 0.0
    %2088 = vmatpush2.msra.mxu0 0.0
    %2089 = vmatprep.subr.mxu0 0.0
    %2090 = vmatpush2.msra.mxu0 0.0
    %2091 = vmatprep.subr.mxu0 0.0
    %2092 = vmatpush2.msra.mxu0 0.0
    %2093 = vmatprep.subr.mxu0 0.0
    %2094 = vmatpush2.msra.mxu0 0.0
    %2095 = vmatprep.subr.mxu0 0.0
    %2096 = vmatpush2.msra.mxu0 0.0
    %2097 = vmatprep.subr.mxu0 0.0
    %2098 = vmatpush2.msra.mxu0 0.0
    %2099 = vmatprep.subr.mxu0 0.0
    %2100 = vmatpush2.msra.mxu0 0.0
    %2101 = vmatprep.subr.mxu0 0.0
    %2102 = vmatpush2.msra.mxu0 0.0
    %2103 = vmatprep.subr.mxu0 0.0
    %2104 = vmatpush2.msra.mxu0 0.0
    %2105 = vmatprep.subr.mxu0 0.0
    %2106 = vmatpush2.msra.mxu0 0.0
    %2107 = vmatprep.subr.mxu0 0.0
    %2108 = vmatpush2.msra.mxu0 0.0
    %2109 = vmatprep.subr.mxu0 0.0
    %2110 = vmatpush2.msra.mxu0 0.0
    %2111 = vmatprep.subr.mxu0 0.0
    %2112 = vmatpush2.msra.mxu0 0.0
    %2113 = vmatprep.subr.mxu0 0.0
    %2114 = vmatpush2.msra.mxu0 0.0
    %2115 = vmatprep.subr.mxu0 0.0
    %2116 = vmatpush2.msra.mxu0 0.0
    %2117 = vmatprep.mubr.f32.mxu0 0.0
    %2118 = vmatmul.mubr.f32.gmra.mxu0 %v1506
    %v2119 = vpop.f32.mrf.mxu0
    %v2120 = vadd.f32 %v1502, %v2119
    %v2121 = vpop.f32.mrf.mxu0
    %v2122 = vadd.f32 %v1502, %v2121
    %2123 = vdwg.mxu0
    %v2124 = vsel %vm270, %v1623, 0.0
    %v2125 = vsel %vm270, %v1625, 0.0
    %v2126 = vadd.f32 %v2124, %v2125
    %v2127 = vsel %vm270, %v1694, 0.0
    %v2128 = vadd.f32 %v2126, %v2127
    %v2129 = vsel %vm270, %v1696, 0.0
    %v2130 = vadd.f32 %v2128, %v2129
    %v2131 = vsel %vm270, %v1765, 0.0
    %v2132 = vadd.f32 %v2130, %v2131
    %v2133 = vsel %vm270, %v1767, 0.0
    %v2134 = vadd.f32 %v2132, %v2133
    %v2135 = vsel %vm270, %v1836, 0.0
    %v2136 = vadd.f32 %v2134, %v2135
    %v2137 = vsel %vm270, %v1838, 0.0
    %v2138 = vadd.f32 %v2136, %v2137
    %v2139 = vsel %vm270, %v1907, 0.0
    %v2140 = vadd.f32 %v2138, %v2139
    %v2141 = vsel %vm270, %v1909, 0.0
    %v2142 = vadd.f32 %v2140, %v2141
    %v2143 = vsel %vm270, %v1978, 0.0
    %v2144 = vadd.f32 %v2142, %v2143
    %v2145 = vsel %vm270, %v1980, 0.0
    %v2146 = vadd.f32 %v2144, %v2145
    %v2147 = vsel %vm270, %v2049, 0.0
    %v2148 = vadd.f32 %v2146, %v2147
    %v2149 = vsel %vm270, %v2051, 0.0
    %v2150 = vadd.f32 %v2148, %v2149
    %v2151 = vsel %vm270, %v2120, 0.0
    %v2152 = vadd.f32 %v2150, %v2151
    %v2153 = vsel %vm270, %v2122, 0.0
    %v2154 = vadd.f32 %v2152, %v2153
    %2155 = vadd.xlane.f32.xlu0 %v2154
    %v2156 = vpop.xlane.xlu0 %2155
    %v2157 = vmul.f32 %v2156, 0.00048828125
    %v2158 = vsub.f32 %v1623, %v2157
    %v2159 = vsub.f32 %v1625, %v2157
    %v2160 = vsub.f32 %v1694, %v2157
    %v2161 = vsub.f32 %v1696, %v2157
    %v2162 = vsub.f32 %v1765, %v2157
    %v2163 = vsub.f32 %v1767, %v2157
    %v2164 = vsub.f32 %v1836, %v2157
    %v2165 = vsub.f32 %v1838, %v2157
    %v2166 = vsub.f32 %v1907, %v2157
    %v2167 = vsub.f32 %v1909, %v2157
    %v2168 = vsub.f32 %v1978, %v2157
    %v2169 = vsub.f32 %v1980, %v2157
    %v2170 = vsub.f32 %v2049, %v2157
    %v2171 = vsub.f32 %v2051, %v2157
    %v2172 = vsub.f32 %v2120, %v2157
    %v2173 = vsub.f32 %v2122, %v2157
    %v2174 = vmul.f32 %v2158, %v2158
    %v2175 = vmul.f32 %v2159, %v2159
    %v2176 = vmul.f32 %v2160, %v2160
    %v2177 = vmul.f32 %v2161, %v2161
    %v2178 = vmul.f32 %v2162, %v2162
    %v2179 = vmul.f32 %v2163, %v2163
    %v2180 = vmul.f32 %v2164, %v2164
    %v2181 = vmul.f32 %v2165, %v2165
    %v2182 = vmul.f32 %v2166, %v2166
    %v2183 = vmul.f32 %v2167, %v2167
    %v2184 = vmul.f32 %v2168, %v2168
    %v2185 = vmul.f32 %v2169, %v2169
    %v2186 = vmul.f32 %v2170, %v2170
    %v2187 = vmul.f32 %v2171, %v2171
    %v2188 = vmul.f32 %v2172, %v2172
    %v2189 = vmul.f32 %v2173, %v2173
    %v2190 = vsel %vm270, %v2174, 0.0
    %v2191 = vsel %vm270, %v2175, 0.0
    %v2192 = vadd.f32 %v2190, %v2191
    %v2193 = vsel %vm270, %v2176, 0.0
    %v2194 = vadd.f32 %v2192, %v2193
    %v2195 = vsel %vm270, %v2177, 0.0
    %v2196 = vadd.f32 %v2194, %v2195
    %v2197 = vsel %vm270, %v2178, 0.0
    %v2198 = vadd.f32 %v2196, %v2197
    %v2199 = vsel %vm270, %v2179, 0.0
    %v2200 = vadd.f32 %v2198, %v2199
    %v2201 = vsel %vm270, %v2180, 0.0
    %v2202 = vadd.f32 %v2200, %v2201
    %v2203 = vsel %vm270, %v2181, 0.0
    %v2204 = vadd.f32 %v2202, %v2203
    %v2205 = vsel %vm270, %v2182, 0.0
    %v2206 = vadd.f32 %v2204, %v2205
    %v2207 = vsel %vm270, %v2183, 0.0
    %v2208 = vadd.f32 %v2206, %v2207
    %v2209 = vsel %vm270, %v2184, 0.0
    %v2210 = vadd.f32 %v2208, %v2209
    %v2211 = vsel %vm270, %v2185, 0.0
    %v2212 = vadd.f32 %v2210, %v2211
    %v2213 = vsel %vm270, %v2186, 0.0
    %v2214 = vadd.f32 %v2212, %v2213
    %v2215 = vsel %vm270, %v2187, 0.0
    %v2216 = vadd.f32 %v2214, %v2215
    %v2217 = vsel %vm270, %v2188, 0.0
    %v2218 = vadd.f32 %v2216, %v2217
    %v2219 = vsel %vm270, %v2189, 0.0
    %v2220 = vadd.f32 %v2218, %v2219
    %2221 = vadd.xlane.f32.xlu0 %v2220
    %v2222 = vpop.xlane.xlu0 %2221
    %v2223 = vmul.f32 %v2222, 0.00048828125
    %v2224 = vadd.f32 %v2223, 1e-05
    %v2225 = vrsqrt.pop %v2224
    %v2226 = vld [vmem:[%s5] sm:$0xf]
    %v2227 = vmul.f32 %v2225, %v2226
    %2229 = vset.pattern.permute.xlu0 0
    %2230 = vperm.xlu0 %2229, %v2227
    %v2231 = vpop.permute.xlu0 %2230
    %v2233 = vmul.f32 %v2158, %v2231
    %v2234 = vmul.f32 %v2159, %v2231
    %v2235 = vmul.f32 %v2160, %v2231
    %v2236 = vmul.f32 %v2161, %v2231
    %v2237 = vmul.f32 %v2162, %v2231
    %v2238 = vmul.f32 %v2163, %v2231
    %v2239 = vmul.f32 %v2164, %v2231
    %v2240 = vmul.f32 %v2165, %v2231
    %v2241 = vmul.f32 %v2166, %v2231
    %v2242 = vmul.f32 %v2167, %v2231
    %v2243 = vmul.f32 %v2168, %v2231
    %v2244 = vmul.f32 %v2169, %v2231
    %v2245 = vmul.f32 %v2170, %v2231
    %v2246 = vmul.f32 %v2171, %v2231
    %v2247 = vmul.f32 %v2172, %v2231
    %v2248 = vmul.f32 %v2173, %v2231
    %v2249 = vld [vmem:[%s6] sm:$0xf]
    %2251 = vset.pattern.permute.xlu0 0
    %2252 = vperm.xlu0 %2251, %v2249
    %v2253 = vpop.permute.xlu0 %2252
    %v2255 = vadd.f32 %v2233, %v2253
    %v2256 = vadd.f32 %v2234, %v2253
    %v2257 = vadd.f32 %v2235, %v2253
    %v2258 = vadd.f32 %v2236, %v2253
    %v2259 = vadd.f32 %v2237, %v2253
    %v2260 = vadd.f32 %v2238, %v2253
    %v2261 = vadd.f32 %v2239, %v2253
    %v2262 = vadd.f32 %v2240, %v2253
    %v2263 = vadd.f32 %v2241, %v2253
    %v2264 = vadd.f32 %v2242, %v2253
    %v2265 = vadd.f32 %v2243, %v2253
    %v2266 = vadd.f32 %v2244, %v2253
    %v2267 = vadd.f32 %v2245, %v2253
    %v2268 = vadd.f32 %v2246, %v2253
    %v2269 = vadd.f32 %v2247, %v2253
    %v2270 = vadd.f32 %v2248, %v2253
    %v2271 = vmax.f32 %v2255, 0.0
    %v2272 = vmax.f32 %v2256, 0.0
    %v2273 = vmax.f32 %v2257, 0.0
    %v2274 = vmax.f32 %v2258, 0.0
    %v2275 = vmax.f32 %v2259, 0.0
    %v2276 = vmax.f32 %v2260, 0.0
    %v2277 = vmax.f32 %v2261, 0.0
    %v2278 = vmax.f32 %v2262, 0.0
    %v2279 = vmax.f32 %v2263, 0.0
    %v2280 = vmax.f32 %v2264, 0.0
    %v2281 = vmax.f32 %v2265, 0.0
    %v2282 = vmax.f32 %v2266, 0.0
    %v2283 = vmax.f32 %v2267, 0.0
    %v2284 = vmax.f32 %v2268, 0.0
    %v2285 = vmax.f32 %v2269, 0.0
    %v2286 = vmax.f32 %v2270, 0.0
    %2287 = vrot.lane.b32.xlu0 %v2271, 33
    %v2288 = vpop.permute.xlu0 %2287
    %2289 = vrot.lane.b32.xlu0 %v2272, 33
    %v2290 = vpop.permute.xlu0 %2289
    %2291 = vrot.lane.b32.xlu0 %v2273, 33
    %v2292 = vpop.permute.xlu0 %2291
    %2293 = vrot.lane.b32.xlu0 %v2274, 33
    %v2294 = vpop.permute.xlu0 %2293
    %2295 = vrot.lane.b32.xlu0 %v2275, 33
    %v2296 = vpop.permute.xlu0 %2295
    %2297 = vrot.lane.b32.xlu0 %v2276, 33
    %v2298 = vpop.permute.xlu0 %2297
    %2299 = vrot.lane.b32.xlu0 %v2277, 33
    %v2300 = vpop.permute.xlu0 %2299
    %2301 = vrot.lane.b32.xlu0 %v2278, 33
    %v2302 = vpop.permute.xlu0 %2301
    %2303 = vrot.lane.b32.xlu0 %v2279, 33
    %v2304 = vpop.permute.xlu0 %2303
    %2305 = vrot.lane.b32.xlu0 %v2280, 33
    %v2306 = vpop.permute.xlu0 %2305
    %2307 = vrot.lane.b32.xlu0 %v2281, 33
    %v2308 = vpop.permute.xlu0 %2307
    %2309 = vrot.lane.b32.xlu0 %v2282, 33
    %v2310 = vpop.permute.xlu0 %2309
    %2311 = vrot.lane.b32.xlu0 %v2283, 33
    %v2312 = vpop.permute.xlu0 %2311
    %2313 = vrot.lane.b32.xlu0 %v2284, 33
    %v2314 = vpop.permute.xlu0 %2313
    %2315 = vrot.lane.b32.xlu0 %v2285, 33
    %v2316 = vpop.permute.xlu0 %2315
    %2317 = vrot.lane.b32.xlu0 %v2286, 33
    %v2318 = vpop.permute.xlu0 %2317
    %v2319 = vsel %vm498, %v2316, %v2318
    %v2320 = vsel %vm498, %v2314, %v2316
    %v2321 = vsel %vm498, %v2312, %v2314
    %v2322 = vsel %vm498, %v2310, %v2312
    %v2323 = vsel %vm498, %v2308, %v2310
    %v2324 = vsel %vm498, %v2306, %v2308
    %v2325 = vsel %vm498, %v2304, %v2306
    %v2326 = vsel %vm498, %v2302, %v2304
    %v2327 = vsel %vm498, %v2300, %v2302
    %v2328 = vsel %vm498, %v2298, %v2300
    %v2329 = vsel %vm498, %v2296, %v2298
    %v2330 = vsel %vm498, %v2294, %v2296
    %v2331 = vsel %vm498, %v2292, %v2294
    %v2332 = vsel %vm498, %v2290, %v2292
    %v2333 = vsel %vm498, %v2288, %v2290
    %v2334 = vsel %vm498, %v2318, %v2288
    %v2335 = vsel %vm531, %v2334, 0.0
    %v2336 = vsel %vm532, %v2333, 0.0
    %v2337 = vsel %vm533, %v2332, 0.0
    %v2338 = vsel %vm534, %v2331, 0.0
    %v2339 = vsel %vm535, %v2330, 0.0
    %v2340 = vsel %vm536, %v2329, 0.0
    %v2341 = vsel %vm537, %v2328, 0.0
    %v2342 = vsel %vm538, %v2327, 0.0
    %v2343 = vsel %vm539, %v2326, 0.0
    %v2344 = vsel %vm540, %v2325, 0.0
    %v2345 = vsel %vm541, %v2324, 0.0
    %v2346 = vsel %vm542, %v2323, 0.0
    %v2347 = vsel %vm543, %v2322, 0.0
    %v2348 = vsel %vm544, %v2321, 0.0
    %v2349 = vsel %vm545, %v2320, 0.0
    %v2350 = vsel %vm546, %v2319, 0.0
    %2351 = vrot.lane.b32.xlu0 %v2271, 32
    %v2352 = vpop.permute.xlu0 %2351
    %2353 = vrot.lane.b32.xlu0 %v2272, 32
    %v2354 = vpop.permute.xlu0 %2353
    %2355 = vrot.lane.b32.xlu0 %v2273, 32
    %v2356 = vpop.permute.xlu0 %2355
    %2357 = vrot.lane.b32.xlu0 %v2274, 32
    %v2358 = vpop.permute.xlu0 %2357
    %2359 = vrot.lane.b32.xlu0 %v2275, 32
    %v2360 = vpop.permute.xlu0 %2359
    %2361 = vrot.lane.b32.xlu0 %v2276, 32
    %v2362 = vpop.permute.xlu0 %2361
    %2363 = vrot.lane.b32.xlu0 %v2277, 32
    %v2364 = vpop.permute.xlu0 %2363
    %2365 = vrot.lane.b32.xlu0 %v2278, 32
    %v2366 = vpop.permute.xlu0 %2365
    %2367 = vrot.lane.b32.xlu0 %v2279, 32
    %v2368 = vpop.permute.xlu0 %2367
    %2369 = vrot.lane.b32.xlu0 %v2280, 32
    %v2370 = vpop.permute.xlu0 %2369
    %2371 = vrot.lane.b32.xlu0 %v2281, 32
    %v2372 = vpop.permute.xlu0 %2371
    %2373 = vrot.lane.b32.xlu0 %v2282, 32
    %v2374 = vpop.permute.xlu0 %2373
    %2375 = vrot.lane.b32.xlu0 %v2283, 32
    %v2376 = vpop.permute.xlu0 %2375
    %2377 = vrot.lane.b32.xlu0 %v2284, 32
    %v2378 = vpop.permute.xlu0 %2377
    %2379 = vrot.lane.b32.xlu0 %v2285, 32
    %v2380 = vpop.permute.xlu0 %2379
    %2381 = vrot.lane.b32.xlu0 %v2286, 32
    %v2382 = vpop.permute.xlu0 %2381
    %v2383 = vsel %vm595, %v2380, %v2382
    %v2384 = vsel %vm595, %v2378, %v2380
    %v2385 = vsel %vm595, %v2376, %v2378
    %v2386 = vsel %vm595, %v2374, %v2376
    %v2387 = vsel %vm595, %v2372, %v2374
    %v2388 = vsel %vm595, %v2370, %v2372
    %v2389 = vsel %vm595, %v2368, %v2370
    %v2390 = vsel %vm595, %v2366, %v2368
    %v2391 = vsel %vm595, %v2364, %v2366
    %v2392 = vsel %vm595, %v2362, %v2364
    %v2393 = vsel %vm595, %v2360, %v2362
    %v2394 = vsel %vm595, %v2358, %v2360
    %v2395 = vsel %vm595, %v2356, %v2358
    %v2396 = vsel %vm595, %v2354, %v2356
    %v2397 = vsel %vm595, %v2352, %v2354
    %v2398 = vsel %vm595, %v2382, %v2352
    %v2399 = vsel %vm628, %v2398, 0.0
    %v2400 = vsel %vm629, %v2397, 0.0
    %v2401 = vsel %vm630, %v2396, 0.0
    %v2402 = vsel %vm631, %v2395, 0.0
    %v2403 = vsel %vm632, %v2394, 0.0
    %v2404 = vsel %vm633, %v2393, 0.0
    %v2405 = vsel %vm634, %v2392, 0.0
    %v2406 = vsel %vm635, %v2391, 0.0
    %v2407 = vsel %vm636, %v2390, 0.0
    %v2408 = vsel %vm637, %v2389, 0.0
    %v2409 = vsel %vm638, %v2388, 0.0
    %v2410 = vsel %vm639, %v2387, 0.0
    %v2411 = vsel %vm640, %v2386, 0.0
    %v2412 = vsel %vm641, %v2385, 0.0
    %v2413 = vsel %vm642, %v2384, 0.0
    %v2414 = vsel %vm643, %v2383, 0.0
    %2415 = vrot.lane.b32.xlu0 %v2271, 31
    %v2416 = vpop.permute.xlu0 %2415
    %2417 = vrot.lane.b32.xlu0 %v2272, 31
    %v2418 = vpop.permute.xlu0 %2417
    %2419 = vrot.lane.b32.xlu0 %v2273, 31
    %v2420 = vpop.permute.xlu0 %2419
    %2421 = vrot.lane.b32.xlu0 %v2274, 31
    %v2422 = vpop.permute.xlu0 %2421
    %2423 = vrot.lane.b32.xlu0 %v2275, 31
    %v2424 = vpop.permute.xlu0 %2423
    %2425 = vrot.lane.b32.xlu0 %v2276, 31
    %v2426 = vpop.permute.xlu0 %2425
    %2427 = vrot.lane.b32.xlu0 %v2277, 31
    %v2428 = vpop.permute.xlu0 %2427
    %2429 = vrot.lane.b32.xlu0 %v2278, 31
    %v2430 = vpop.permute.xlu0 %2429
    %2431 = vrot.lane.b32.xlu0 %v2279, 31
    %v2432 = vpop.permute.xlu0 %2431
    %2433 = vrot.lane.b32.xlu0 %v2280, 31
    %v2434 = vpop.permute.xlu0 %2433
    %2435 = vrot.lane.b32.xlu0 %v2281, 31
    %v2436 = vpop.permute.xlu0 %2435
    %2437 = vrot.lane.b32.xlu0 %v2282, 31
    %v2438 = vpop.permute.xlu0 %2437
    %2439 = vrot.lane.b32.xlu0 %v2283, 31
    %v2440 = vpop.permute.xlu0 %2439
    %2441 = vrot.lane.b32.xlu0 %v2284, 31
    %v2442 = vpop.permute.xlu0 %2441
    %2443 = vrot.lane.b32.xlu0 %v2285, 31
    %v2444 = vpop.permute.xlu0 %2443
    %2445 = vrot.lane.b32.xlu0 %v2286, 31
    %v2446 = vpop.permute.xlu0 %2445
    %v2447 = vsel %vm692, %v2444, %v2446
    %v2448 = vsel %vm692, %v2442, %v2444
    %v2449 = vsel %vm692, %v2440, %v2442
    %v2450 = vsel %vm692, %v2438, %v2440
    %v2451 = vsel %vm692, %v2436, %v2438
    %v2452 = vsel %vm692, %v2434, %v2436
    %v2453 = vsel %vm692, %v2432, %v2434
    %v2454 = vsel %vm692, %v2430, %v2432
    %v2455 = vsel %vm692, %v2428, %v2430
    %v2456 = vsel %vm692, %v2426, %v2428
    %v2457 = vsel %vm692, %v2424, %v2426
    %v2458 = vsel %vm692, %v2422, %v2424
    %v2459 = vsel %vm692, %v2420, %v2422
    %v2460 = vsel %vm692, %v2418, %v2420
    %v2461 = vsel %vm692, %v2416, %v2418
    %v2462 = vsel %vm692, %v2446, %v2416
    %v2463 = vsel %vm725, %v2462, 0.0
    %v2464 = vsel %vm726, %v2461, 0.0
    %v2465 = vsel %vm727, %v2460, 0.0
    %v2466 = vsel %vm728, %v2459, 0.0
    %v2467 = vsel %vm729, %v2458, 0.0
    %v2468 = vsel %vm730, %v2457, 0.0
    %v2469 = vsel %vm731, %v2456, 0.0
    %v2470 = vsel %vm732, %v2455, 0.0
    %v2471 = vsel %vm733, %v2454, 0.0
    %v2472 = vsel %vm734, %v2453, 0.0
    %v2473 = vsel %vm735, %v2452, 0.0
    %v2474 = vsel %vm736, %v2451, 0.0
    %v2475 = vsel %vm737, %v2450, 0.0
    %v2476 = vsel %vm738, %v2449, 0.0
    %v2477 = vsel %vm739, %v2448, 0.0
    %v2478 = vsel %vm740, %v2447, 0.0
    %2479 = vrot.lane.b32.xlu0 %v2271, 1
    %v2480 = vpop.permute.xlu0 %2479
    %2481 = vrot.lane.b32.xlu0 %v2272, 1
    %v2482 = vpop.permute.xlu0 %2481
    %2483 = vrot.lane.b32.xlu0 %v2273, 1
    %v2484 = vpop.permute.xlu0 %2483
    %2485 = vrot.lane.b32.xlu0 %v2274, 1
    %v2486 = vpop.permute.xlu0 %2485
    %2487 = vrot.lane.b32.xlu0 %v2275, 1
    %v2488 = vpop.permute.xlu0 %2487
    %2489 = vrot.lane.b32.xlu0 %v2276, 1
    %v2490 = vpop.permute.xlu0 %2489
    %2491 = vrot.lane.b32.xlu0 %v2277, 1
    %v2492 = vpop.permute.xlu0 %2491
    %2493 = vrot.lane.b32.xlu0 %v2278, 1
    %v2494 = vpop.permute.xlu0 %2493
    %2495 = vrot.lane.b32.xlu0 %v2279, 1
    %v2496 = vpop.permute.xlu0 %2495
    %2497 = vrot.lane.b32.xlu0 %v2280, 1
    %v2498 = vpop.permute.xlu0 %2497
    %2499 = vrot.lane.b32.xlu0 %v2281, 1
    %v2500 = vpop.permute.xlu0 %2499
    %2501 = vrot.lane.b32.xlu0 %v2282, 1
    %v2502 = vpop.permute.xlu0 %2501
    %2503 = vrot.lane.b32.xlu0 %v2283, 1
    %v2504 = vpop.permute.xlu0 %2503
    %2505 = vrot.lane.b32.xlu0 %v2284, 1
    %v2506 = vpop.permute.xlu0 %2505
    %2507 = vrot.lane.b32.xlu0 %v2285, 1
    %v2508 = vpop.permute.xlu0 %2507
    %2509 = vrot.lane.b32.xlu0 %v2286, 1
    %v2510 = vpop.permute.xlu0 %2509
    %v2511 = vsel %vm789, %v2508, %v2510
    %v2512 = vsel %vm789, %v2506, %v2508
    %v2513 = vsel %vm789, %v2504, %v2506
    %v2514 = vsel %vm789, %v2502, %v2504
    %v2515 = vsel %vm789, %v2500, %v2502
    %v2516 = vsel %vm789, %v2498, %v2500
    %v2517 = vsel %vm789, %v2496, %v2498
    %v2518 = vsel %vm789, %v2494, %v2496
    %v2519 = vsel %vm789, %v2492, %v2494
    %v2520 = vsel %vm789, %v2490, %v2492
    %v2521 = vsel %vm789, %v2488, %v2490
    %v2522 = vsel %vm789, %v2486, %v2488
    %v2523 = vsel %vm789, %v2484, %v2486
    %v2524 = vsel %vm789, %v2482, %v2484
    %v2525 = vsel %vm789, %v2480, %v2482
    %v2526 = vsel %vm789, %v2510, %v2480
    %v2527 = vsel %vm822, %v2526, 0.0
    %v2528 = vsel %vm823, %v2525, 0.0
    %v2529 = vsel %vm824, %v2524, 0.0
    %v2530 = vsel %vm825, %v2523, 0.0
    %v2531 = vsel %vm826, %v2522, 0.0
    %v2532 = vsel %vm827, %v2521, 0.0
    %v2533 = vsel %vm828, %v2520, 0.0
    %v2534 = vsel %vm829, %v2519, 0.0
    %v2535 = vsel %vm830, %v2518, 0.0
    %v2536 = vsel %vm831, %v2517, 0.0
    %v2537 = vsel %vm832, %v2516, 0.0
    %v2538 = vsel %vm833, %v2515, 0.0
    %v2539 = vsel %vm834, %v2514, 0.0
    %v2540 = vsel %vm835, %v2513, 0.0
    %v2541 = vsel %vm836, %v2512, 0.0
    %v2542 = vsel %vm837, %v2511, 0.0
    %2543 = vrot.lane.b32.xlu0 %v2271, 127
    %v2544 = vpop.permute.xlu0 %2543
    %2545 = vrot.lane.b32.xlu0 %v2272, 127
    %v2546 = vpop.permute.xlu0 %2545
    %2547 = vrot.lane.b32.xlu0 %v2273, 127
    %v2548 = vpop.permute.xlu0 %2547
    %2549 = vrot.lane.b32.xlu0 %v2274, 127
    %v2550 = vpop.permute.xlu0 %2549
    %2551 = vrot.lane.b32.xlu0 %v2275, 127
    %v2552 = vpop.permute.xlu0 %2551
    %2553 = vrot.lane.b32.xlu0 %v2276, 127
    %v2554 = vpop.permute.xlu0 %2553
    %2555 = vrot.lane.b32.xlu0 %v2277, 127
    %v2556 = vpop.permute.xlu0 %2555
    %2557 = vrot.lane.b32.xlu0 %v2278, 127
    %v2558 = vpop.permute.xlu0 %2557
    %2559 = vrot.lane.b32.xlu0 %v2279, 127
    %v2560 = vpop.permute.xlu0 %2559
    %2561 = vrot.lane.b32.xlu0 %v2280, 127
    %v2562 = vpop.permute.xlu0 %2561
    %2563 = vrot.lane.b32.xlu0 %v2281, 127
    %v2564 = vpop.permute.xlu0 %2563
    %2565 = vrot.lane.b32.xlu0 %v2282, 127
    %v2566 = vpop.permute.xlu0 %2565
    %2567 = vrot.lane.b32.xlu0 %v2283, 127
    %v2568 = vpop.permute.xlu0 %2567
    %2569 = vrot.lane.b32.xlu0 %v2284, 127
    %v2570 = vpop.permute.xlu0 %2569
    %2571 = vrot.lane.b32.xlu0 %v2285, 127
    %v2572 = vpop.permute.xlu0 %2571
    %2573 = vrot.lane.b32.xlu0 %v2286, 127
    %v2574 = vpop.permute.xlu0 %2573
    %v2575 = vsel %vm886, %v2572, %v2574
    %v2576 = vsel %vm886, %v2570, %v2572
    %v2577 = vsel %vm886, %v2568, %v2570
    %v2578 = vsel %vm886, %v2566, %v2568
    %v2579 = vsel %vm886, %v2564, %v2566
    %v2580 = vsel %vm886, %v2562, %v2564
    %v2581 = vsel %vm886, %v2560, %v2562
    %v2582 = vsel %vm886, %v2558, %v2560
    %v2583 = vsel %vm886, %v2556, %v2558
    %v2584 = vsel %vm886, %v2554, %v2556
    %v2585 = vsel %vm886, %v2552, %v2554
    %v2586 = vsel %vm886, %v2550, %v2552
    %v2587 = vsel %vm886, %v2548, %v2550
    %v2588 = vsel %vm886, %v2546, %v2548
    %v2589 = vsel %vm886, %v2544, %v2546
    %v2590 = vsel %vm886, %v2574, %v2544
    %v2591 = vsel %vm919, %v2589, 0.0
    %v2592 = vsel %vm920, %v2588, 0.0
    %v2593 = vsel %vm921, %v2587, 0.0
    %v2594 = vsel %vm922, %v2586, 0.0
    %v2595 = vsel %vm923, %v2585, 0.0
    %v2596 = vsel %vm924, %v2584, 0.0
    %v2597 = vsel %vm925, %v2583, 0.0
    %v2598 = vsel %vm926, %v2582, 0.0
    %v2599 = vsel %vm927, %v2581, 0.0
    %v2600 = vsel %vm928, %v2580, 0.0
    %v2601 = vsel %vm929, %v2579, 0.0
    %v2602 = vsel %vm930, %v2578, 0.0
    %v2603 = vsel %vm931, %v2577, 0.0
    %v2604 = vsel %vm932, %v2576, 0.0
    %v2605 = vsel %vm933, %v2575, 0.0
    %v2606 = vsel %vm934, %v2590, 0.0
    %2607 = vrot.lane.b32.xlu0 %v2271, 97
    %v2608 = vpop.permute.xlu0 %2607
    %2609 = vrot.lane.b32.xlu0 %v2272, 97
    %v2610 = vpop.permute.xlu0 %2609
    %2611 = vrot.lane.b32.xlu0 %v2273, 97
    %v2612 = vpop.permute.xlu0 %2611
    %2613 = vrot.lane.b32.xlu0 %v2274, 97
    %v2614 = vpop.permute.xlu0 %2613
    %2615 = vrot.lane.b32.xlu0 %v2275, 97
    %v2616 = vpop.permute.xlu0 %2615
    %2617 = vrot.lane.b32.xlu0 %v2276, 97
    %v2618 = vpop.permute.xlu0 %2617
    %2619 = vrot.lane.b32.xlu0 %v2277, 97
    %v2620 = vpop.permute.xlu0 %2619
    %2621 = vrot.lane.b32.xlu0 %v2278, 97
    %v2622 = vpop.permute.xlu0 %2621
    %2623 = vrot.lane.b32.xlu0 %v2279, 97
    %v2624 = vpop.permute.xlu0 %2623
    %2625 = vrot.lane.b32.xlu0 %v2280, 97
    %v2626 = vpop.permute.xlu0 %2625
    %2627 = vrot.lane.b32.xlu0 %v2281, 97
    %v2628 = vpop.permute.xlu0 %2627
    %2629 = vrot.lane.b32.xlu0 %v2282, 97
    %v2630 = vpop.permute.xlu0 %2629
    %2631 = vrot.lane.b32.xlu0 %v2283, 97
    %v2632 = vpop.permute.xlu0 %2631
    %2633 = vrot.lane.b32.xlu0 %v2284, 97
    %v2634 = vpop.permute.xlu0 %2633
    %2635 = vrot.lane.b32.xlu0 %v2285, 97
    %v2636 = vpop.permute.xlu0 %2635
    %2637 = vrot.lane.b32.xlu0 %v2286, 97
    %v2638 = vpop.permute.xlu0 %2637
    %v2639 = vsel %vm983, %v2636, %v2638
    %v2640 = vsel %vm983, %v2634, %v2636
    %v2641 = vsel %vm983, %v2632, %v2634
    %v2642 = vsel %vm983, %v2630, %v2632
    %v2643 = vsel %vm983, %v2628, %v2630
    %v2644 = vsel %vm983, %v2626, %v2628
    %v2645 = vsel %vm983, %v2624, %v2626
    %v2646 = vsel %vm983, %v2622, %v2624
    %v2647 = vsel %vm983, %v2620, %v2622
    %v2648 = vsel %vm983, %v2618, %v2620
    %v2649 = vsel %vm983, %v2616, %v2618
    %v2650 = vsel %vm983, %v2614, %v2616
    %v2651 = vsel %vm983, %v2612, %v2614
    %v2652 = vsel %vm983, %v2610, %v2612
    %v2653 = vsel %vm983, %v2608, %v2610
    %v2654 = vsel %vm983, %v2638, %v2608
    %v2655 = vsel %vm1016, %v2653, 0.0
    %v2656 = vsel %vm1017, %v2652, 0.0
    %v2657 = vsel %vm1018, %v2651, 0.0
    %v2658 = vsel %vm1019, %v2650, 0.0
    %v2659 = vsel %vm1020, %v2649, 0.0
    %v2660 = vsel %vm1021, %v2648, 0.0
    %v2661 = vsel %vm1022, %v2647, 0.0
    %v2662 = vsel %vm1023, %v2646, 0.0
    %v2663 = vsel %vm1024, %v2645, 0.0
    %v2664 = vsel %vm1025, %v2644, 0.0
    %v2665 = vsel %vm1026, %v2643, 0.0
    %v2666 = vsel %vm1027, %v2642, 0.0
    %v2667 = vsel %vm1028, %v2641, 0.0
    %v2668 = vsel %vm1029, %v2640, 0.0
    %v2669 = vsel %vm1030, %v2639, 0.0
    %v2670 = vsel %vm1031, %v2654, 0.0
    %2671 = vrot.lane.b32.xlu0 %v2271, 96
    %v2672 = vpop.permute.xlu0 %2671
    %2673 = vrot.lane.b32.xlu0 %v2272, 96
    %v2674 = vpop.permute.xlu0 %2673
    %2675 = vrot.lane.b32.xlu0 %v2273, 96
    %v2676 = vpop.permute.xlu0 %2675
    %2677 = vrot.lane.b32.xlu0 %v2274, 96
    %v2678 = vpop.permute.xlu0 %2677
    %2679 = vrot.lane.b32.xlu0 %v2275, 96
    %v2680 = vpop.permute.xlu0 %2679
    %2681 = vrot.lane.b32.xlu0 %v2276, 96
    %v2682 = vpop.permute.xlu0 %2681
    %2683 = vrot.lane.b32.xlu0 %v2277, 96
    %v2684 = vpop.permute.xlu0 %2683
    %2685 = vrot.lane.b32.xlu0 %v2278, 96
    %v2686 = vpop.permute.xlu0 %2685
    %2687 = vrot.lane.b32.xlu0 %v2279, 96
    %v2688 = vpop.permute.xlu0 %2687
    %2689 = vrot.lane.b32.xlu0 %v2280, 96
    %v2690 = vpop.permute.xlu0 %2689
    %2691 = vrot.lane.b32.xlu0 %v2281, 96
    %v2692 = vpop.permute.xlu0 %2691
    %2693 = vrot.lane.b32.xlu0 %v2282, 96
    %v2694 = vpop.permute.xlu0 %2693
    %2695 = vrot.lane.b32.xlu0 %v2283, 96
    %v2696 = vpop.permute.xlu0 %2695
    %2697 = vrot.lane.b32.xlu0 %v2284, 96
    %v2698 = vpop.permute.xlu0 %2697
    %2699 = vrot.lane.b32.xlu0 %v2285, 96
    %v2700 = vpop.permute.xlu0 %2699
    %2701 = vrot.lane.b32.xlu0 %v2286, 96
    %v2702 = vpop.permute.xlu0 %2701
    %v2703 = vsel %vm1080, %v2700, %v2702
    %v2704 = vsel %vm1080, %v2698, %v2700
    %v2705 = vsel %vm1080, %v2696, %v2698
    %v2706 = vsel %vm1080, %v2694, %v2696
    %v2707 = vsel %vm1080, %v2692, %v2694
    %v2708 = vsel %vm1080, %v2690, %v2692
    %v2709 = vsel %vm1080, %v2688, %v2690
    %v2710 = vsel %vm1080, %v2686, %v2688
    %v2711 = vsel %vm1080, %v2684, %v2686
    %v2712 = vsel %vm1080, %v2682, %v2684
    %v2713 = vsel %vm1080, %v2680, %v2682
    %v2714 = vsel %vm1080, %v2678, %v2680
    %v2715 = vsel %vm1080, %v2676, %v2678
    %v2716 = vsel %vm1080, %v2674, %v2676
    %v2717 = vsel %vm1080, %v2672, %v2674
    %v2718 = vsel %vm1080, %v2702, %v2672
    %v2719 = vsel %vm1113, %v2717, 0.0
    %v2720 = vsel %vm1114, %v2716, 0.0
    %v2721 = vsel %vm1115, %v2715, 0.0
    %v2722 = vsel %vm1116, %v2714, 0.0
    %v2723 = vsel %vm1117, %v2713, 0.0
    %v2724 = vsel %vm1118, %v2712, 0.0
    %v2725 = vsel %vm1119, %v2711, 0.0
    %v2726 = vsel %vm1120, %v2710, 0.0
    %v2727 = vsel %vm1121, %v2709, 0.0
    %v2728 = vsel %vm1122, %v2708, 0.0
    %v2729 = vsel %vm1123, %v2707, 0.0
    %v2730 = vsel %vm1124, %v2706, 0.0
    %v2731 = vsel %vm1125, %v2705, 0.0
    %v2732 = vsel %vm1126, %v2704, 0.0
    %v2733 = vsel %vm1127, %v2703, 0.0
    %v2734 = vsel %vm1128, %v2718, 0.0
    %2735 = vrot.lane.b32.xlu0 %v2271, 95
    %v2736 = vpop.permute.xlu0 %2735
    %2737 = vrot.lane.b32.xlu0 %v2272, 95
    %v2738 = vpop.permute.xlu0 %2737
    %2739 = vrot.lane.b32.xlu0 %v2273, 95
    %v2740 = vpop.permute.xlu0 %2739
    %2741 = vrot.lane.b32.xlu0 %v2274, 95
    %v2742 = vpop.permute.xlu0 %2741
    %2743 = vrot.lane.b32.xlu0 %v2275, 95
    %v2744 = vpop.permute.xlu0 %2743
    %2745 = vrot.lane.b32.xlu0 %v2276, 95
    %v2746 = vpop.permute.xlu0 %2745
    %2747 = vrot.lane.b32.xlu0 %v2277, 95
    %v2748 = vpop.permute.xlu0 %2747
    %2749 = vrot.lane.b32.xlu0 %v2278, 95
    %v2750 = vpop.permute.xlu0 %2749
    %2751 = vrot.lane.b32.xlu0 %v2279, 95
    %v2752 = vpop.permute.xlu0 %2751
    %2753 = vrot.lane.b32.xlu0 %v2280, 95
    %v2754 = vpop.permute.xlu0 %2753
    %2755 = vrot.lane.b32.xlu0 %v2281, 95
    %v2756 = vpop.permute.xlu0 %2755
    %2757 = vrot.lane.b32.xlu0 %v2282, 95
    %v2758 = vpop.permute.xlu0 %2757
    %2759 = vrot.lane.b32.xlu0 %v2283, 95
    %v2760 = vpop.permute.xlu0 %2759
    %2761 = vrot.lane.b32.xlu0 %v2284, 95
    %v2762 = vpop.permute.xlu0 %2761
    %2763 = vrot.lane.b32.xlu0 %v2285, 95
    %v2764 = vpop.permute.xlu0 %2763
    %2765 = vrot.lane.b32.xlu0 %v2286, 95
    %v2766 = vpop.permute.xlu0 %2765
    %v2767 = vsel %vm1177, %v2764, %v2766
    %v2768 = vsel %vm1177, %v2762, %v2764
    %v2769 = vsel %vm1177, %v2760, %v2762
    %v2770 = vsel %vm1177, %v2758, %v2760
    %v2771 = vsel %vm1177, %v2756, %v2758
    %v2772 = vsel %vm1177, %v2754, %v2756
    %v2773 = vsel %vm1177, %v2752, %v2754
    %v2774 = vsel %vm1177, %v2750, %v2752
    %v2775 = vsel %vm1177, %v2748, %v2750
    %v2776 = vsel %vm1177, %v2746, %v2748
    %v2777 = vsel %vm1177, %v2744, %v2746
    %v2778 = vsel %vm1177, %v2742, %v2744
    %v2779 = vsel %vm1177, %v2740, %v2742
    %v2780 = vsel %vm1177, %v2738, %v2740
    %v2781 = vsel %vm1177, %v2736, %v2738
    %v2782 = vsel %vm1177, %v2766, %v2736
    %v2783 = vsel %vm1210, %v2781, 0.0
    %v2784 = vsel %vm1211, %v2780, 0.0
    %v2785 = vsel %vm1212, %v2779, 0.0
    %v2786 = vsel %vm1213, %v2778, 0.0
    %v2787 = vsel %vm1214, %v2777, 0.0
    %v2788 = vsel %vm1215, %v2776, 0.0
    %v2789 = vsel %vm1216, %v2775, 0.0
    %v2790 = vsel %vm1217, %v2774, 0.0
    %v2791 = vsel %vm1218, %v2773, 0.0
    %v2792 = vsel %vm1219, %v2772, 0.0
    %v2793 = vsel %vm1220, %v2771, 0.0
    %v2794 = vsel %vm1221, %v2770, 0.0
    %v2795 = vsel %vm1222, %v2769, 0.0
    %v2796 = vsel %vm1223, %v2768, 0.0
    %v2797 = vsel %vm1224, %v2767, 0.0
    %v2798 = vsel %vm1225, %v2782, 0.0
    %v2815 = vrot.slane %v2399, 4
    %v2816 = vrot.slane %v2400, 4
    %v2817 = vrot.slane %v2401, 4
    %v2818 = vrot.slane %v2402, 4
    %v2819 = vrot.slane %v2403, 4
    %v2820 = vrot.slane %v2404, 4
    %v2821 = vrot.slane %v2405, 4
    %v2822 = vrot.slane %v2406, 4
    %v2823 = vrot.slane %v2407, 4
    %v2824 = vrot.slane %v2408, 4
    %v2825 = vrot.slane %v2409, 4
    %v2826 = vrot.slane %v2410, 4
    %v2827 = vrot.slane %v2411, 4
    %v2828 = vrot.slane %v2412, 4
    %v2829 = vrot.slane %v2413, 4
    %v2830 = vrot.slane %v2414, 4
    %v2863 = vrot.slane %v2527, 4
    %v2864 = vrot.slane %v2528, 4
    %v2865 = vrot.slane %v2529, 4
    %v2866 = vrot.slane %v2530, 4
    %v2867 = vrot.slane %v2531, 4
    %v2868 = vrot.slane %v2532, 4
    %v2869 = vrot.slane %v2533, 4
    %v2870 = vrot.slane %v2534, 4
    %v2871 = vrot.slane %v2535, 4
    %v2872 = vrot.slane %v2536, 4
    %v2873 = vrot.slane %v2537, 4
    %v2874 = vrot.slane %v2538, 4
    %v2875 = vrot.slane %v2539, 4
    %v2876 = vrot.slane %v2540, 4
    %v2877 = vrot.slane %v2541, 4
    %v2878 = vrot.slane %v2542, 4
    %v2911 = vrot.slane %v2591, 4
    %v2912 = vrot.slane %v2592, 4
    %v2913 = vrot.slane %v2593, 4
    %v2914 = vrot.slane %v2594, 4
    %v2915 = vrot.slane %v2595, 4
    %v2916 = vrot.slane %v2596, 4
    %v2917 = vrot.slane %v2597, 4
    %v2918 = vrot.slane %v2598, 4
    %v2919 = vrot.slane %v2599, 4
    %v2920 = vrot.slane %v2600, 4
    %v2921 = vrot.slane %v2601, 4
    %v2922 = vrot.slane %v2602, 4
    %v2923 = vrot.slane %v2603, 4
    %v2924 = vrot.slane %v2604, 4
    %v2925 = vrot.slane %v2605, 4
    %v2926 = vrot.slane %v2606, 4
    %v2959 = vrot.slane %v2719, 4
    %v2960 = vrot.slane %v2720, 4
    %v2961 = vrot.slane %v2721, 4
    %v2962 = vrot.slane %v2722, 4
    %v2963 = vrot.slane %v2723, 4
    %v2964 = vrot.slane %v2724, 4
    %v2965 = vrot.slane %v2725, 4
    %v2966 = vrot.slane %v2726, 4
    %v2967 = vrot.slane %v2727, 4
    %v2968 = vrot.slane %v2728, 4
    %v2969 = vrot.slane %v2729, 4
    %v2970 = vrot.slane %v2730, 4
    %v2971 = vrot.slane %v2731, 4
    %v2972 = vrot.slane %v2732, 4
    %v2973 = vrot.slane %v2733, 4
    %v2974 = vrot.slane %v2734, 4
    %v2991 = vsel %vm270, %v2335, %v2815
    %v2992 = vsel %vm270, %v2336, %v2816
    %v2993 = vsel %vm270, %v2337, %v2817
    %v2994 = vsel %vm270, %v2338, %v2818
    %v2995 = vsel %vm270, %v2339, %v2819
    %v2996 = vsel %vm270, %v2340, %v2820
    %v2997 = vsel %vm270, %v2341, %v2821
    %v2998 = vsel %vm270, %v2342, %v2822
    %v2999 = vsel %vm270, %v2343, %v2823
    %v3000 = vsel %vm270, %v2344, %v2824
    %v3001 = vsel %vm270, %v2345, %v2825
    %v3002 = vsel %vm270, %v2346, %v2826
    %v3003 = vsel %vm270, %v2347, %v2827
    %v3004 = vsel %vm270, %v2348, %v2828
    %v3005 = vsel %vm270, %v2349, %v2829
    %v3006 = vsel %vm270, %v2350, %v2830
    %v3007 = vsel %vm270, %v2463, %v2863
    %v3008 = vsel %vm270, %v2464, %v2864
    %v3009 = vsel %vm270, %v2465, %v2865
    %v3010 = vsel %vm270, %v2466, %v2866
    %v3011 = vsel %vm270, %v2467, %v2867
    %v3012 = vsel %vm270, %v2468, %v2868
    %v3013 = vsel %vm270, %v2469, %v2869
    %v3014 = vsel %vm270, %v2470, %v2870
    %v3015 = vsel %vm270, %v2471, %v2871
    %v3016 = vsel %vm270, %v2472, %v2872
    %v3017 = vsel %vm270, %v2473, %v2873
    %v3018 = vsel %vm270, %v2474, %v2874
    %v3019 = vsel %vm270, %v2475, %v2875
    %v3020 = vsel %vm270, %v2476, %v2876
    %v3021 = vsel %vm270, %v2477, %v2877
    %v3022 = vsel %vm270, %v2478, %v2878
    %v3023 = vsel %vm270, %v2271, %v2911
    %v3024 = vsel %vm270, %v2272, %v2912
    %v3025 = vsel %vm270, %v2273, %v2913
    %v3026 = vsel %vm270, %v2274, %v2914
    %v3027 = vsel %vm270, %v2275, %v2915
    %v3028 = vsel %vm270, %v2276, %v2916
    %v3029 = vsel %vm270, %v2277, %v2917
    %v3030 = vsel %vm270, %v2278, %v2918
    %v3031 = vsel %vm270, %v2279, %v2919
    %v3032 = vsel %vm270, %v2280, %v2920
    %v3033 = vsel %vm270, %v2281, %v2921
    %v3034 = vsel %vm270, %v2282, %v2922
    %v3035 = vsel %vm270, %v2283, %v2923
    %v3036 = vsel %vm270, %v2284, %v2924
    %v3037 = vsel %vm270, %v2285, %v2925
    %v3038 = vsel %vm270, %v2286, %v2926
    %v3039 = vsel %vm270, %v2655, %v2959
    %v3040 = vsel %vm270, %v2656, %v2960
    %v3041 = vsel %vm270, %v2657, %v2961
    %v3042 = vsel %vm270, %v2658, %v2962
    %v3043 = vsel %vm270, %v2659, %v2963
    %v3044 = vsel %vm270, %v2660, %v2964
    %v3045 = vsel %vm270, %v2661, %v2965
    %v3046 = vsel %vm270, %v2662, %v2966
    %v3047 = vsel %vm270, %v2663, %v2967
    %v3048 = vsel %vm270, %v2664, %v2968
    %v3049 = vsel %vm270, %v2665, %v2969
    %v3050 = vsel %vm270, %v2666, %v2970
    %v3051 = vsel %vm270, %v2667, %v2971
    %v3052 = vsel %vm270, %v2668, %v2972
    %v3053 = vsel %vm270, %v2669, %v2973
    %v3054 = vsel %vm270, %v2670, %v2974
    %v3055 = vcombine.low %v238, %v238
    %v3056 = vcombine.low %v239, %v239
    %v3057 = vcombine.low %v240, %v240
    %v3058 = vcombine.low %v241, %v241
    %v3059 = vcombine.low %v242, %v242
    %v3060 = vcombine.low %v243, %v243
    %v3061 = vcombine.low %v244, %v244
    %v3062 = vcombine.low %v245, %v245
    %v3071 = vsel %vm270, %v2783, %v3055
    %v3072 = vsel %vm270, %v2784, %v238
    %v3073 = vsel %vm270, %v2785, %v3056
    %v3074 = vsel %vm270, %v2786, %v239
    %v3075 = vsel %vm270, %v2787, %v3057
    %v3076 = vsel %vm270, %v2788, %v240
    %v3077 = vsel %vm270, %v2789, %v3058
    %v3078 = vsel %vm270, %v2790, %v241
    %v3079 = vsel %vm270, %v2791, %v3059
    %v3080 = vsel %vm270, %v2792, %v242
    %v3081 = vsel %vm270, %v2793, %v3060
    %v3082 = vsel %vm270, %v2794, %v243
    %v3083 = vsel %vm270, %v2795, %v3061
    %v3084 = vsel %vm270, %v2796, %v244
    %v3085 = vsel %vm270, %v2797, %v3062
    %v3086 = vsel %vm270, %v2798, %v245
    %v3087 = vld [vmem:[%s7] sm:$0xff]
    %v3088 = vld [vmem:[%s8] sm:$0xff]
    %3090 = vset.pattern.permute.xlu0 0
    %3091 = vperm.xlu0 %3090, %v3088
    %v3092 = vpop.permute.xlu0 %3091
    %vm3094 = vcmask 326656
    %v3096 = vsel %vm3094, %v3087, 0
    %3098 = vmatprep.subr.mxu0 0.0
    %3099 = vmatpush1.msra.mxu0 0.0
    %3100 = vmatprep.subr.mxu0 0.0
    %3101 = vmatpush1.msra.mxu0 0.0
    %3102 = vmatprep.subr.mxu0 0.0
    %3103 = vmatpush1.msra.mxu0 0.0
    %3104 = vmatprep.subr.mxu0 0.0
    %3105 = vmatpush1.msra.mxu0 0.0
    %3106 = vmatprep.subr.mxu0 0.0
    %3107 = vmatpush1.msra.mxu0 0.0
    %3108 = vmatprep.subr.mxu0 0.0
    %3109 = vmatpush1.msra.mxu0 0.0
    %3110 = vmatprep.subr.mxu0 0.0
    %3111 = vmatpush1.msra.mxu0 0.0
    %3112 = vmatprep.subr.mxu0 0.0
    %3113 = vmatpush1.msra.mxu0 0.0
    %3114 = vmatprep.subr.mxu0 0.0
    %3115 = vmatpush1.msra.mxu0 0.0
    %3116 = vmatprep.subr.mxu0 0.0
    %3117 = vmatpush1.msra.mxu0 0.0
    %3118 = vmatprep.subr.mxu0 0.0
    %3119 = vmatpush1.msra.mxu0 0.0
    %3120 = vmatprep.subr.mxu0 %v3072
    %3121 = vmatpush1.msra.mxu0 %v3071
    %3122 = vmatprep.subr.mxu0 %v3040
    %3123 = vmatpush1.msra.mxu0 %v3039
    %3124 = vmatprep.subr.mxu0 %v3024
    %3125 = vmatpush1.msra.mxu0 %v3023
    %3126 = vmatprep.subr.mxu0 %v3008
    %3127 = vmatpush1.msra.mxu0 %v3007
    %3128 = vmatprep.subr.mxu0 %v2992
    %3129 = vmatpush1.msra.mxu0 %v2991
    %3130 = vmatprep.subr.mxu0 0.0
    %3131 = vmatpush2.msra.mxu0 0.0
    %3132 = vmatprep.subr.mxu0 0.0
    %3133 = vmatpush2.msra.mxu0 0.0
    %3134 = vmatprep.subr.mxu0 0.0
    %3135 = vmatpush2.msra.mxu0 0.0
    %3136 = vmatprep.subr.mxu0 0.0
    %3137 = vmatpush2.msra.mxu0 0.0
    %3138 = vmatprep.subr.mxu0 0.0
    %3139 = vmatpush2.msra.mxu0 0.0
    %3140 = vmatprep.subr.mxu0 0.0
    %3141 = vmatpush2.msra.mxu0 0.0
    %3142 = vmatprep.subr.mxu0 0.0
    %3143 = vmatpush2.msra.mxu0 0.0
    %3144 = vmatprep.subr.mxu0 0.0
    %3145 = vmatpush2.msra.mxu0 0.0
    %3146 = vmatprep.subr.mxu0 0.0
    %3147 = vmatpush2.msra.mxu0 0.0
    %3148 = vmatprep.subr.mxu0 0.0
    %3149 = vmatpush2.msra.mxu0 0.0
    %3150 = vmatprep.subr.mxu0 0.0
    %3151 = vmatpush2.msra.mxu0 0.0
    %3152 = vmatprep.subr.mxu0 0.0
    %3153 = vmatpush2.msra.mxu0 0.0
    %3154 = vmatprep.subr.mxu0 0.0
    %3155 = vmatpush2.msra.mxu0 0.0
    %3156 = vmatprep.subr.mxu0 0.0
    %3157 = vmatpush2.msra.mxu0 0.0
    %3158 = vmatprep.subr.mxu0 0.0
    %3159 = vmatpush2.msra.mxu0 0.0
    %3160 = vmatprep.subr.mxu0 0.0
    %3161 = vmatpush2.msra.mxu0 0.0
    %3162 = vmatprep.mubr.f32.mxu0 0.0
    %3163 = vmatmul.mubr.f32.gmra.mxu0 %v3096
    %v3164 = vpop.f32.mrf.mxu0
    %v3165 = vadd.f32 %v3092, %v3164
    %v3166 = vpop.f32.mrf.mxu0
    %v3167 = vadd.f32 %v3092, %v3166
    %3168 = vdwg.mxu0
    %3169 = vmatprep.subr.mxu0 0.0
    %3170 = vmatpush1.msra.mxu0 0.0
    %3171 = vmatprep.subr.mxu0 0.0
    %3172 = vmatpush1.msra.mxu0 0.0
    %3173 = vmatprep.subr.mxu0 0.0
    %3174 = vmatpush1.msra.mxu0 0.0
    %3175 = vmatprep.subr.mxu0 0.0
    %3176 = vmatpush1.msra.mxu0 0.0
    %3177 = vmatprep.subr.mxu0 0.0
    %3178 = vmatpush1.msra.mxu0 0.0
    %3179 = vmatprep.subr.mxu0 0.0
    %3180 = vmatpush1.msra.mxu0 0.0
    %3181 = vmatprep.subr.mxu0 0.0
    %3182 = vmatpush1.msra.mxu0 0.0
    %3183 = vmatprep.subr.mxu0 0.0
    %3184 = vmatpush1.msra.mxu0 0.0
    %3185 = vmatprep.subr.mxu0 0.0
    %3186 = vmatpush1.msra.mxu0 0.0
    %3187 = vmatprep.subr.mxu0 0.0
    %3188 = vmatpush1.msra.mxu0 0.0
    %3189 = vmatprep.subr.mxu0 0.0
    %3190 = vmatpush1.msra.mxu0 0.0
    %3191 = vmatprep.subr.mxu0 %v3074
    %3192 = vmatpush1.msra.mxu0 %v3073
    %3193 = vmatprep.subr.mxu0 %v3042
    %3194 = vmatpush1.msra.mxu0 %v3041
    %3195 = vmatprep.subr.mxu0 %v3026
    %3196 = vmatpush1.msra.mxu0 %v3025
    %3197 = vmatprep.subr.mxu0 %v3010
    %3198 = vmatpush1.msra.mxu0 %v3009
    %3199 = vmatprep.subr.mxu0 %v2994
    %3200 = vmatpush1.msra.mxu0 %v2993
    %3201 = vmatprep.subr.mxu0 0.0
    %3202 = vmatpush2.msra.mxu0 0.0
    %3203 = vmatprep.subr.mxu0 0.0
    %3204 = vmatpush2.msra.mxu0 0.0
    %3205 = vmatprep.subr.mxu0 0.0
    %3206 = vmatpush2.msra.mxu0 0.0
    %3207 = vmatprep.subr.mxu0 0.0
    %3208 = vmatpush2.msra.mxu0 0.0
    %3209 = vmatprep.subr.mxu0 0.0
    %3210 = vmatpush2.msra.mxu0 0.0
    %3211 = vmatprep.subr.mxu0 0.0
    %3212 = vmatpush2.msra.mxu0 0.0
    %3213 = vmatprep.subr.mxu0 0.0
    %3214 = vmatpush2.msra.mxu0 0.0
    %3215 = vmatprep.subr.mxu0 0.0
    %3216 = vmatpush2.msra.mxu0 0.0
    %3217 = vmatprep.subr.mxu0 0.0
    %3218 = vmatpush2.msra.mxu0 0.0
    %3219 = vmatprep.subr.mxu0 0.0
    %3220 = vmatpush2.msra.mxu0 0.0
    %3221 = vmatprep.subr.mxu0 0.0
    %3222 = vmatpush2.msra.mxu0 0.0
    %3223 = vmatprep.subr.mxu0 0.0
    %3224 = vmatpush2.msra.mxu0 0.0
    %3225 = vmatprep.subr.mxu0 0.0
    %3226 = vmatpush2.msra.mxu0 0.0
    %3227 = vmatprep.subr.mxu0 0.0
    %3228 = vmatpush2.msra.mxu0 0.0
    %3229 = vmatprep.subr.mxu0 0.0
    %3230 = vmatpush2.msra.mxu0 0.0
    %3231 = vmatprep.subr.mxu0 0.0
    %3232 = vmatpush2.msra.mxu0 0.0
    %3233 = vmatprep.mubr.f32.mxu0 0.0
    %3234 = vmatmul.mubr.f32.gmra.mxu0 %v3096
    %v3235 = vpop.f32.mrf.mxu0
    %v3236 = vadd.f32 %v3092, %v3235
    %v3237 = vpop.f32.mrf.mxu0
    %v3238 = vadd.f32 %v3092, %v3237
    %3239 = vdwg.mxu0
    %3240 = vmatprep.subr.mxu0 0.0
    %3241 = vmatpush1.msra.mxu0 0.0
    %3242 = vmatprep.subr.mxu0 0.0
    %3243 = vmatpush1.msra.mxu0 0.0
    %3244 = vmatprep.subr.mxu0 0.0
    %3245 = vmatpush1.msra.mxu0 0.0
    %3246 = vmatprep.subr.mxu0 0.0
    %3247 = vmatpush1.msra.mxu0 0.0
    %3248 = vmatprep.subr.mxu0 0.0
    %3249 = vmatpush1.msra.mxu0 0.0
    %3250 = vmatprep.subr.mxu0 0.0
    %3251 = vmatpush1.msra.mxu0 0.0
    %3252 = vmatprep.subr.mxu0 0.0
    %3253 = vmatpush1.msra.mxu0 0.0
    %3254 = vmatprep.subr.mxu0 0.0
    %3255 = vmatpush1.msra.mxu0 0.0
    %3256 = vmatprep.subr.mxu0 0.0
    %3257 = vmatpush1.msra.mxu0 0.0
    %3258 = vmatprep.subr.mxu0 0.0
    %3259 = vmatpush1.msra.mxu0 0.0
    %3260 = vmatprep.subr.mxu0 0.0
    %3261 = vmatpush1.msra.mxu0 0.0
    %3262 = vmatprep.subr.mxu0 %v3076
    %3263 = vmatpush1.msra.mxu0 %v3075
    %3264 = vmatprep.subr.mxu0 %v3044
    %3265 = vmatpush1.msra.mxu0 %v3043
    %3266 = vmatprep.subr.mxu0 %v3028
    %3267 = vmatpush1.msra.mxu0 %v3027
    %3268 = vmatprep.subr.mxu0 %v3012
    %3269 = vmatpush1.msra.mxu0 %v3011
    %3270 = vmatprep.subr.mxu0 %v2996
    %3271 = vmatpush1.msra.mxu0 %v2995
    %3272 = vmatprep.subr.mxu0 0.0
    %3273 = vmatpush2.msra.mxu0 0.0
    %3274 = vmatprep.subr.mxu0 0.0
    %3275 = vmatpush2.msra.mxu0 0.0
    %3276 = vmatprep.subr.mxu0 0.0
    %3277 = vmatpush2.msra.mxu0 0.0
    %3278 = vmatprep.subr.mxu0 0.0
    %3279 = vmatpush2.msra.mxu0 0.0
    %3280 = vmatprep.subr.mxu0 0.0
    %3281 = vmatpush2.msra.mxu0 0.0
    %3282 = vmatprep.subr.mxu0 0.0
    %3283 = vmatpush2.msra.mxu0 0.0
    %3284 = vmatprep.subr.mxu0 0.0
    %3285 = vmatpush2.msra.mxu0 0.0
    %3286 = vmatprep.subr.mxu0 0.0
    %3287 = vmatpush2.msra.mxu0 0.0
    %3288 = vmatprep.subr.mxu0 0.0
    %3289 = vmatpush2.msra.mxu0 0.0
    %3290 = vmatprep.subr.mxu0 0.0
    %3291 = vmatpush2.msra.mxu0 0.0
    %3292 = vmatprep.subr.mxu0 0.0
    %3293 = vmatpush2.msra.mxu0 0.0
    %3294 = vmatprep.subr.mxu0 0.0
    %3295 = vmatpush2.msra.mxu0 0.0
    %3296 = vmatprep.subr.mxu0 0.0
    %3297 = vmatpush2.msra.mxu0 0.0
    %3298 = vmatprep.subr.mxu0 0.0
    %3299 = vmatpush2.msra.mxu0 0.0
    %3300 = vmatprep.subr.mxu0 0.0
    %3301 = vmatpush2.msra.mxu0 0.0
    %3302 = vmatprep.subr.mxu0 0.0
    %3303 = vmatpush2.msra.mxu0 0.0
    %3304 = vmatprep.mubr.f32.mxu0 0.0
    %3305 = vmatmul.mubr.f32.gmra.mxu0 %v3096
    %v3306 = vpop.f32.mrf.mxu0
    %v3307 = vadd.f32 %v3092, %v3306
    %v3308 = vpop.f32.mrf.mxu0
    %v3309 = vadd.f32 %v3092, %v3308
    %3310 = vdwg.mxu0
    %3311 = vmatprep.subr.mxu0 0.0
    %3312 = vmatpush1.msra.mxu0 0.0
    %3313 = vmatprep.subr.mxu0 0.0
    %3314 = vmatpush1.msra.mxu0 0.0
    %3315 = vmatprep.subr.mxu0 0.0
    %3316 = vmatpush1.msra.mxu0 0.0
    %3317 = vmatprep.subr.mxu0 0.0
    %3318 = vmatpush1.msra.mxu0 0.0
    %3319 = vmatprep.subr.mxu0 0.0
    %3320 = vmatpush1.msra.mxu0 0.0
    %3321 = vmatprep.subr.mxu0 0.0
    %3322 = vmatpush1.msra.mxu0 0.0
    %3323 = vmatprep.subr.mxu0 0.0
    %3324 = vmatpush1.msra.mxu0 0.0
    %3325 = vmatprep.subr.mxu0 0.0
    %3326 = vmatpush1.msra.mxu0 0.0
    %3327 = vmatprep.subr.mxu0 0.0
    %3328 = vmatpush1.msra.mxu0 0.0
    %3329 = vmatprep.subr.mxu0 0.0
    %3330 = vmatpush1.msra.mxu0 0.0
    %3331 = vmatprep.subr.mxu0 0.0
    %3332 = vmatpush1.msra.mxu0 0.0
    %3333 = vmatprep.subr.mxu0 %v3078
    %3334 = vmatpush1.msra.mxu0 %v3077
    %3335 = vmatprep.subr.mxu0 %v3046
    %3336 = vmatpush1.msra.mxu0 %v3045
    %3337 = vmatprep.subr.mxu0 %v3030
    %3338 = vmatpush1.msra.mxu0 %v3029
    %3339 = vmatprep.subr.mxu0 %v3014
    %3340 = vmatpush1.msra.mxu0 %v3013
    %3341 = vmatprep.subr.mxu0 %v2998
    %3342 = vmatpush1.msra.mxu0 %v2997
    %3343 = vmatprep.subr.mxu0 0.0
    %3344 = vmatpush2.msra.mxu0 0.0
    %3345 = vmatprep.subr.mxu0 0.0
    %3346 = vmatpush2.msra.mxu0 0.0
    %3347 = vmatprep.subr.mxu0 0.0
    %3348 = vmatpush2.msra.mxu0 0.0
    %3349 = vmatprep.subr.mxu0 0.0
    %3350 = vmatpush2.msra.mxu0 0.0
    %3351 = vmatprep.subr.mxu0 0.0
    %3352 = vmatpush2.msra.mxu0 0.0
    %3353 = vmatprep.subr.mxu0 0.0
    %3354 = vmatpush2.msra.mxu0 0.0
    %3355 = vmatprep.subr.mxu0 0.0
    %3356 = vmatpush2.msra.mxu0 0.0
    %3357 = vmatprep.subr.mxu0 0.0
    %3358 = vmatpush2.msra.mxu0 0.0
    %3359 = vmatprep.subr.mxu0 0.0
    %3360 = vmatpush2.msra.mxu0 0.0
    %3361 = vmatprep.subr.mxu0 0.0
    %3362 = vmatpush2.msra.mxu0 0.0
    %3363 = vmatprep.subr.mxu0 0.0
    %3364 = vmatpush2.msra.mxu0 0.0
    %3365 = vmatprep.subr.mxu0 0.0
    %3366 = vmatpush2.msra.mxu0 0.0
    %3367 = vmatprep.subr.mxu0 0.0
    %3368 = vmatpush2.msra.mxu0 0.0
    %3369 = vmatprep.subr.mxu0 0.0
    %3370 = vmatpush2.msra.mxu0 0.0
    %3371 = vmatprep.subr.mxu0 0.0
    %3372 = vmatpush2.msra.mxu0 0.0
    %3373 = vmatprep.subr.mxu0 0.0
    %3374 = vmatpush2.msra.mxu0 0.0
    %3375 = vmatprep.mubr.f32.mxu0 0.0
    %3376 = vmatmul.mubr.f32.gmra.mxu0 %v3096
    %v3377 = vpop.f32.mrf.mxu0
    %v3378 = vadd.f32 %v3092, %v3377
    %v3379 = vpop.f32.mrf.mxu0
    %v3380 = vadd.f32 %v3092, %v3379
    %3381 = vdwg.mxu0
    %3382 = vmatprep.subr.mxu0 0.0
    %3383 = vmatpush1.msra.mxu0 0.0
    %3384 = vmatprep.subr.mxu0 0.0
    %3385 = vmatpush1.msra.mxu0 0.0
    %3386 = vmatprep.subr.mxu0 0.0
    %3387 = vmatpush1.msra.mxu0 0.0
    %3388 = vmatprep.subr.mxu0 0.0
    %3389 = vmatpush1.msra.mxu0 0.0
    %3390 = vmatprep.subr.mxu0 0.0
    %3391 = vmatpush1.msra.mxu0 0.0
    %3392 = vmatprep.subr.mxu0 0.0
    %3393 = vmatpush1.msra.mxu0 0.0
    %3394 = vmatprep.subr.mxu0 0.0
    %3395 = vmatpush1.msra.mxu0 0.0
    %3396 = vmatprep.subr.mxu0 0.0
    %3397 = vmatpush1.msra.mxu0 0.0
    %3398 = vmatprep.subr.mxu0 0.0
    %3399 = vmatpush1.msra.mxu0 0.0
    %3400 = vmatprep.subr.mxu0 0.0
    %3401 = vmatpush1.msra.mxu0 0.0
    %3402 = vmatprep.subr.mxu0 0.0
    %3403 = vmatpush1.msra.mxu0 0.0
    %3404 = vmatprep.subr.mxu0 %v3080
    %3405 = vmatpush1.msra.mxu0 %v3079
    %3406 = vmatprep.subr.mxu0 %v3048
    %3407 = vmatpush1.msra.mxu0 %v3047
    %3408 = vmatprep.subr.mxu0 %v3032
    %3409 = vmatpush1.msra.mxu0 %v3031
    %3410 = vmatprep.subr.mxu0 %v3016
    %3411 = vmatpush1.msra.mxu0 %v3015
    %3412 = vmatprep.subr.mxu0 %v3000
    %3413 = vmatpush1.msra.mxu0 %v2999
    %3414 = vmatprep.subr.mxu0 0.0
    %3415 = vmatpush2.msra.mxu0 0.0
    %3416 = vmatprep.subr.mxu0 0.0
    %3417 = vmatpush2.msra.mxu0 0.0
    %3418 = vmatprep.subr.mxu0 0.0
    %3419 = vmatpush2.msra.mxu0 0.0
    %3420 = vmatprep.subr.mxu0 0.0
    %3421 = vmatpush2.msra.mxu0 0.0
    %3422 = vmatprep.subr.mxu0 0.0
    %3423 = vmatpush2.msra.mxu0 0.0
    %3424 = vmatprep.subr.mxu0 0.0
    %3425 = vmatpush2.msra.mxu0 0.0
    %3426 = vmatprep.subr.mxu0 0.0
    %3427 = vmatpush2.msra.mxu0 0.0
    %3428 = vmatprep.subr.mxu0 0.0
    %3429 = vmatpush2.msra.mxu0 0.0
    %3430 = vmatprep.subr.mxu0 0.0
    %3431 = vmatpush2.msra.mxu0 0.0
    %3432 = vmatprep.subr.mxu0 0.0
    %3433 = vmatpush2.msra.mxu0 0.0
    %3434 = vmatprep.subr.mxu0 0.0
    %3435 = vmatpush2.msra.mxu0 0.0
    %3436 = vmatprep.subr.mxu0 0.0
    %3437 = vmatpush2.msra.mxu0 0.0
    %3438 = vmatprep.subr.mxu0 0.0
    %3439 = vmatpush2.msra.mxu0 0.0
    %3440 = vmatprep.subr.mxu0 0.0
    %3441 = vmatpush2.msra.mxu0 0.0
    %3442 = vmatprep.subr.mxu0 0.0
    %3443 = vmatpush2.msra.mxu0 0.0
    %3444 = vmatprep.subr.mxu0 0.0
    %3445 = vmatpush2.msra.mxu0 0.0
    %3446 = vmatprep.mubr.f32.mxu0 0.0
    %3447 = vmatmul.mubr.f32.gmra.mxu0 %v3096
    %v3448 = vpop.f32.mrf.mxu0
    %v3449 = vadd.f32 %v3092, %v3448
    %v3450 = vpop.f32.mrf.mxu0
    %v3451 = vadd.f32 %v3092, %v3450
    %3452 = vdwg.mxu0
    %3453 = vmatprep.subr.mxu0 0.0
    %3454 = vmatpush1.msra.mxu0 0.0
    %3455 = vmatprep.subr.mxu0 0.0
    %3456 = vmatpush1.msra.mxu0 0.0
    %3457 = vmatprep.subr.mxu0 0.0
    %3458 = vmatpush1.msra.mxu0 0.0
    %3459 = vmatprep.subr.mxu0 0.0
    %3460 = vmatpush1.msra.mxu0 0.0
    %3461 = vmatprep.subr.mxu0 0.0
    %3462 = vmatpush1.msra.mxu0 0.0
    %3463 = vmatprep.subr.mxu0 0.0
    %3464 = vmatpush1.msra.mxu0 0.0
    %3465 = vmatprep.subr.mxu0 0.0
    %3466 = vmatpush1.msra.mxu0 0.0
    %3467 = vmatprep.subr.mxu0 0.0
    %3468 = vmatpush1.msra.mxu0 0.0
    %3469 = vmatprep.subr.mxu0 0.0
    %3470 = vmatpush1.msra.mxu0 0.0
    %3471 = vmatprep.subr.mxu0 0.0
    %3472 = vmatpush1.msra.mxu0 0.0
    %3473 = vmatprep.subr.mxu0 0.0
    %3474 = vmatpush1.msra.mxu0 0.0
    %3475 = vmatprep.subr.mxu0 %v3082
    %3476 = vmatpush1.msra.mxu0 %v3081
    %3477 = vmatprep.subr.mxu0 %v3050
    %3478 = vmatpush1.msra.mxu0 %v3049
    %3479 = vmatprep.subr.mxu0 %v3034
    %3480 = vmatpush1.msra.mxu0 %v3033
    %3481 = vmatprep.subr.mxu0 %v3018
    %3482 = vmatpush1.msra.mxu0 %v3017
    %3483 = vmatprep.subr.mxu0 %v3002
    %3484 = vmatpush1.msra.mxu0 %v3001
    %3485 = vmatprep.subr.mxu0 0.0
    %3486 = vmatpush2.msra.mxu0 0.0
    %3487 = vmatprep.subr.mxu0 0.0
    %3488 = vmatpush2.msra.mxu0 0.0
    %3489 = vmatprep.subr.mxu0 0.0
    %3490 = vmatpush2.msra.mxu0 0.0
    %3491 = vmatprep.subr.mxu0 0.0
    %3492 = vmatpush2.msra.mxu0 0.0
    %3493 = vmatprep.subr.mxu0 0.0
    %3494 = vmatpush2.msra.mxu0 0.0
    %3495 = vmatprep.subr.mxu0 0.0
    %3496 = vmatpush2.msra.mxu0 0.0
    %3497 = vmatprep.subr.mxu0 0.0
    %3498 = vmatpush2.msra.mxu0 0.0
    %3499 = vmatprep.subr.mxu0 0.0
    %3500 = vmatpush2.msra.mxu0 0.0
    %3501 = vmatprep.subr.mxu0 0.0
    %3502 = vmatpush2.msra.mxu0 0.0
    %3503 = vmatprep.subr.mxu0 0.0
    %3504 = vmatpush2.msra.mxu0 0.0
    %3505 = vmatprep.subr.mxu0 0.0
    %3506 = vmatpush2.msra.mxu0 0.0
    %3507 = vmatprep.subr.mxu0 0.0
    %3508 = vmatpush2.msra.mxu0 0.0
    %3509 = vmatprep.subr.mxu0 0.0
    %3510 = vmatpush2.msra.mxu0 0.0
    %3511 = vmatprep.subr.mxu0 0.0
    %3512 = vmatpush2.msra.mxu0 0.0
    %3513 = vmatprep.subr.mxu0 0.0
    %3514 = vmatpush2.msra.mxu0 0.0
    %3515 = vmatprep.subr.mxu0 0.0
    %3516 = vmatpush2.msra.mxu0 0.0
    %3517 = vmatprep.mubr.f32.mxu0 0.0
    %3518 = vmatmul.mubr.f32.gmra.mxu0 %v3096
    %v3519 = vpop.f32.mrf.mxu0
    %v3520 = vadd.f32 %v3092, %v3519
    %v3521 = vpop.f32.mrf.mxu0
    %v3522 = vadd.f32 %v3092, %v3521
    %3523 = vdwg.mxu0
    %3524 = vmatprep.subr.mxu0 0.0
    %3525 = vmatpush1.msra.mxu0 0.0
    %3526 = vmatprep.subr.mxu0 0.0
    %3527 = vmatpush1.msra.mxu0 0.0
    %3528 = vmatprep.subr.mxu0 0.0
    %3529 = vmatpush1.msra.mxu0 0.0
    %3530 = vmatprep.subr.mxu0 0.0
    %3531 = vmatpush1.msra.mxu0 0.0
    %3532 = vmatprep.subr.mxu0 0.0
    %3533 = vmatpush1.msra.mxu0 0.0
    %3534 = vmatprep.subr.mxu0 0.0
    %3535 = vmatpush1.msra.mxu0 0.0
    %3536 = vmatprep.subr.mxu0 0.0
    %3537 = vmatpush1.msra.mxu0 0.0
    %3538 = vmatprep.subr.mxu0 0.0
    %3539 = vmatpush1.msra.mxu0 0.0
    %3540 = vmatprep.subr.mxu0 0.0
    %3541 = vmatpush1.msra.mxu0 0.0
    %3542 = vmatprep.subr.mxu0 0.0
    %3543 = vmatpush1.msra.mxu0 0.0
    %3544 = vmatprep.subr.mxu0 0.0
    %3545 = vmatpush1.msra.mxu0 0.0
    %3546 = vmatprep.subr.mxu0 %v3084
    %3547 = vmatpush1.msra.mxu0 %v3083
    %3548 = vmatprep.subr.mxu0 %v3052
    %3549 = vmatpush1.msra.mxu0 %v3051
    %3550 = vmatprep.subr.mxu0 %v3036
    %3551 = vmatpush1.msra.mxu0 %v3035
    %3552 = vmatprep.subr.mxu0 %v3020
    %3553 = vmatpush1.msra.mxu0 %v3019
    %3554 = vmatprep.subr.mxu0 %v3004
    %3555 = vmatpush1.msra.mxu0 %v3003
    %3556 = vmatprep.subr.mxu0 0.0
    %3557 = vmatpush2.msra.mxu0 0.0
    %3558 = vmatprep.subr.mxu0 0.0
    %3559 = vmatpush2.msra.mxu0 0.0
    %3560 = vmatprep.subr.mxu0 0.0
    %3561 = vmatpush2.msra.mxu0 0.0
    %3562 = vmatprep.subr.mxu0 0.0
    %3563 = vmatpush2.msra.mxu0 0.0
    %3564 = vmatprep.subr.mxu0 0.0
    %3565 = vmatpush2.msra.mxu0 0.0
    %3566 = vmatprep.subr.mxu0 0.0
    %3567 = vmatpush2.msra.mxu0 0.0
    %3568 = vmatprep.subr.mxu0 0.0
    %3569 = vmatpush2.msra.mxu0 0.0
    %3570 = vmatprep.subr.mxu0 0.0
    %3571 = vmatpush2.msra.mxu0 0.0
    %3572 = vmatprep.subr.mxu0 0.0
    %3573 = vmatpush2.msra.mxu0 0.0
    %3574 = vmatprep.subr.mxu0 0.0
    %3575 = vmatpush2.msra.mxu0 0.0
    %3576 = vmatprep.subr.mxu0 0.0
    %3577 = vmatpush2.msra.mxu0 0.0
    %3578 = vmatprep.subr.mxu0 0.0
    %3579 = vmatpush2.msra.mxu0 0.0
    %3580 = vmatprep.subr.mxu0 0.0
    %3581 = vmatpush2.msra.mxu0 0.0
    %3582 = vmatprep.subr.mxu0 0.0
    %3583 = vmatpush2.msra.mxu0 0.0
    %3584 = vmatprep.subr.mxu0 0.0
    %3585 = vmatpush2.msra.mxu0 0.0
    %3586 = vmatprep.subr.mxu0 0.0
    %3587 = vmatpush2.msra.mxu0 0.0
    %3588 = vmatprep.mubr.f32.mxu0 0.0
    %3589 = vmatmul.mubr.f32.gmra.mxu0 %v3096
    %v3590 = vpop.f32.mrf.mxu0
    %v3591 = vadd.f32 %v3092, %v3590
    %v3592 = vpop.f32.mrf.mxu0
    %v3593 = vadd.f32 %v3092, %v3592
    %3594 = vdwg.mxu0
    %3595 = vmatprep.subr.mxu0 0.0
    %3596 = vmatpush1.msra.mxu0 0.0
    %3597 = vmatprep.subr.mxu0 0.0
    %3598 = vmatpush1.msra.mxu0 0.0
    %3599 = vmatprep.subr.mxu0 0.0
    %3600 = vmatpush1.msra.mxu0 0.0
    %3601 = vmatprep.subr.mxu0 0.0
    %3602 = vmatpush1.msra.mxu0 0.0
    %3603 = vmatprep.subr.mxu0 0.0
    %3604 = vmatpush1.msra.mxu0 0.0
    %3605 = vmatprep.subr.mxu0 0.0
    %3606 = vmatpush1.msra.mxu0 0.0
    %3607 = vmatprep.subr.mxu0 0.0
    %3608 = vmatpush1.msra.mxu0 0.0
    %3609 = vmatprep.subr.mxu0 0.0
    %3610 = vmatpush1.msra.mxu0 0.0
    %3611 = vmatprep.subr.mxu0 0.0
    %3612 = vmatpush1.msra.mxu0 0.0
    %3613 = vmatprep.subr.mxu0 0.0
    %3614 = vmatpush1.msra.mxu0 0.0
    %3615 = vmatprep.subr.mxu0 0.0
    %3616 = vmatpush1.msra.mxu0 0.0
    %3617 = vmatprep.subr.mxu0 %v3086
    %3618 = vmatpush1.msra.mxu0 %v3085
    %3619 = vmatprep.subr.mxu0 %v3054
    %3620 = vmatpush1.msra.mxu0 %v3053
    %3621 = vmatprep.subr.mxu0 %v3038
    %3622 = vmatpush1.msra.mxu0 %v3037
    %3623 = vmatprep.subr.mxu0 %v3022
    %3624 = vmatpush1.msra.mxu0 %v3021
    %3625 = vmatprep.subr.mxu0 %v3006
    %3626 = vmatpush1.msra.mxu0 %v3005
    %3627 = vmatprep.subr.mxu0 0.0
    %3628 = vmatpush2.msra.mxu0 0.0
    %3629 = vmatprep.subr.mxu0 0.0
    %3630 = vmatpush2.msra.mxu0 0.0
    %3631 = vmatprep.subr.mxu0 0.0
    %3632 = vmatpush2.msra.mxu0 0.0
    %3633 = vmatprep.subr.mxu0 0.0
    %3634 = vmatpush2.msra.mxu0 0.0
    %3635 = vmatprep.subr.mxu0 0.0
    %3636 = vmatpush2.msra.mxu0 0.0
    %3637 = vmatprep.subr.mxu0 0.0
    %3638 = vmatpush2.msra.mxu0 0.0
    %3639 = vmatprep.subr.mxu0 0.0
    %3640 = vmatpush2.msra.mxu0 0.0
    %3641 = vmatprep.subr.mxu0 0.0
    %3642 = vmatpush2.msra.mxu0 0.0
    %3643 = vmatprep.subr.mxu0 0.0
    %3644 = vmatpush2.msra.mxu0 0.0
    %3645 = vmatprep.subr.mxu0 0.0
    %3646 = vmatpush2.msra.mxu0 0.0
    %3647 = vmatprep.subr.mxu0 0.0
    %3648 = vmatpush2.msra.mxu0 0.0
    %3649 = vmatprep.subr.mxu0 0.0
    %3650 = vmatpush2.msra.mxu0 0.0
    %3651 = vmatprep.subr.mxu0 0.0
    %3652 = vmatpush2.msra.mxu0 0.0
    %3653 = vmatprep.subr.mxu0 0.0
    %3654 = vmatpush2.msra.mxu0 0.0
    %3655 = vmatprep.subr.mxu0 0.0
    %3656 = vmatpush2.msra.mxu0 0.0
    %3657 = vmatprep.subr.mxu0 0.0
    %3658 = vmatpush2.msra.mxu0 0.0
    %3659 = vmatprep.mubr.f32.mxu0 0.0
    %3660 = vmatmul.mubr.f32.gmra.mxu0 %v3096
    %v3661 = vpop.f32.mrf.mxu0
    %v3662 = vadd.f32 %v3092, %v3661
    %v3663 = vpop.f32.mrf.mxu0
    %v3664 = vadd.f32 %v3092, %v3663
    %3665 = vdwg.mxu0
    %3666 = vst [vmem:[#allocation5] sm:$0xff] %v3165
    %3667 = vst [vmem:[#allocation5 + $0x8] sm:$0xff] %v3167
    %3668 = vst [vmem:[#allocation5 + $0x10] sm:$0xff] %v3236
    %3669 = vst [vmem:[#allocation5 + $0x18] sm:$0xff] %v3238
    %3670 = vst [vmem:[#allocation5 + $0x20] sm:$0xff] %v3307
    %3671 = vst [vmem:[#allocation5 + $0x28] sm:$0xff] %v3309
    %3672 = vst [vmem:[#allocation5 + $0x30] sm:$0xff] %v3378
    %3673 = vst [vmem:[#allocation5 + $0x38] sm:$0xff] %v3380
    %3674 = vst [vmem:[#allocation5 + $0x40] sm:$0xff] %v3449
    %3675 = vst [vmem:[#allocation5 + $0x48] sm:$0xff] %v3451
    %3676 = vst [vmem:[#allocation5 + $0x50] sm:$0xff] %v3520
    %3677 = vst [vmem:[#allocation5 + $0x58] sm:$0xff] %v3522
    %3678 = vst [vmem:[#allocation5 + $0x60] sm:$0xff] %v3591
    %3679 = vst [vmem:[#allocation5 + $0x68] sm:$0xff] %v3593
    %3680 = vst [vmem:[#allocation5 + $0x70] sm:$0xff] %v3662
    %3681 = vst [vmem:[#allocation5 + $0x78] sm:$0xff] %v3664
    // Predicated region
    $region42: #{tpu_custom_call.1} parent=1 // pred_check
      _
    $region43: #{tpu_custom_call.1} parent=1 // pred_check_branch
      %3683 = sbr.rel (0) target = $region45
    $region44: #{tpu_custom_call.1} parent=1 // pred_region
      %s3685 = ssub.s32 2048, 2048
      %3686 = vsyncadd [#allocation4], %s3685
      %s3688 = sshll.u32 [#allocation5], 4
      %s3689 = int_to_ptr.vmem [resolvable:$true] %s3688
      %3691 = dma.vmem_to_hbm [thread:$0]  %s3689, 2048, %s9, [#allocation4]
    $region45: #{tpu_custom_call.1} parent=1 // pred_fallthru
      _
    // Predicated region
    $region46: #{tpu_custom_call.1} parent=1 // pred_check
      _
    $region47: #{tpu_custom_call.1} parent=1 // pred_check_branch
      %3693 = sbr.rel (0) target = $region49
    $region48: #{tpu_custom_call.1} parent=1 // pred_region
      %3694 = dma.done [#allocation4], 2048
    $region49: #{tpu_custom_call.1} parent=1 // pred_fallthru
      _
    %3695 = vsyncpa [#allocation3], 1
    %3696 = vsyncpa [#allocation4], 1

</llo_original>
